<compile_context>
chip_gen: v6e
topology: v6e:2x2x1
jax: 0.10.0
libtpu: 0.0.40
codegen_flags: <defaults>
</compile_context>

<pallas_src>
import functools

import jax
import jax.numpy as jnp
from jax import lax
from jax.experimental import pallas as pl
from jax.experimental.pallas import tpu as pltpu


def _bottom_block_kernel(x_ref, wq_ref, bq_ref, wkv_ref, bkv_ref,
                         wbig_ref, bobig_ref, y_ref, *, ck, cv, m):
    """One grid step == one batch element; fully fused, all stores lane-dense."""
    x = x_ref[0]                                                     # (C, N)
    n = x.shape[-1]

    # Fused K/V projection (1x1x1 convs == channel matmuls over the spatial axis).
    kv = jnp.dot(wkv_ref[...], x, preferred_element_type=jnp.float32) + bkv_ref[...]
    k = kv[0:ck, :]            # (ck, N)  ck % 8 == 0 -> split on a sublane-tile boundary
    v = kv[ck:ck + cv, :]      # (cv, N)

    # Query projection ('same' transform); 1/sqrt(ck) pre-folded into wq/bq.
    q = jnp.dot(wq_ref[...], x, preferred_element_type=jnp.float32) + bq_ref[...]   # (ck, N)

    # Scores: contract the channel axis of both operands directly (no explicit transpose).
    s = lax.dot_general(q, k, (((0,), (0,)), ((), ())),
                        preferred_element_type=jnp.float32)          # (Nq, Nk)

    # Softmax numerator (row-wise max subtraction in the natural orientation).
    s_max = jnp.max(s, axis=-1, keepdims=True)                       # (Nq, 1)
    p = jnp.exp(s - s_max)                                           # (Nq, Nk)

    # Denominator directly in the transposed (1, Nq) orientation via a ones-row matmul
    # (MXU; matches the layout of the transposed P@V^T product below).
    ones_row = jnp.ones((1, n), jnp.float32)
    denom_t = lax.dot_general(ones_row, p, (((1,), (1,)), ((), ())),
                              preferred_element_type=jnp.float32)    # (1, Nq)

    # Deferred normalization: P @ V^T computed transposed so the lane axis is Nq (dense),
    # then scaled by 1/denom on the small (cv, Nq) result instead of the (Nq, Nk) matrix.
    o_t = lax.dot_general(v, p, (((1,), (1,)), ((), ())),
                          preferred_element_type=jnp.float32)        # (cv, Nq)
    o_t = o_t * pl.reciprocal(denom_t, approx=True)                  # broadcast over cv rows
    # nn.Dropout on the attention map is identity in eval mode.

    # Fused PyTorch `.view(B, cv, D, H, W)` quirk + final 1x1 conv, as ONE MXU matmul:
    #   viewed[i, q*cv + c] = o_full[i*m + q, c] = o_t[c, i*m + q]
    #   y[o,  q*cv + c]     = sum_i wo[o, i] * viewed[i, q*cv + c] + bo[o]
    # Stack the cv lane-aligned (128-multiple offset) column blocks of o_t along sublanes
    # -> (cv*cv, m), multiply by the precomputed kron(wo, I_cv).  Output rows are
    # (o*cv + c), lanes are q (m, multiple of 128) -> unmasked lane-dense store; the
    # wrapper undoes the (c, q) ordering with a cheap XLA transpose.
    blocks = [o_t[:, i * m:(i + 1) * m] for i in range(cv)]          # cv x (cv, m)
    ot_blocks = jnp.concatenate(blocks, axis=0)                      # (cv*cv, m)
    y = jnp.dot(wbig_ref[...], ot_blocks,
                preferred_element_type=jnp.float32) + bobig_ref[...]  # (C*cv, m)
    y_ref[0] = y.astype(y_ref.dtype)


def bottom_block_forward(x, params):
    B, C, D, H, W = x.shape
    N = D * H * W
    ck = params["wq"].shape[0]
    cv = params["wv"].shape[0]
    assert N % cv == 0, "this kernel requires cv to divide D*H*W"
    m = N // cv
    assert m % 128 == 0, "query block (D*H*W // cv) must be a multiple of 128 lanes"
    assert ck % 8 == 0, "ck must be a multiple of 8 (f32 sublane tile) for the fused K/V split"
    # TODO(synk): pad wkv rows / query blocks for shapes violating the asserts above.

    xf = x.reshape(B, C, N)
    inv_sqrt_ck = 1.0 / (ck ** 0.5)
    wq_s = params["wq"] * inv_sqrt_ck          # fold the attention scale into Q projection
    bq_s = params["bq"] * inv_sqrt_ck
    wkv = jnp.concatenate([params["wk"], params["wv"]], axis=0)      # (ck+cv, C)
    bkv = jnp.concatenate([params["bk"], params["bv"]], axis=0)      # (ck+cv, 1)
    # kron(wo, I_cv): row (o*cv + c), col (i*cv + c') -> wo[o, i] * [c == c'].
    w_big = jnp.kron(params["wo"], jnp.eye(cv, dtype=params["wo"].dtype))   # (C*cv, cv*cv)
    bo_big = jnp.repeat(params["bo"], cv, axis=0)                           # (C*cv, 1)

    kern = functools.partial(_bottom_block_kernel, ck=ck, cv=cv, m=m)
    out = pl.pallas_call(
        kern,
        out_shape=jax.ShapeDtypeStruct((B, C * cv, m), jnp.float32),
        grid_spec=pltpu.PrefetchScalarGridSpec(
            num_scalar_prefetch=0,
            grid=(B,),                                                # one step per batch
            in_specs=[
                pl.BlockSpec((1, C, N), lambda b: (b, 0, 0)),         # x, fetched once
                pl.BlockSpec((ck, C), lambda b: (0, 0)),              # wq (pre-scaled)
                pl.BlockSpec((ck, 1), lambda b: (0, 0)),              # bq (pre-scaled)
                pl.BlockSpec((ck + cv, C), lambda b: (0, 0)),         # fused wk|wv
                pl.BlockSpec((ck + cv, 1), lambda b: (0, 0)),         # fused bk|bv
                pl.BlockSpec((C * cv, cv * cv), lambda b: (0, 0)),    # kron(wo, I_cv) in VMEM
                pl.BlockSpec((C * cv, 1), lambda b: (0, 0)),          # expanded bo in VMEM
            ],
            out_specs=pl.BlockSpec((1, C * cv, m), lambda b: (b, 0, 0)),
        ),
        compiler_params=pltpu.CompilerParams(
            dimension_semantics=("parallel",),
            vmem_limit_bytes=32 * 1024 * 1024,
        ),
    )(xf, wq_s, bq_s, wkv, bkv, w_big, bo_big)

    # Undo the (c, q) ordering: out[b, o*cv + c, q] == y[b, o, q*cv + c].  Cheap XLA
    # layout plumbing on the (small) final output only.
    y = out.reshape(B, C, cv, m).swapaxes(2, 3).reshape(B, C, D, H, W)
    return y


def bottom_block_ref(x, params):
    """Pure-JAX reference mirroring the PyTorch forward exactly (eval mode)."""
    B, C, D, H, W = x.shape
    N = D * H * W
    ck = params["wq"].shape[0]
    cv = params["wv"].shape[0]
    xf = x.reshape(B, C, N)
    q = jnp.einsum('oc,bcn->bon', params["wq"], xf) + params["bq"][None]
    k = jnp.einsum('oc,bcn->bon', params["wk"], xf) + params["bk"][None]
    v = jnp.einsum('oc,bcn->bon', params["wv"], xf) + params["bv"][None]
    attn = jnp.einsum('bkn,bkm->bnm', q, k) / (ck ** 0.5)
    attn = jax.nn.softmax(attn, axis=-1)
    o = jnp.einsum('bnm,bvm->bnv', attn, v)          # (B, N, cv)
    o = o.reshape(B, cv, N)                          # PyTorch .view quirk (byte reinterpretation)
    y = jnp.einsum('ov,bvn->bon', params["wo"], o) + params["bo"][None]
    return y.reshape(B, C, D, H, W)


if __name__ == "__main__":
    key = jax.random.PRNGKey(0)
    B, C, D, H, W = 2, 4, 8, 8, 8        # N = 512
    ck, cv = 8, 4                        # m = N // cv = 128 (lane-aligned query blocks)
    ks = jax.random.split(key, 9)
    x = jax.random.normal(ks[0], (B, C, D, H, W), dtype=jnp.float32)
    # Conv3d kernel-size-1 weights squeezed to 2-D; biases as (Cout, 1) for broadcast over N.
    params = {
        "wq": 0.1 * jax.random.normal(ks[1], (ck, C), jnp.float32),
        "bq": 0.1 * jax.random.normal(ks[2], (ck, 1), jnp.float32),
        "wk": 0.1 * jax.random.normal(ks[3], (ck, C), jnp.float32),
        "bk": 0.1 * jax.random.normal(ks[4], (ck, 1), jnp.float32),
        "wv": 0.1 * jax.random.normal(ks[5], (cv, C), jnp.float32),
        "bv": 0.1 * jax.random.normal(ks[6], (cv, 1), jnp.float32),
        "wo": 0.1 * jax.random.normal(ks[7], (C, cv), jnp.float32),
        "bo": 0.1 * jax.random.normal(ks[8], (C, 1), jnp.float32),
    }

    y = bottom_block_forward(x, params)
    jax.block_until_ready(y)

    y_ref = bottom_block_ref(x, params)
    assert y.shape == (B, C, D, H, W)
    # Tolerance slightly relaxed vs f32-exact to cover the approx EUP reciprocal.
    assert jnp.allclose(y, y_ref, atol=1e-3, rtol=1e-3), "mismatch vs reference"
    print("KERNEL_OK")
</pallas_src>

<mosaic_0001>
module attributes {stable_mosaic.version = 11 : i64} {
  func.func @_bottom_block_kernel(%arg0: i32, %arg1: memref<1x4x512xf32, #tpu.memory_space<vmem>>, %arg2: memref<8x4xf32, #tpu.memory_space<vmem>>, %arg3: memref<8x1xf32, #tpu.memory_space<vmem>>, %arg4: memref<12x4xf32, #tpu.memory_space<vmem>>, %arg5: memref<12x1xf32, #tpu.memory_space<vmem>>, %arg6: memref<16x16xf32, #tpu.memory_space<vmem>>, %arg7: memref<16x1xf32, #tpu.memory_space<vmem>>, %arg8: memref<1x16x128xf32, #tpu.memory_space<vmem>>) attributes {dimension_semantics = [#tpu.dimension_semantics<parallel>], iteration_bounds = array<i64: 2>, scalar_prefetch = 0 : i64, scratch_operands = 0 : i64, tpu.core_type = #tpu.core_type<tc>, window_params = [{transform_indices = @transform_0, window_bounds = array<i64: 1, 4, 512>}, {pipeline_mode = #tpu.pipeline_mode<synchronous>, transform_indices = @transform_1, window_bounds = array<i64: 8, 4>}, {pipeline_mode = #tpu.pipeline_mode<synchronous>, transform_indices = @transform_2, window_bounds = array<i64: 8, 1>}, {pipeline_mode = #tpu.pipeline_mode<synchronous>, transform_indices = @transform_3, window_bounds = array<i64: 12, 4>}, {pipeline_mode = #tpu.pipeline_mode<synchronous>, transform_indices = @transform_4, window_bounds = array<i64: 12, 1>}, {pipeline_mode = #tpu.pipeline_mode<synchronous>, transform_indices = @transform_5, window_bounds = array<i64: 16, 16>}, {pipeline_mode = #tpu.pipeline_mode<synchronous>, transform_indices = @transform_6, window_bounds = array<i64: 16, 1>}, {transform_indices = @transform_7, window_bounds = array<i64: 1, 16, 128>}]} {
    %c0 = arith.constant 0 : index
    %c0_0 = arith.constant 0 : index
    %c0_1 = arith.constant 0 : index
    %0 = vector.load %arg1[%c0, %c0_0, %c0_1] : memref<1x4x512xf32, #tpu.memory_space<vmem>>, vector<1x4x512xf32>
    %1 = vector.shape_cast %0 : vector<1x4x512xf32> to vector<4x512xf32>
    %c0_2 = arith.constant 0 : index
    %c0_3 = arith.constant 0 : index
    %2 = vector.load %arg4[%c0_2, %c0_3] : memref<12x4xf32, #tpu.memory_space<vmem>>, vector<12x4xf32>
    %cst = arith.constant dense<0.000000e+00> : vector<12x512xf32>
    %3 = tpu.matmul %2, %1, %cst {dimension_numbers = #tpu.dot_dimension_numbers<[1], [0], [0], [1], [0, 0, 1, 1], [], []>} : vector<12x4xf32>, vector<4x512xf32>, vector<12x512xf32> -> vector<12x512xf32>
    %c0_4 = arith.constant 0 : index
    %c0_5 = arith.constant 0 : index
    %4 = vector.load %arg5[%c0_4, %c0_5] : memref<12x1xf32, #tpu.memory_space<vmem>>, vector<12x1xf32>
    %5 = vector.broadcast %4 : vector<12x1xf32> to vector<12x512xf32>
    %6 = arith.addf %3, %5 : vector<12x512xf32>
    %7 = vector.extract_strided_slice %6 {offsets = [0, 0], sizes = [8, 512], strides = [1, 1]} : vector<12x512xf32> to vector<8x512xf32>
    %8 = vector.extract_strided_slice %6 {offsets = [8, 0], sizes = [4, 512], strides = [1, 1]} : vector<12x512xf32> to vector<4x512xf32>
    %c0_6 = arith.constant 0 : index
    %c0_7 = arith.constant 0 : index
    %9 = vector.load %arg2[%c0_6, %c0_7] : memref<8x4xf32, #tpu.memory_space<vmem>>, vector<8x4xf32>
    %cst_8 = arith.constant dense<0.000000e+00> : vector<8x512xf32>
    %10 = tpu.matmul %9, %1, %cst_8 {dimension_numbers = #tpu.dot_dimension_numbers<[1], [0], [0], [1], [0, 0, 1, 1], [], []>} : vector<8x4xf32>, vector<4x512xf32>, vector<8x512xf32> -> vector<8x512xf32>
    %c0_9 = arith.constant 0 : index
    %c0_10 = arith.constant 0 : index
    %11 = vector.load %arg3[%c0_9, %c0_10] : memref<8x1xf32, #tpu.memory_space<vmem>>, vector<8x1xf32>
    %12 = vector.broadcast %11 : vector<8x1xf32> to vector<8x512xf32>
    %13 = arith.addf %10, %12 : vector<8x512xf32>
    %cst_11 = arith.constant dense<0.000000e+00> : vector<512x512xf32>
    %14 = tpu.matmul %13, %7, %cst_11 {dimension_numbers = #tpu.dot_dimension_numbers<[0], [0], [1], [1], [0, 1, 1, 1], [], []>} : vector<8x512xf32>, vector<8x512xf32>, vector<512x512xf32> -> vector<512x512xf32>
    %cst_12 = arith.constant dense<0xFF800000> : vector<512xf32>
    %15 = vector.multi_reduction <maximumf>, %14, %cst_12 [1] : vector<512x512xf32> to vector<512xf32>
    %16 = vector.shape_cast %15 : vector<512xf32> to vector<512x1xf32>
    %17 = vector.broadcast %16 : vector<512x1xf32> to vector<512x512xf32>
    %18 = arith.subf %14, %17 : vector<512x512xf32>
    %19 = math.exp %18 : vector<512x512xf32>
    %cst_13 = arith.constant 1.000000e+00 : f32
    %20 = vector.broadcast %cst_13 : f32 to vector<1x512xf32>
    %cst_14 = arith.constant dense<0.000000e+00> : vector<1x512xf32>
    %21 = tpu.matmul %20, %19, %cst_14 {dimension_numbers = #tpu.dot_dimension_numbers<[1], [1], [0], [0], [0, 0, 1, 0], [], []>} : vector<1x512xf32>, vector<512x512xf32>, vector<1x512xf32> -> vector<1x512xf32>
    %cst_15 = arith.constant dense<0.000000e+00> : vector<4x512xf32>
    %22 = tpu.matmul %8, %19, %cst_15 {dimension_numbers = #tpu.dot_dimension_numbers<[1], [1], [0], [0], [0, 0, 1, 0], [], []>} : vector<4x512xf32>, vector<512x512xf32>, vector<4x512xf32> -> vector<4x512xf32>
    %23 = tpu.reciprocal %21 {approx = true} : vector<1x512xf32> -> vector<1x512xf32>
    %24 = vector.broadcast %23 : vector<1x512xf32> to vector<4x512xf32>
    %25 = arith.mulf %22, %24 : vector<4x512xf32>
    %26 = vector.extract_strided_slice %25 {offsets = [0, 0], sizes = [4, 128], strides = [1, 1]} : vector<4x512xf32> to vector<4x128xf32>
    %27 = vector.extract_strided_slice %25 {offsets = [0, 128], sizes = [4, 128], strides = [1, 1]} : vector<4x512xf32> to vector<4x128xf32>
    %28 = vector.extract_strided_slice %25 {offsets = [0, 256], sizes = [4, 128], strides = [1, 1]} : vector<4x512xf32> to vector<4x128xf32>
    %29 = vector.extract_strided_slice %25 {offsets = [0, 384], sizes = [4, 128], strides = [1, 1]} : vector<4x512xf32> to vector<4x128xf32>
    %30 = tpu.concatenate %26, %27, %28, %29 in 0 : vector<4x128xf32>, vector<4x128xf32>, vector<4x128xf32>, vector<4x128xf32> -> vector<16x128xf32>
    %c0_16 = arith.constant 0 : index
    %c0_17 = arith.constant 0 : index
    %31 = vector.load %arg6[%c0_16, %c0_17] : memref<16x16xf32, #tpu.memory_space<vmem>>, vector<16x16xf32>
    %cst_18 = arith.constant dense<0.000000e+00> : vector<16x128xf32>
    %32 = tpu.matmul %31, %30, %cst_18 {dimension_numbers = #tpu.dot_dimension_numbers<[1], [0], [0], [1], [0, 0, 1, 1], [], []>} : vector<16x16xf32>, vector<16x128xf32>, vector<16x128xf32> -> vector<16x128xf32>
    %c0_19 = arith.constant 0 : index
    %c0_20 = arith.constant 0 : index
    %33 = vector.load %arg7[%c0_19, %c0_20] : memref<16x1xf32, #tpu.memory_space<vmem>>, vector<16x1xf32>
    %34 = vector.broadcast %33 : vector<16x1xf32> to vector<16x128xf32>
    %35 = arith.addf %32, %34 : vector<16x128xf32>
    %c0_21 = arith.constant 0 : index
    %c0_22 = arith.constant 0 : index
    %c0_23 = arith.constant 0 : index
    %36 = vector.load %arg8[%c0_21, %c0_22, %c0_23] : memref<1x16x128xf32, #tpu.memory_space<vmem>>, vector<1x16x128xf32>
    %37 = vector.shape_cast %36 : vector<1x16x128xf32> to vector<16x128xf32>
    %38 = vector.shape_cast %35 : vector<16x128xf32> to vector<1x16x128xf32>
    tpu.vector_store %arg8[%c0_21, %c0_22, %c0_23], %38 {strides = array<i32>} : memref<1x16x128xf32, #tpu.memory_space<vmem>>, vector<1x16x128xf32>,
    return
  }
  func.func @transform_0(%arg0: i32) -> (i32, i32, i32) {
    %c0_i32 = arith.constant 0 : i32
    %c0_i32_0 = arith.constant 0 : i32
    %c0_i32_1 = arith.constant 0 : i32
    return %arg0, %c0_i32, %c0_i32_0 : i32, i32, i32
  }
  func.func @transform_1(%arg0: i32) -> (i32, i32) {
    %c0_i32 = arith.constant 0 : i32
    %c0_i32_0 = arith.constant 0 : i32
    %c0_i32_1 = arith.constant 0 : i32
    return %c0_i32, %c0_i32_0 : i32, i32
  }
  func.func @transform_2(%arg0: i32) -> (i32, i32) {
    %c0_i32 = arith.constant 0 : i32
    %c0_i32_0 = arith.constant 0 : i32
    %c0_i32_1 = arith.constant 0 : i32
    return %c0_i32, %c0_i32_0 : i32, i32
  }
  func.func @transform_3(%arg0: i32) -> (i32, i32) {
    %c0_i32 = arith.constant 0 : i32
    %c0_i32_0 = arith.constant 0 : i32
    %c0_i32_1 = arith.constant 0 : i32
    return %c0_i32, %c0_i32_0 : i32, i32
  }
  func.func @transform_4(%arg0: i32) -> (i32, i32) {
    %c0_i32 = arith.constant 0 : i32
    %c0_i32_0 = arith.constant 0 : i32
    %c0_i32_1 = arith.constant 0 : i32
    return %c0_i32, %c0_i32_0 : i32, i32
  }
  func.func @transform_5(%arg0: i32) -> (i32, i32) {
    %c0_i32 = arith.constant 0 : i32
    %c0_i32_0 = arith.constant 0 : i32
    %c0_i32_1 = arith.constant 0 : i32
    return %c0_i32, %c0_i32_0 : i32, i32
  }
  func.func @transform_6(%arg0: i32) -> (i32, i32) {
    %c0_i32 = arith.constant 0 : i32
    %c0_i32_0 = arith.constant 0 : i32
    %c0_i32_1 = arith.constant 0 : i32
    return %c0_i32, %c0_i32_0 : i32, i32
  }
  func.func @transform_7(%arg0: i32) -> (i32, i32, i32) {
    %c0_i32 = arith.constant 0 : i32
    %c0_i32_0 = arith.constant 0 : i32
    %c0_i32_1 = arith.constant 0 : i32
    return %arg0, %c0_i32, %c0_i32_0 : i32, i32, i32
  }
}

</mosaic_0001>

<llo_original>
// kernel: tpu_custom_call.1
$region0: #{tpu_custom_call.1}
  #allocation0 [shape = 'u32[]', space=smem, size = 0x4, offset = 0x4, fixed_abs, tag = 'smem constant byte address 0x4 - core index']
  #allocation1 [shape = 'u32[144,128]{1,0:T(1,128)}', space=vmem, size = 0x12000, scoped, tag = 'internal scratch']
  %s0 = inlined_call_operand.vmem [shape: f32[2,4,512], index: 0, kind: input, shape index: {}]
  %s1 = inlined_call_operand.vmem [shape: f32[8,4], index: 1, kind: input, shape index: {}]
  %s2 = inlined_call_operand.vmem [shape: f32[8,1], index: 2, kind: input, shape index: {}]
  %s3 = inlined_call_operand.vmem [shape: f32[12,4], index: 3, kind: input, shape index: {}]
  %s4 = inlined_call_operand.vmem [shape: f32[12,1], index: 4, kind: input, shape index: {}]
  %s5 = inlined_call_operand.vmem [shape: f32[16,16], index: 5, kind: input, shape index: {}]
  %s6 = inlined_call_operand.vmem [shape: f32[16,1], index: 6, kind: input, shape index: {}]
  %s7 = inlined_call_operand.hbm [shape: f32[2,16,128], index: 7, kind: output, shape index: {}]
  %s8 = sld [smem:[#allocation0]]
  $region61: #{tpu_custom_call.1} parent=0
    _
  %s10 = ssub.s32 1, %s8
  %s11 = scalar_select 0, %s10, %s8
  $region1: #{tpu_custom_call.1} parent=0
    #allocation2 [shape = 'u8[16384]{0}', space=vmem, size = 0x4000, scoped, tag = 'output window, operand 0']
    #allocation3 [shape = 's32[2]{0}', space=sflag, size = 0x8, scoped, tag = 'scoped memory for tpu_custom_call.1']
    %12 = vsyncpa [#allocation3], 0
    %s13 = scalar_lea.sflag [#allocation3], 1
    %14 = vsyncpa %s13, 0
    loop: start=0, step=1, limit=4
    $region2: #{tpu_custom_call.1} parent=1 // loop_pre_header
      _
    $region3: #{tpu_custom_call.1} parent=1 // loop_header
      %s16 = sphi 0, %s20
      %p17 = scmp.ge.s32.totalorder %s16, 4
      %s26 = sphi 0, %s28
      %s29 = sphi 0, %s26
      %s30 = sphi 0, %s29
      %s46 = sphi 0, %s30
      %s50 = sphi 0, %s50
      %s52 = sphi 0, %s50
      %s53 = sphi 0, %s52
      %s67 = sphi 0, %s53
      %s71 = sphi 0, %s71
      %s73 = sphi 0, %s71
      %s74 = sphi 0, %s73
      %s88 = sphi 0, %s74
      %s92 = sphi 0, %s92
      %s94 = sphi 0, %s92
      %s95 = sphi 0, %s94
      %s109 = sphi 0, %s95
      %s113 = sphi 0, %s113
      %s115 = sphi 0, %s113
      %s116 = sphi 0, %s115
      %s130 = sphi 0, %s116
      %s134 = sphi 0, %s134
      %s136 = sphi 0, %s134
      %s137 = sphi 0, %s136
      %s151 = sphi 0, %s137
      %s155 = sphi 0, %s155
      %s157 = sphi 0, %s155
      %s158 = sphi 0, %s157
      %s172 = sphi 0, %s158
      %s178 = sphi 0, %s180
      %s181 = sphi 0, %s178
      %s182 = sphi 0, %s181
      %s198 = sphi 0, %s182
    $region4: #{tpu_custom_call.1} parent=1 // loop_header_branch
      %19 = sbr.rel (%p17) target = $region8
    $region5: #{tpu_custom_call.1} parent=1 // loop_body
      %s21 = ssub.s32 %s16, 1
      %s22 = ssub.s32 %s16, 2
      %s23 = sadd.s32 %s16, 1
      %s24 = ssub.s32 %s16, %s23
      %p25 = scmp.eq.s32.totalorder %s24, 0
      %s27 = sadd.s32 %s26, 1
      %s28 = scalar_select %p25, %s26, %s27
      %p31 = pneg %p25
      %p32 = scmp.eq.s32.totalorder %s16, 1
      %p33 = por %p31, %p32
      %p34 = scmp.ne.s32.totalorder %s26, %s29
      %p35 = scmp.eq.s32.totalorder %s16, 0
      %p36 = por %p34, %p35
      %p37 = scmp.ne.s32.totalorder %s26, %s29
      %p38 = scmp.eq.s32.totalorder %s21, 1
      %p39 = por %p37, %p38
      %p40 = scmp.ne.s32.totalorder %s29, %s30
      %p41 = scmp.eq.s32.totalorder %s21, 0
      %p42 = por %p40, %p41
      %p43 = scmp.ne.s32.totalorder %s29, %s30
      %p44 = scmp.eq.s32.totalorder %s22, 1
      %p45 = por %p43, %p44
      %p47 = scmp.ne.s32.totalorder %s30, %s46
      %p48 = scmp.eq.s32.totalorder %s22, 0
      %p49 = por %p47, %p48
      %s51 = sadd.s32 %s50, 1
      %p54 = scmp.eq.s32.totalorder %s16, 1
      %p55 = scmp.ne.s32.totalorder %s50, %s52
      %p56 = scmp.eq.s32.totalorder %s16, 0
      %p57 = por %p55, %p56
      %p58 = scmp.ne.s32.totalorder %s50, %s52
      %p59 = scmp.eq.s32.totalorder %s21, 1
      %p60 = por %p58, %p59
      %p61 = scmp.ne.s32.totalorder %s52, %s53
      %p62 = scmp.eq.s32.totalorder %s21, 0
      %p63 = por %p61, %p62
      %p64 = scmp.ne.s32.totalorder %s52, %s53
      %p65 = scmp.eq.s32.totalorder %s22, 1
      %p66 = por %p64, %p65
      %p68 = scmp.ne.s32.totalorder %s53, %s67
      %p69 = scmp.eq.s32.totalorder %s22, 0
      %p70 = por %p68, %p69
      %s72 = sadd.s32 %s71, 1
      %p75 = scmp.eq.s32.totalorder %s16, 1
      %p76 = scmp.ne.s32.totalorder %s71, %s73
      %p77 = scmp.eq.s32.totalorder %s16, 0
      %p78 = por %p76, %p77
      %p79 = scmp.ne.s32.totalorder %s71, %s73
      %p80 = scmp.eq.s32.totalorder %s21, 1
      %p81 = por %p79, %p80
      %p82 = scmp.ne.s32.totalorder %s73, %s74
      %p83 = scmp.eq.s32.totalorder %s21, 0
      %p84 = por %p82, %p83
      %p85 = scmp.ne.s32.totalorder %s73, %s74
      %p86 = scmp.eq.s32.totalorder %s22, 1
      %p87 = por %p85, %p86
      %p89 = scmp.ne.s32.totalorder %s74, %s88
      %p90 = scmp.eq.s32.totalorder %s22, 0
      %p91 = por %p89, %p90
      %s93 = sadd.s32 %s92, 1
      %p96 = scmp.eq.s32.totalorder %s16, 1
      %p97 = scmp.ne.s32.totalorder %s92, %s94
      %p98 = scmp.eq.s32.totalorder %s16, 0
      %p99 = por %p97, %p98
      %p100 = scmp.ne.s32.totalorder %s92, %s94
      %p101 = scmp.eq.s32.totalorder %s21, 1
      %p102 = por %p100, %p101
      %p103 = scmp.ne.s32.totalorder %s94, %s95
      %p104 = scmp.eq.s32.totalorder %s21, 0
      %p105 = por %p103, %p104
      %p106 = scmp.ne.s32.totalorder %s94, %s95
      %p107 = scmp.eq.s32.totalorder %s22, 1
      %p108 = por %p106, %p107
      %p110 = scmp.ne.s32.totalorder %s95, %s109
      %p111 = scmp.eq.s32.totalorder %s22, 0
      %p112 = por %p110, %p111
      %s114 = sadd.s32 %s113, 1
      %p117 = scmp.eq.s32.totalorder %s16, 1
      %p118 = scmp.ne.s32.totalorder %s113, %s115
      %p119 = scmp.eq.s32.totalorder %s16, 0
      %p120 = por %p118, %p119
      %p121 = scmp.ne.s32.totalorder %s113, %s115
      %p122 = scmp.eq.s32.totalorder %s21, 1
      %p123 = por %p121, %p122
      %p124 = scmp.ne.s32.totalorder %s115, %s116
      %p125 = scmp.eq.s32.totalorder %s21, 0
      %p126 = por %p124, %p125
      %p127 = scmp.ne.s32.totalorder %s115, %s116
      %p128 = scmp.eq.s32.totalorder %s22, 1
      %p129 = por %p127, %p128
      %p131 = scmp.ne.s32.totalorder %s116, %s130
      %p132 = scmp.eq.s32.totalorder %s22, 0
      %p133 = por %p131, %p132
      %s135 = sadd.s32 %s134, 1
      %p138 = scmp.eq.s32.totalorder %s16, 1
      %p139 = scmp.ne.s32.totalorder %s134, %s136
      %p140 = scmp.eq.s32.totalorder %s16, 0
      %p141 = por %p139, %p140
      %p142 = scmp.ne.s32.totalorder %s134, %s136
      %p143 = scmp.eq.s32.totalorder %s21, 1
      %p144 = por %p142, %p143
      %p145 = scmp.ne.s32.totalorder %s136, %s137
      %p146 = scmp.eq.s32.totalorder %s21, 0
      %p147 = por %p145, %p146
      %p148 = scmp.ne.s32.totalorder %s136, %s137
      %p149 = scmp.eq.s32.totalorder %s22, 1
      %p150 = por %p148, %p149
      %p152 = scmp.ne.s32.totalorder %s137, %s151
      %p153 = scmp.eq.s32.totalorder %s22, 0
      %p154 = por %p152, %p153
      %s156 = sadd.s32 %s155, 1
      %p159 = scmp.eq.s32.totalorder %s16, 1
      %p160 = scmp.ne.s32.totalorder %s155, %s157
      %p161 = scmp.eq.s32.totalorder %s16, 0
      %p162 = por %p160, %p161
      %p163 = scmp.ne.s32.totalorder %s155, %s157
      %p164 = scmp.eq.s32.totalorder %s21, 1
      %p165 = por %p163, %p164
      %p166 = scmp.ne.s32.totalorder %s157, %s158
      %p167 = scmp.eq.s32.totalorder %s21, 0
      %p168 = por %p166, %p167
      %p169 = scmp.ne.s32.totalorder %s157, %s158
      %p170 = scmp.eq.s32.totalorder %s22, 1
      %p171 = por %p169, %p170
      %p173 = scmp.ne.s32.totalorder %s158, %s172
      %p174 = scmp.eq.s32.totalorder %s22, 0
      %p175 = por %p173, %p174
      %s176 = ssub.s32 %s16, %s23
      %p177 = scmp.eq.s32.totalorder %s176, 0
      %s179 = sadd.s32 %s178, 1
      %s180 = scalar_select %p177, %s178, %s179
      %p183 = pneg %p177
      %p184 = scmp.eq.s32.totalorder %s16, 1
      %p185 = por %p183, %p184
      %p186 = scmp.ne.s32.totalorder %s178, %s181
      %p187 = scmp.eq.s32.totalorder %s16, 0
      %p188 = por %p186, %p187
      %p189 = scmp.ne.s32.totalorder %s178, %s181
      %p190 = scmp.eq.s32.totalorder %s21, 1
      %p191 = por %p189, %p190
      %p192 = scmp.ne.s32.totalorder %s181, %s182
      %p193 = scmp.eq.s32.totalorder %s21, 0
      %p194 = por %p192, %p193
      %p195 = scmp.ne.s32.totalorder %s181, %s182
      %p196 = scmp.eq.s32.totalorder %s22, 1
      %p197 = por %p195, %p196
      %p199 = scmp.ne.s32.totalorder %s182, %s198
      %p200 = scmp.eq.s32.totalorder %s22, 0
      %p201 = por %p199, %p200
      %p202 = scmp.le.s32.totalorder 1, %s16
      %p203 = scmp.lt.s32.totalorder %s16, 3
      %p204 = pnand %p202, %p203
      %p205 = pneg %p204
      // Predicated region
      $region9: #{tpu_custom_call.1} parent=5 // pred_check
        _
      $region10: #{tpu_custom_call.1} parent=5 // pred_check_branch
        %207 = sbr.rel (%p204) target = $region12
      $region11: #{tpu_custom_call.1} parent=5 // pred_region
        %s208 = ssub.s32 %s16, 1
        // Predicated region
        $region13: #{tpu_custom_call.1} parent=11 // pred_check
          %p209 = pneg %p63
        $region14: #{tpu_custom_call.1} parent=11 // pred_check_branch
          %211 = sbr.rel (%p209) target = $region16
        $region15: #{tpu_custom_call.1} parent=11 // pred_region
          _
        $region16: #{tpu_custom_call.1} parent=11 // pred_fallthru
          _
        // Predicated region
        $region17: #{tpu_custom_call.1} parent=11 // pred_check
          %p212 = pneg %p84
        $region18: #{tpu_custom_call.1} parent=11 // pred_check_branch
          %214 = sbr.rel (%p212) target = $region20
        $region19: #{tpu_custom_call.1} parent=11 // pred_region
          _
        $region20: #{tpu_custom_call.1} parent=11 // pred_fallthru
          _
        // Predicated region
        $region21: #{tpu_custom_call.1} parent=11 // pred_check
          %p215 = pneg %p105
        $region22: #{tpu_custom_call.1} parent=11 // pred_check_branch
          %217 = sbr.rel (%p215) target = $region24
        $region23: #{tpu_custom_call.1} parent=11 // pred_region
          _
        $region24: #{tpu_custom_call.1} parent=11 // pred_fallthru
          _
        // Predicated region
        $region25: #{tpu_custom_call.1} parent=11 // pred_check
          %p218 = pneg %p126
        $region26: #{tpu_custom_call.1} parent=11 // pred_check_branch
          %220 = sbr.rel (%p218) target = $region28
        $region27: #{tpu_custom_call.1} parent=11 // pred_region
          _
        $region28: #{tpu_custom_call.1} parent=11 // pred_fallthru
          _
        // Predicated region
        $region29: #{tpu_custom_call.1} parent=11 // pred_check
          %p221 = pneg %p147
        $region30: #{tpu_custom_call.1} parent=11 // pred_check_branch
          %223 = sbr.rel (%p221) target = $region32
        $region31: #{tpu_custom_call.1} parent=11 // pred_region
          _
        $region32: #{tpu_custom_call.1} parent=11 // pred_fallthru
          _
        // Predicated region
        $region33: #{tpu_custom_call.1} parent=11 // pred_check
          %p224 = pneg %p168
        $region34: #{tpu_custom_call.1} parent=11 // pred_check_branch
          %226 = sbr.rel (%p224) target = $region36
        $region35: #{tpu_custom_call.1} parent=11 // pred_region
          _
        $region36: #{tpu_custom_call.1} parent=11 // pred_fallthru
          _
      $region12: #{tpu_custom_call.1} parent=5 // pred_fallthru
        _
      %p227 = scmp.lt.s32.totalorder %s16, 2
      // Predicated region
      $region37: #{tpu_custom_call.1} parent=5 // pred_check
        %p228 = pneg %p227
      $region38: #{tpu_custom_call.1} parent=5 // pred_check_branch
        %230 = sbr.rel (%p228) target = $region40
      $region39: #{tpu_custom_call.1} parent=5 // pred_region
        // Predicated region
        $region41: #{tpu_custom_call.1} parent=39 // pred_check
          %p231 = pneg %p36
        $region42: #{tpu_custom_call.1} parent=39 // pred_check_branch
          %233 = sbr.rel (%p231) target = $region44
        $region43: #{tpu_custom_call.1} parent=39 // pred_region
          %p234 = scmp.lt.s32.totalorder %s16, 1
          %s235 = scalar_select %p234, %s16, 1
          %s236 = smul.addr %s235, 4
          %s237 = smul.addr %s236, 4
          %s238 = scalar_lea.vmem %s0, %s237
        $region44: #{tpu_custom_call.1} parent=39 // pred_fallthru
          _
      $region40: #{tpu_custom_call.1} parent=5 // pred_fallthru
        _
      %p239 = scmp.le.s32.totalorder 1, %s16
      %p240 = scmp.lt.s32.totalorder %s16, 3
      %p241 = pnand %p239, %p240
      %p242 = pneg %p241
      // Predicated region
      $region45: #{tpu_custom_call.1} parent=5 // pred_check
        _
      $region46: #{tpu_custom_call.1} parent=5 // pred_check_branch
        %244 = sbr.rel (%p241) target = $region48
      $region47: #{tpu_custom_call.1} parent=5 // pred_region
        %s245 = ssub.s32 %s16, 1
        %p246 = scmp.lt.s32.totalorder %s21, 1
        %s247 = scalar_select %p246, %s21, 1
        %s248 = smul.addr %s247, 4
        %s249 = smul.addr %s248, 4
        %s250 = scalar_lea.vmem %s0, %s249
        %p251 = pneg %p42
        %p252 = pneg %p39
        %p253 = pneg %p63
        %p254 = pneg %p60
        %p255 = pneg %p84
        %p256 = pneg %p81
        %p257 = pneg %p105
        %p258 = pneg %p102
        %p259 = pneg %p126
        %p260 = pneg %p123
        %p261 = pneg %p147
        %p262 = pneg %p144
        %p263 = pneg %p168
        %p264 = pneg %p165
        %p265 = pneg %p194
        %p266 = pneg %p191
        %s267 = sand.u32 %s181, 1
        %s268 = scalar_lea.sflag [#allocation3], %s267
        %s269 = sand.u32 %s181, 1
        %s270 = smul.addr %s269, 16
        %s271 = scalar_lea.vmem [#allocation2], %s270
        %p272 = scmp.lt.s32.totalorder %s21, 1
        %s273 = scalar_select %p272, %s21, 1
        %s274 = smul.addr %s273, 4
        %s275 = smul.addr %s274, 4
        %s276 = scalar_lea.vmem %s0, %s275
        %v277 = vld [vmem:[%s276] sm:$0xff]
        %v278 = vld [vmem:[%s276 + $0x8] sm:$0xff]
        %v279 = vld [vmem:[%s3] sm:$0xff]
        %v280 = vld [vmem:[%s3 + $0x8] sm:$0xf]
        %v281 = vld [vmem:[%s4] sm:$0xff]
        %v282 = vld [vmem:[%s4 + $0x8] sm:$0xf]
        %284 = vset.pattern.permute.xlu0 0
        %285 = vperm.xlu0 %284, %v281
        %v286 = vpop.permute.xlu0 %285
        %289 = vset.pattern.permute.xlu0 0
        %290 = vperm.xlu0 %289, %v282
        %v291 = vpop.permute.xlu0 %290
        %v295 = vcombine.high %v277, %v277
        %v296 = vcombine.high %v278, %v278
        %vm297 = vcmask 31744
        %v299 = vsel %vm297, %v279, 0
        %v302 = vsel %vm297, %v280, 0
        %vm304 = vcmask 1043456
        %v305 = vsel %vm304, %v277, 0
        %v307 = vsel %vm304, %v295, 0
        %v309 = vsel %vm304, %v278, 0
        %v311 = vsel %vm304, %v296, 0
        %313 = vmatprep.subr.mxu0 0.0
        %314 = vmatpush1.msra.mxu0 0.0
        %315 = vmatprep.subr.mxu0 0.0
        %316 = vmatpush1.msra.mxu0 0.0
        %317 = vmatprep.subr.mxu0 0.0
        %318 = vmatpush1.msra.mxu0 0.0
        %319 = vmatprep.subr.mxu0 0.0
        %320 = vmatpush1.msra.mxu0 0.0
        %321 = vmatprep.subr.mxu0 0.0
        %322 = vmatpush1.msra.mxu0 0.0
        %323 = vmatprep.subr.mxu0 0.0
        %324 = vmatpush1.msra.mxu0 0.0
        %325 = vmatprep.subr.mxu0 0.0
        %326 = vmatpush1.msra.mxu0 0.0
        %327 = vmatprep.subr.mxu0 0.0
        %328 = vmatpush1.msra.mxu0 0.0
        %329 = vmatprep.subr.mxu0 0.0
        %330 = vmatpush1.msra.mxu0 0.0
        %331 = vmatprep.subr.mxu0 0.0
        %332 = vmatpush1.msra.mxu0 0.0
        %333 = vmatprep.subr.mxu0 0.0
        %334 = vmatpush1.msra.mxu0 0.0
        %335 = vmatprep.subr.mxu0 0.0
        %336 = vmatpush1.msra.mxu0 0.0
        %337 = vmatprep.subr.mxu0 0.0
        %338 = vmatpush1.msra.mxu0 0.0
        %339 = vmatprep.subr.mxu0 0.0
        %340 = vmatpush1.msra.mxu0 0.0
        %341 = vmatprep.subr.mxu0 0.0
        %342 = vmatpush1.msra.mxu0 0.0
        %343 = vmatprep.subr.mxu0 %v307
        %344 = vmatpush1.msra.mxu0 %v305
        %345 = vmatprep.subr.mxu0 0.0
        %346 = vmatpush2.msra.mxu0 0.0
        %347 = vmatprep.subr.mxu0 0.0
        %348 = vmatpush2.msra.mxu0 0.0
        %349 = vmatprep.subr.mxu0 0.0
        %350 = vmatpush2.msra.mxu0 0.0
        %351 = vmatprep.subr.mxu0 0.0
        %352 = vmatpush2.msra.mxu0 0.0
        %353 = vmatprep.subr.mxu0 0.0
        %354 = vmatpush2.msra.mxu0 0.0
        %355 = vmatprep.subr.mxu0 0.0
        %356 = vmatpush2.msra.mxu0 0.0
        %357 = vmatprep.subr.mxu0 0.0
        %358 = vmatpush2.msra.mxu0 0.0
        %359 = vmatprep.subr.mxu0 0.0
        %360 = vmatpush2.msra.mxu0 0.0
        %361 = vmatprep.subr.mxu0 0.0
        %362 = vmatpush2.msra.mxu0 0.0
        %363 = vmatprep.subr.mxu0 0.0
        %364 = vmatpush2.msra.mxu0 0.0
        %365 = vmatprep.subr.mxu0 0.0
        %366 = vmatpush2.msra.mxu0 0.0
        %367 = vmatprep.subr.mxu0 0.0
        %368 = vmatpush2.msra.mxu0 0.0
        %369 = vmatprep.subr.mxu0 0.0
        %370 = vmatpush2.msra.mxu0 0.0
        %371 = vmatprep.subr.mxu0 0.0
        %372 = vmatpush2.msra.mxu0 0.0
        %373 = vmatprep.subr.mxu0 0.0
        %374 = vmatpush2.msra.mxu0 0.0
        %375 = vmatprep.subr.mxu0 0.0
        %376 = vmatpush2.msra.mxu0 0.0
        %377 = vmatprep.mubr.f32.mxu0 0.0
        %378 = vmatmul.mubr.f32.gmra.mxu0 %v299
        %v379 = vpop.f32.mrf.mxu0
        %v380 = vadd.f32 %v286, %v379
        %v381 = vpop.f32.mrf.mxu0
        %v382 = vadd.f32 %v286, %v381
        %383 = vmatprep.mubr.f32.mxu0 0.0
        %384 = vmatmul.mubr.f32.gmra.mxu0 %v302
        %v385 = vpop.f32.mrf.mxu0
        %v386 = vadd.f32 %v291, %v385
        %v387 = vpop.f32.mrf.mxu0
        %v388 = vadd.f32 %v291, %v387
        %389 = vdwg.mxu0
        %390 = vmatprep.subr.mxu0 0.0
        %391 = vmatpush1.msra.mxu0 0.0
        %392 = vmatprep.subr.mxu0 0.0
        %393 = vmatpush1.msra.mxu0 0.0
        %394 = vmatprep.subr.mxu0 0.0
        %395 = vmatpush1.msra.mxu0 0.0
        %396 = vmatprep.subr.mxu0 0.0
        %397 = vmatpush1.msra.mxu0 0.0
        %398 = vmatprep.subr.mxu0 0.0
        %399 = vmatpush1.msra.mxu0 0.0
        %400 = vmatprep.subr.mxu0 0.0
        %401 = vmatpush1.msra.mxu0 0.0
        %402 = vmatprep.subr.mxu0 0.0
        %403 = vmatpush1.msra.mxu0 0.0
        %404 = vmatprep.subr.mxu0 0.0
        %405 = vmatpush1.msra.mxu0 0.0
        %406 = vmatprep.subr.mxu0 0.0
        %407 = vmatpush1.msra.mxu0 0.0
        %408 = vmatprep.subr.mxu0 0.0
        %409 = vmatpush1.msra.mxu0 0.0
        %410 = vmatprep.subr.mxu0 0.0
        %411 = vmatpush1.msra.mxu0 0.0
        %412 = vmatprep.subr.mxu0 0.0
        %413 = vmatpush1.msra.mxu0 0.0
        %414 = vmatprep.subr.mxu0 0.0
        %415 = vmatpush1.msra.mxu0 0.0
        %416 = vmatprep.subr.mxu0 0.0
        %417 = vmatpush1.msra.mxu0 0.0
        %418 = vmatprep.subr.mxu0 0.0
        %419 = vmatpush1.msra.mxu0 0.0
        %420 = vmatprep.subr.mxu0 %v311
        %421 = vmatpush1.msra.mxu0 %v309
        %422 = vmatprep.subr.mxu0 0.0
        %423 = vmatpush2.msra.mxu0 0.0
        %424 = vmatprep.subr.mxu0 0.0
        %425 = vmatpush2.msra.mxu0 0.0
        %426 = vmatprep.subr.mxu0 0.0
        %427 = vmatpush2.msra.mxu0 0.0
        %428 = vmatprep.subr.mxu0 0.0
        %429 = vmatpush2.msra.mxu0 0.0
        %430 = vmatprep.subr.mxu0 0.0
        %431 = vmatpush2.msra.mxu0 0.0
        %432 = vmatprep.subr.mxu0 0.0
        %433 = vmatpush2.msra.mxu0 0.0
        %434 = vmatprep.subr.mxu0 0.0
        %435 = vmatpush2.msra.mxu0 0.0
        %436 = vmatprep.subr.mxu0 0.0
        %437 = vmatpush2.msra.mxu0 0.0
        %438 = vmatprep.subr.mxu0 0.0
        %439 = vmatpush2.msra.mxu0 0.0
        %440 = vmatprep.subr.mxu0 0.0
        %441 = vmatpush2.msra.mxu0 0.0
        %442 = vmatprep.subr.mxu0 0.0
        %443 = vmatpush2.msra.mxu0 0.0
        %444 = vmatprep.subr.mxu0 0.0
        %445 = vmatpush2.msra.mxu0 0.0
        %446 = vmatprep.subr.mxu0 0.0
        %447 = vmatpush2.msra.mxu0 0.0
        %448 = vmatprep.subr.mxu0 0.0
        %449 = vmatpush2.msra.mxu0 0.0
        %450 = vmatprep.subr.mxu0 0.0
        %451 = vmatpush2.msra.mxu0 0.0
        %452 = vmatprep.subr.mxu0 0.0
        %453 = vmatpush2.msra.mxu0 0.0
        %454 = vmatprep.mubr.f32.mxu0 0.0
        %455 = vmatmul.mubr.f32.gmra.mxu0 %v299
        %v456 = vpop.f32.mrf.mxu0
        %v457 = vadd.f32 %v286, %v456
        %v458 = vpop.f32.mrf.mxu0
        %v459 = vadd.f32 %v286, %v458
        %460 = vmatprep.mubr.f32.mxu0 0.0
        %461 = vmatmul.mubr.f32.gmra.mxu0 %v302
        %v462 = vpop.f32.mrf.mxu0
        %v463 = vadd.f32 %v291, %v462
        %v464 = vpop.f32.mrf.mxu0
        %v465 = vadd.f32 %v291, %v464
        %466 = vdwg.mxu0
        %v467 = vld [vmem:[%s1] sm:$0xff]
        %v468 = vld [vmem:[%s2] sm:$0xff]
        %470 = vset.pattern.permute.xlu0 0
        %471 = vperm.xlu0 %470, %v468
        %v472 = vpop.permute.xlu0 %471
        %v475 = vsel %vm297, %v467, 0
        %477 = vmatprep.subr.mxu0 0.0
        %478 = vmatpush1.msra.mxu0 0.0
        %479 = vmatprep.subr.mxu0 0.0
        %480 = vmatpush1.msra.mxu0 0.0
        %481 = vmatprep.subr.mxu0 0.0
        %482 = vmatpush1.msra.mxu0 0.0
        %483 = vmatprep.subr.mxu0 0.0
        %484 = vmatpush1.msra.mxu0 0.0
        %485 = vmatprep.subr.mxu0 0.0
        %486 = vmatpush1.msra.mxu0 0.0
        %487 = vmatprep.subr.mxu0 0.0
        %488 = vmatpush1.msra.mxu0 0.0
        %489 = vmatprep.subr.mxu0 0.0
        %490 = vmatpush1.msra.mxu0 0.0
        %491 = vmatprep.subr.mxu0 0.0
        %492 = vmatpush1.msra.mxu0 0.0
        %493 = vmatprep.subr.mxu0 0.0
        %494 = vmatpush1.msra.mxu0 0.0
        %495 = vmatprep.subr.mxu0 0.0
        %496 = vmatpush1.msra.mxu0 0.0
        %497 = vmatprep.subr.mxu0 0.0
        %498 = vmatpush1.msra.mxu0 0.0
        %499 = vmatprep.subr.mxu0 0.0
        %500 = vmatpush1.msra.mxu0 0.0
        %501 = vmatprep.subr.mxu0 0.0
        %502 = vmatpush1.msra.mxu0 0.0
        %503 = vmatprep.subr.mxu0 0.0
        %504 = vmatpush1.msra.mxu0 0.0
        %505 = vmatprep.subr.mxu0 0.0
        %506 = vmatpush1.msra.mxu0 0.0
        %507 = vmatprep.subr.mxu0 %v307
        %508 = vmatpush1.msra.mxu0 %v305
        %509 = vmatprep.subr.mxu0 0.0
        %510 = vmatpush2.msra.mxu0 0.0
        %511 = vmatprep.subr.mxu0 0.0
        %512 = vmatpush2.msra.mxu0 0.0
        %513 = vmatprep.subr.mxu0 0.0
        %514 = vmatpush2.msra.mxu0 0.0
        %515 = vmatprep.subr.mxu0 0.0
        %516 = vmatpush2.msra.mxu0 0.0
        %517 = vmatprep.subr.mxu0 0.0
        %518 = vmatpush2.msra.mxu0 0.0
        %519 = vmatprep.subr.mxu0 0.0
        %520 = vmatpush2.msra.mxu0 0.0
        %521 = vmatprep.subr.mxu0 0.0
        %522 = vmatpush2.msra.mxu0 0.0
        %523 = vmatprep.subr.mxu0 0.0
        %524 = vmatpush2.msra.mxu0 0.0
        %525 = vmatprep.subr.mxu0 0.0
        %526 = vmatpush2.msra.mxu0 0.0
        %527 = vmatprep.subr.mxu0 0.0
        %528 = vmatpush2.msra.mxu0 0.0
        %529 = vmatprep.subr.mxu0 0.0
        %530 = vmatpush2.msra.mxu0 0.0
        %531 = vmatprep.subr.mxu0 0.0
        %532 = vmatpush2.msra.mxu0 0.0
        %533 = vmatprep.subr.mxu0 0.0
        %534 = vmatpush2.msra.mxu0 0.0
        %535 = vmatprep.subr.mxu0 0.0
        %536 = vmatpush2.msra.mxu0 0.0
        %537 = vmatprep.subr.mxu0 0.0
        %538 = vmatpush2.msra.mxu0 0.0
        %539 = vmatprep.subr.mxu0 0.0
        %540 = vmatpush2.msra.mxu0 0.0
        %541 = vmatprep.mubr.f32.mxu0 0.0
        %542 = vmatmul.mubr.f32.gmra.mxu0 %v475
        %v543 = vpop.f32.mrf.mxu0
        %v544 = vadd.f32 %v472, %v543
        %v545 = vpop.f32.mrf.mxu0
        %v546 = vadd.f32 %v472, %v545
        %547 = vdwg.mxu0
        %548 = vmatprep.subr.mxu0 0.0
        %549 = vmatpush1.msra.mxu0 0.0
        %550 = vmatprep.subr.mxu0 0.0
        %551 = vmatpush1.msra.mxu0 0.0
        %552 = vmatprep.subr.mxu0 0.0
        %553 = vmatpush1.msra.mxu0 0.0
        %554 = vmatprep.subr.mxu0 0.0
        %555 = vmatpush1.msra.mxu0 0.0
        %556 = vmatprep.subr.mxu0 0.0
        %557 = vmatpush1.msra.mxu0 0.0
        %558 = vmatprep.subr.mxu0 0.0
        %559 = vmatpush1.msra.mxu0 0.0
        %560 = vmatprep.subr.mxu0 0.0
        %561 = vmatpush1.msra.mxu0 0.0
        %562 = vmatprep.subr.mxu0 0.0
        %563 = vmatpush1.msra.mxu0 0.0
        %564 = vmatprep.subr.mxu0 0.0
        %565 = vmatpush1.msra.mxu0 0.0
        %566 = vmatprep.subr.mxu0 0.0
        %567 = vmatpush1.msra.mxu0 0.0
        %568 = vmatprep.subr.mxu0 0.0
        %569 = vmatpush1.msra.mxu0 0.0
        %570 = vmatprep.subr.mxu0 0.0
        %571 = vmatpush1.msra.mxu0 0.0
        %572 = vmatprep.subr.mxu0 0.0
        %573 = vmatpush1.msra.mxu0 0.0
        %574 = vmatprep.subr.mxu0 0.0
        %575 = vmatpush1.msra.mxu0 0.0
        %576 = vmatprep.subr.mxu0 0.0
        %577 = vmatpush1.msra.mxu0 0.0
        %578 = vmatprep.subr.mxu0 %v311
        %579 = vmatpush1.msra.mxu0 %v309
        %580 = vmatprep.subr.mxu0 0.0
        %581 = vmatpush2.msra.mxu0 0.0
        %582 = vmatprep.subr.mxu0 0.0
        %583 = vmatpush2.msra.mxu0 0.0
        %584 = vmatprep.subr.mxu0 0.0
        %585 = vmatpush2.msra.mxu0 0.0
        %586 = vmatprep.subr.mxu0 0.0
        %587 = vmatpush2.msra.mxu0 0.0
        %588 = vmatprep.subr.mxu0 0.0
        %589 = vmatpush2.msra.mxu0 0.0
        %590 = vmatprep.subr.mxu0 0.0
        %591 = vmatpush2.msra.mxu0 0.0
        %592 = vmatprep.subr.mxu0 0.0
        %593 = vmatpush2.msra.mxu0 0.0
        %594 = vmatprep.subr.mxu0 0.0
        %595 = vmatpush2.msra.mxu0 0.0
        %596 = vmatprep.subr.mxu0 0.0
        %597 = vmatpush2.msra.mxu0 0.0
        %598 = vmatprep.subr.mxu0 0.0
        %599 = vmatpush2.msra.mxu0 0.0
        %600 = vmatprep.subr.mxu0 0.0
        %601 = vmatpush2.msra.mxu0 0.0
        %602 = vmatprep.subr.mxu0 0.0
        %603 = vmatpush2.msra.mxu0 0.0
        %604 = vmatprep.subr.mxu0 0.0
        %605 = vmatpush2.msra.mxu0 0.0
        %606 = vmatprep.subr.mxu0 0.0
        %607 = vmatpush2.msra.mxu0 0.0
        %608 = vmatprep.subr.mxu0 0.0
        %609 = vmatpush2.msra.mxu0 0.0
        %610 = vmatprep.subr.mxu0 0.0
        %611 = vmatpush2.msra.mxu0 0.0
        %612 = vmatprep.mubr.f32.mxu0 0.0
        %613 = vmatmul.mubr.f32.gmra.mxu0 %v475
        %v614 = vpop.f32.mrf.mxu0
        %v615 = vadd.f32 %v472, %v614
        %v616 = vpop.f32.mrf.mxu0
        %v617 = vadd.f32 %v472, %v616
        %618 = vdwg.mxu0
        %619 = vxpose.xlu0.b32.start [1/16] %v544, 128
        %620 = vxpose.xlu0.b32.cont [2/16] 0.0, 128
        %621 = vxpose.xlu0.b32.cont [3/16] 0.0, 128
        %622 = vxpose.xlu0.b32.cont [4/16] 0.0, 128
        %623 = vxpose.xlu0.b32.cont [5/16] 0.0, 128
        %624 = vxpose.xlu0.b32.cont [6/16] 0.0, 128
        %625 = vxpose.xlu0.b32.cont [7/16] 0.0, 128
        %626 = vxpose.xlu0.b32.cont [8/16] 0.0, 128
        %627 = vxpose.xlu0.b32.cont [9/16] 0.0, 128
        %628 = vxpose.xlu0.b32.cont [10/16] 0.0, 128
        %629 = vxpose.xlu0.b32.cont [11/16] 0.0, 128
        %630 = vxpose.xlu0.b32.cont [12/16] 0.0, 128
        %631 = vxpose.xlu0.b32.cont [13/16] 0.0, 128
        %632 = vxpose.xlu0.b32.cont [14/16] 0.0, 128
        %633 = vxpose.xlu0.b32.cont [15/16] 0.0, 128
        %634 = vxpose.xlu0.b32.end [16/16] 0.0, 128
        %v635 = vpop.trf.xlu0
        %v636 = vpop.trf.xlu0
        %v637 = vpop.trf.xlu0
        %v638 = vpop.trf.xlu0
        %v639 = vpop.trf.xlu0
        %v640 = vpop.trf.xlu0
        %v641 = vpop.trf.xlu0
        %v642 = vpop.trf.xlu0
        %v643 = vpop.trf.xlu0
        %v644 = vpop.trf.xlu0
        %v645 = vpop.trf.xlu0
        %v646 = vpop.trf.xlu0
        %v647 = vpop.trf.xlu0
        %v648 = vpop.trf.xlu0
        %v649 = vpop.trf.xlu0
        %v650 = vpop.trf.xlu0
        %651 = vxpose.xlu0.b32.start [1/16] %v546, 128
        %652 = vxpose.xlu0.b32.cont [2/16] 0.0, 128
        %653 = vxpose.xlu0.b32.cont [3/16] 0.0, 128
        %654 = vxpose.xlu0.b32.cont [4/16] 0.0, 128
        %655 = vxpose.xlu0.b32.cont [5/16] 0.0, 128
        %656 = vxpose.xlu0.b32.cont [6/16] 0.0, 128
        %657 = vxpose.xlu0.b32.cont [7/16] 0.0, 128
        %658 = vxpose.xlu0.b32.cont [8/16] 0.0, 128
        %659 = vxpose.xlu0.b32.cont [9/16] 0.0, 128
        %660 = vxpose.xlu0.b32.cont [10/16] 0.0, 128
        %661 = vxpose.xlu0.b32.cont [11/16] 0.0, 128
        %662 = vxpose.xlu0.b32.cont [12/16] 0.0, 128
        %663 = vxpose.xlu0.b32.cont [13/16] 0.0, 128
        %664 = vxpose.xlu0.b32.cont [14/16] 0.0, 128
        %665 = vxpose.xlu0.b32.cont [15/16] 0.0, 128
        %666 = vxpose.xlu0.b32.end [16/16] 0.0, 128
        %v667 = vpop.trf.xlu0
        %v668 = vpop.trf.xlu0
        %v669 = vpop.trf.xlu0
        %v670 = vpop.trf.xlu0
        %v671 = vpop.trf.xlu0
        %v672 = vpop.trf.xlu0
        %v673 = vpop.trf.xlu0
        %v674 = vpop.trf.xlu0
        %v675 = vpop.trf.xlu0
        %v676 = vpop.trf.xlu0
        %v677 = vpop.trf.xlu0
        %v678 = vpop.trf.xlu0
        %v679 = vpop.trf.xlu0
        %v680 = vpop.trf.xlu0
        %v681 = vpop.trf.xlu0
        %v682 = vpop.trf.xlu0
        %683 = vxpose.xlu0.b32.start [1/16] %v615, 128
        %684 = vxpose.xlu0.b32.cont [2/16] 0.0, 128
        %685 = vxpose.xlu0.b32.cont [3/16] 0.0, 128
        %686 = vxpose.xlu0.b32.cont [4/16] 0.0, 128
        %687 = vxpose.xlu0.b32.cont [5/16] 0.0, 128
        %688 = vxpose.xlu0.b32.cont [6/16] 0.0, 128
        %689 = vxpose.xlu0.b32.cont [7/16] 0.0, 128
        %690 = vxpose.xlu0.b32.cont [8/16] 0.0, 128
        %691 = vxpose.xlu0.b32.cont [9/16] 0.0, 128
        %692 = vxpose.xlu0.b32.cont [10/16] 0.0, 128
        %693 = vxpose.xlu0.b32.cont [11/16] 0.0, 128
        %694 = vxpose.xlu0.b32.cont [12/16] 0.0, 128
        %695 = vxpose.xlu0.b32.cont [13/16] 0.0, 128
        %696 = vxpose.xlu0.b32.cont [14/16] 0.0, 128
        %697 = vxpose.xlu0.b32.cont [15/16] 0.0, 128
        %698 = vxpose.xlu0.b32.end [16/16] 0.0, 128
        %v699 = vpop.trf.xlu0
        %v700 = vpop.trf.xlu0
        %v701 = vpop.trf.xlu0
        %v702 = vpop.trf.xlu0
        %v703 = vpop.trf.xlu0
        %v704 = vpop.trf.xlu0
        %v705 = vpop.trf.xlu0
        %v706 = vpop.trf.xlu0
        %v707 = vpop.trf.xlu0
        %v708 = vpop.trf.xlu0
        %v709 = vpop.trf.xlu0
        %v710 = vpop.trf.xlu0
        %v711 = vpop.trf.xlu0
        %v712 = vpop.trf.xlu0
        %v713 = vpop.trf.xlu0
        %v714 = vpop.trf.xlu0
        %715 = vxpose.xlu0.b32.start [1/16] %v617, 128
        %716 = vxpose.xlu0.b32.cont [2/16] 0.0, 128
        %717 = vxpose.xlu0.b32.cont [3/16] 0.0, 128
        %718 = vxpose.xlu0.b32.cont [4/16] 0.0, 128
        %719 = vxpose.xlu0.b32.cont [5/16] 0.0, 128
        %720 = vxpose.xlu0.b32.cont [6/16] 0.0, 128
        %721 = vxpose.xlu0.b32.cont [7/16] 0.0, 128
        %722 = vxpose.xlu0.b32.cont [8/16] 0.0, 128
        %723 = vxpose.xlu0.b32.cont [9/16] 0.0, 128
        %724 = vxpose.xlu0.b32.cont [10/16] 0.0, 128
        %725 = vxpose.xlu0.b32.cont [11/16] 0.0, 128
        %726 = vxpose.xlu0.b32.cont [12/16] 0.0, 128
        %727 = vxpose.xlu0.b32.cont [13/16] 0.0, 128
        %728 = vxpose.xlu0.b32.cont [14/16] 0.0, 128
        %729 = vxpose.xlu0.b32.cont [15/16] 0.0, 128
        %730 = vxpose.xlu0.b32.end [16/16] 0.0, 128
        %v731 = vpop.trf.xlu0
        %v732 = vpop.trf.xlu0
        %v733 = vpop.trf.xlu0
        %v734 = vpop.trf.xlu0
        %v735 = vpop.trf.xlu0
        %v736 = vpop.trf.xlu0
        %v737 = vpop.trf.xlu0
        %v738 = vpop.trf.xlu0
        %v739 = vpop.trf.xlu0
        %v740 = vpop.trf.xlu0
        %v741 = vpop.trf.xlu0
        %v742 = vpop.trf.xlu0
        %v743 = vpop.trf.xlu0
        %v744 = vpop.trf.xlu0
        %v745 = vpop.trf.xlu0
        %v746 = vpop.trf.xlu0
        %vm747 = vcmask 64512
        %v749 = vsel %vm747, %v635, 0
        %v752 = vsel %vm747, %v636, 0
        %v755 = vsel %vm747, %v637, 0
        %v758 = vsel %vm747, %v638, 0
        %v761 = vsel %vm747, %v639, 0
        %v764 = vsel %vm747, %v640, 0
        %v767 = vsel %vm747, %v641, 0
        %v770 = vsel %vm747, %v642, 0
        %v773 = vsel %vm747, %v643, 0
        %v776 = vsel %vm747, %v644, 0
        %v779 = vsel %vm747, %v645, 0
        %v782 = vsel %vm747, %v646, 0
        %v785 = vsel %vm747, %v647, 0
        %v788 = vsel %vm747, %v648, 0
        %v791 = vsel %vm747, %v649, 0
        %v794 = vsel %vm747, %v650, 0
        %v797 = vsel %vm747, %v667, 0
        %v800 = vsel %vm747, %v668, 0
        %v803 = vsel %vm747, %v669, 0
        %v806 = vsel %vm747, %v670, 0
        %v809 = vsel %vm747, %v671, 0
        %v812 = vsel %vm747, %v672, 0
        %v815 = vsel %vm747, %v673, 0
        %v818 = vsel %vm747, %v674, 0
        %v821 = vsel %vm747, %v675, 0
        %v824 = vsel %vm747, %v676, 0
        %v827 = vsel %vm747, %v677, 0
        %v830 = vsel %vm747, %v678, 0
        %v833 = vsel %vm747, %v679, 0
        %v836 = vsel %vm747, %v680, 0
        %v839 = vsel %vm747, %v681, 0
        %v842 = vsel %vm747, %v682, 0
        %v845 = vsel %vm747, %v699, 0
        %v848 = vsel %vm747, %v700, 0
        %v851 = vsel %vm747, %v701, 0
        %v854 = vsel %vm747, %v702, 0
        %v857 = vsel %vm747, %v703, 0
        %v860 = vsel %vm747, %v704, 0
        %v863 = vsel %vm747, %v705, 0
        %v866 = vsel %vm747, %v706, 0
        %v869 = vsel %vm747, %v707, 0
        %v872 = vsel %vm747, %v708, 0
        %v875 = vsel %vm747, %v709, 0
        %v878 = vsel %vm747, %v710, 0
        %v881 = vsel %vm747, %v711, 0
        %v884 = vsel %vm747, %v712, 0
        %v887 = vsel %vm747, %v713, 0
        %v890 = vsel %vm747, %v714, 0
        %v893 = vsel %vm747, %v731, 0
        %v896 = vsel %vm747, %v732, 0
        %v899 = vsel %vm747, %v733, 0
        %v902 = vsel %vm747, %v734, 0
        %v905 = vsel %vm747, %v735, 0
        %v908 = vsel %vm747, %v736, 0
        %v911 = vsel %vm747, %v737, 0
        %v914 = vsel %vm747, %v738, 0
        %v917 = vsel %vm747, %v739, 0
        %v920 = vsel %vm747, %v740, 0
        %v923 = vsel %vm747, %v741, 0
        %v926 = vsel %vm747, %v742, 0
        %v929 = vsel %vm747, %v743, 0
        %v932 = vsel %vm747, %v744, 0
        %v935 = vsel %vm747, %v745, 0
        %v938 = vsel %vm747, %v746, 0
        %940 = vmatprep.subr.mxu0 0.0
        %941 = vmatpush1.msra.mxu0 0.0
        %942 = vmatprep.subr.mxu0 0.0
        %943 = vmatpush1.msra.mxu0 0.0
        %944 = vmatprep.subr.mxu0 0.0
        %945 = vmatpush1.msra.mxu0 0.0
        %946 = vmatprep.subr.mxu0 0.0
        %947 = vmatpush1.msra.mxu0 0.0
        %948 = vmatprep.subr.mxu0 0.0
        %949 = vmatpush1.msra.mxu0 0.0
        %950 = vmatprep.subr.mxu0 0.0
        %951 = vmatpush1.msra.mxu0 0.0
        %952 = vmatprep.subr.mxu0 0.0
        %953 = vmatpush1.msra.mxu0 0.0
        %954 = vmatprep.subr.mxu0 0.0
        %955 = vmatpush1.msra.mxu0 0.0
        %956 = vmatprep.subr.mxu0 0.0
        %957 = vmatpush1.msra.mxu0 0.0
        %958 = vmatprep.subr.mxu0 0.0
        %959 = vmatpush1.msra.mxu0 0.0
        %960 = vmatprep.subr.mxu0 0.0
        %961 = vmatpush1.msra.mxu0 0.0
        %962 = vmatprep.subr.mxu0 0.0
        %963 = vmatpush1.msra.mxu0 0.0
        %964 = vmatprep.subr.mxu0 0.0
        %965 = vmatpush1.msra.mxu0 0.0
        %966 = vmatprep.subr.mxu0 0.0
        %967 = vmatpush1.msra.mxu0 0.0
        %968 = vmatprep.subr.mxu0 0.0
        %969 = vmatpush1.msra.mxu0 0.0
        %970 = vmatprep.subr.mxu0 %v382
        %971 = vmatpush1.msra.mxu0 %v380
        %972 = vmatprep.subr.mxu0 0.0
        %973 = vmatpush2.msra.mxu0 0.0
        %974 = vmatprep.subr.mxu0 0.0
        %975 = vmatpush2.msra.mxu0 0.0
        %976 = vmatprep.subr.mxu0 0.0
        %977 = vmatpush2.msra.mxu0 0.0
        %978 = vmatprep.subr.mxu0 0.0
        %979 = vmatpush2.msra.mxu0 0.0
        %980 = vmatprep.subr.mxu0 0.0
        %981 = vmatpush2.msra.mxu0 0.0
        %982 = vmatprep.subr.mxu0 0.0
        %983 = vmatpush2.msra.mxu0 0.0
        %984 = vmatprep.subr.mxu0 0.0
        %985 = vmatpush2.msra.mxu0 0.0
        %986 = vmatprep.subr.mxu0 0.0
        %987 = vmatpush2.msra.mxu0 0.0
        %988 = vmatprep.subr.mxu0 0.0
        %989 = vmatpush2.msra.mxu0 0.0
        %990 = vmatprep.subr.mxu0 0.0
        %991 = vmatpush2.msra.mxu0 0.0
        %992 = vmatprep.subr.mxu0 0.0
        %993 = vmatpush2.msra.mxu0 0.0
        %994 = vmatprep.subr.mxu0 0.0
        %995 = vmatpush2.msra.mxu0 0.0
        %996 = vmatprep.subr.mxu0 0.0
        %997 = vmatpush2.msra.mxu0 0.0
        %998 = vmatprep.subr.mxu0 0.0
        %999 = vmatpush2.msra.mxu0 0.0
        %1000 = vmatprep.subr.mxu0 0.0
        %1001 = vmatpush2.msra.mxu0 0.0
        %1002 = vmatprep.subr.mxu0 0.0
        %1003 = vmatpush2.msra.mxu0 0.0
        %1004 = vmatprep.mubr.f32.mxu0 0.0
        %1005 = vmatmul.mubr.f32.gmra.mxu0 %v749
        %v1006 = vpop.f32.mrf.mxu0
        %v1007 = vadd.f32 0.0, %v1006
        %v1008 = vpop.f32.mrf.mxu0
        %v1009 = vadd.f32 0.0, %v1008
        %1010 = vmatprep.mubr.f32.mxu0 0.0
        %1011 = vmatmul.mubr.f32.gmra.mxu0 %v752
        %v1012 = vpop.f32.mrf.mxu0
        %v1013 = vadd.f32 0.0, %v1012
        %v1014 = vpop.f32.mrf.mxu0
        %v1015 = vadd.f32 0.0, %v1014
        %1016 = vmatprep.mubr.f32.mxu0 0.0
        %1017 = vmatmul.mubr.f32.gmra.mxu0 %v755
        %v1018 = vpop.f32.mrf.mxu0
        %v1019 = vadd.f32 0.0, %v1018
        %v1020 = vpop.f32.mrf.mxu0
        %v1021 = vadd.f32 0.0, %v1020
        %1022 = vmatprep.mubr.f32.mxu0 0.0
        %1023 = vmatmul.mubr.f32.gmra.mxu0 %v758
        %v1024 = vpop.f32.mrf.mxu0
        %v1025 = vadd.f32 0.0, %v1024
        %v1026 = vpop.f32.mrf.mxu0
        %v1027 = vadd.f32 0.0, %v1026
        %1028 = vmatprep.mubr.f32.mxu0 0.0
        %1029 = vmatmul.mubr.f32.gmra.mxu0 %v761
        %v1030 = vpop.f32.mrf.mxu0
        %v1031 = vadd.f32 0.0, %v1030
        %v1032 = vpop.f32.mrf.mxu0
        %v1033 = vadd.f32 0.0, %v1032
        %1034 = vmatprep.mubr.f32.mxu0 0.0
        %1035 = vmatmul.mubr.f32.gmra.mxu0 %v764
        %v1036 = vpop.f32.mrf.mxu0
        %v1037 = vadd.f32 0.0, %v1036
        %v1038 = vpop.f32.mrf.mxu0
        %v1039 = vadd.f32 0.0, %v1038
        %1040 = vmatprep.mubr.f32.mxu0 0.0
        %1041 = vmatmul.mubr.f32.gmra.mxu0 %v767
        %v1042 = vpop.f32.mrf.mxu0
        %v1043 = vadd.f32 0.0, %v1042
        %v1044 = vpop.f32.mrf.mxu0
        %v1045 = vadd.f32 0.0, %v1044
        %1046 = vmatprep.mubr.f32.mxu0 0.0
        %1047 = vmatmul.mubr.f32.gmra.mxu0 %v770
        %v1048 = vpop.f32.mrf.mxu0
        %v1049 = vadd.f32 0.0, %v1048
        %v1050 = vpop.f32.mrf.mxu0
        %v1051 = vadd.f32 0.0, %v1050
        %1052 = vmatprep.mubr.f32.mxu0 0.0
        %1053 = vmatmul.mubr.f32.gmra.mxu0 %v773
        %v1054 = vpop.f32.mrf.mxu0
        %v1055 = vadd.f32 0.0, %v1054
        %v1056 = vpop.f32.mrf.mxu0
        %v1057 = vadd.f32 0.0, %v1056
        %1058 = vmatprep.mubr.f32.mxu0 0.0
        %1059 = vmatmul.mubr.f32.gmra.mxu0 %v776
        %v1060 = vpop.f32.mrf.mxu0
        %v1061 = vadd.f32 0.0, %v1060
        %v1062 = vpop.f32.mrf.mxu0
        %v1063 = vadd.f32 0.0, %v1062
        %1064 = vmatprep.mubr.f32.mxu0 0.0
        %1065 = vmatmul.mubr.f32.gmra.mxu0 %v779
        %v1066 = vpop.f32.mrf.mxu0
        %v1067 = vadd.f32 0.0, %v1066
        %v1068 = vpop.f32.mrf.mxu0
        %v1069 = vadd.f32 0.0, %v1068
        %1070 = vmatprep.mubr.f32.mxu0 0.0
        %1071 = vmatmul.mubr.f32.gmra.mxu0 %v782
        %v1072 = vpop.f32.mrf.mxu0
        %v1073 = vadd.f32 0.0, %v1072
        %v1074 = vpop.f32.mrf.mxu0
        %v1075 = vadd.f32 0.0, %v1074
        %1076 = vmatprep.mubr.f32.mxu0 0.0
        %1077 = vmatmul.mubr.f32.gmra.mxu0 %v785
        %v1078 = vpop.f32.mrf.mxu0
        %v1079 = vadd.f32 0.0, %v1078
        %v1080 = vpop.f32.mrf.mxu0
        %v1081 = vadd.f32 0.0, %v1080
        %1082 = vmatprep.mubr.f32.mxu0 0.0
        %1083 = vmatmul.mubr.f32.gmra.mxu0 %v788
        %v1084 = vpop.f32.mrf.mxu0
        %v1085 = vadd.f32 0.0, %v1084
        %v1086 = vpop.f32.mrf.mxu0
        %v1087 = vadd.f32 0.0, %v1086
        %1088 = vmatprep.mubr.f32.mxu0 0.0
        %1089 = vmatmul.mubr.f32.gmra.mxu0 %v791
        %v1090 = vpop.f32.mrf.mxu0
        %v1091 = vadd.f32 0.0, %v1090
        %v1092 = vpop.f32.mrf.mxu0
        %v1093 = vadd.f32 0.0, %v1092
        %1094 = vmatprep.mubr.f32.mxu0 0.0
        %1095 = vmatmul.mubr.f32.gmra.mxu0 %v794
        %v1096 = vpop.f32.mrf.mxu0
        %v1097 = vadd.f32 0.0, %v1096
        %v1098 = vpop.f32.mrf.mxu0
        %v1099 = vadd.f32 0.0, %v1098
        %1100 = vmatprep.mubr.f32.mxu0 0.0
        %1101 = vmatmul.mubr.f32.gmra.mxu0 %v797
        %v1102 = vpop.f32.mrf.mxu0
        %v1103 = vadd.f32 0.0, %v1102
        %v1104 = vpop.f32.mrf.mxu0
        %v1105 = vadd.f32 0.0, %v1104
        %1106 = vmatprep.mubr.f32.mxu0 0.0
        %1107 = vmatmul.mubr.f32.gmra.mxu0 %v800
        %v1108 = vpop.f32.mrf.mxu0
        %v1109 = vadd.f32 0.0, %v1108
        %v1110 = vpop.f32.mrf.mxu0
        %v1111 = vadd.f32 0.0, %v1110
        %1112 = vmatprep.mubr.f32.mxu0 0.0
        %1113 = vmatmul.mubr.f32.gmra.mxu0 %v803
        %v1114 = vpop.f32.mrf.mxu0
        %v1115 = vadd.f32 0.0, %v1114
        %v1116 = vpop.f32.mrf.mxu0
        %v1117 = vadd.f32 0.0, %v1116
        %1118 = vmatprep.mubr.f32.mxu0 0.0
        %1119 = vmatmul.mubr.f32.gmra.mxu0 %v806
        %v1120 = vpop.f32.mrf.mxu0
        %v1121 = vadd.f32 0.0, %v1120
        %v1122 = vpop.f32.mrf.mxu0
        %v1123 = vadd.f32 0.0, %v1122
        %1124 = vmatprep.mubr.f32.mxu0 0.0
        %1125 = vmatmul.mubr.f32.gmra.mxu0 %v809
        %v1126 = vpop.f32.mrf.mxu0
        %v1127 = vadd.f32 0.0, %v1126
        %v1128 = vpop.f32.mrf.mxu0
        %v1129 = vadd.f32 0.0, %v1128
        %1130 = vmatprep.mubr.f32.mxu0 0.0
        %1131 = vmatmul.mubr.f32.gmra.mxu0 %v812
        %v1132 = vpop.f32.mrf.mxu0
        %v1133 = vadd.f32 0.0, %v1132
        %v1134 = vpop.f32.mrf.mxu0
        %v1135 = vadd.f32 0.0, %v1134
        %1136 = vmatprep.mubr.f32.mxu0 0.0
        %1137 = vmatmul.mubr.f32.gmra.mxu0 %v815
        %v1138 = vpop.f32.mrf.mxu0
        %v1139 = vadd.f32 0.0, %v1138
        %v1140 = vpop.f32.mrf.mxu0
        %v1141 = vadd.f32 0.0, %v1140
        %1142 = vmatprep.mubr.f32.mxu0 0.0
        %1143 = vmatmul.mubr.f32.gmra.mxu0 %v818
        %v1144 = vpop.f32.mrf.mxu0
        %v1145 = vadd.f32 0.0, %v1144
        %v1146 = vpop.f32.mrf.mxu0
        %v1147 = vadd.f32 0.0, %v1146
        %1148 = vmatprep.mubr.f32.mxu0 0.0
        %1149 = vmatmul.mubr.f32.gmra.mxu0 %v821
        %v1150 = vpop.f32.mrf.mxu0
        %v1151 = vadd.f32 0.0, %v1150
        %v1152 = vpop.f32.mrf.mxu0
        %v1153 = vadd.f32 0.0, %v1152
        %1154 = vmatprep.mubr.f32.mxu0 0.0
        %1155 = vmatmul.mubr.f32.gmra.mxu0 %v824
        %v1156 = vpop.f32.mrf.mxu0
        %v1157 = vadd.f32 0.0, %v1156
        %v1158 = vpop.f32.mrf.mxu0
        %v1159 = vadd.f32 0.0, %v1158
        %1160 = vmatprep.mubr.f32.mxu0 0.0
        %1161 = vmatmul.mubr.f32.gmra.mxu0 %v827
        %v1162 = vpop.f32.mrf.mxu0
        %v1163 = vadd.f32 0.0, %v1162
        %v1164 = vpop.f32.mrf.mxu0
        %v1165 = vadd.f32 0.0, %v1164
        %1166 = vmatprep.mubr.f32.mxu0 0.0
        %1167 = vmatmul.mubr.f32.gmra.mxu0 %v830
        %v1168 = vpop.f32.mrf.mxu0
        %v1169 = vadd.f32 0.0, %v1168
        %v1170 = vpop.f32.mrf.mxu0
        %v1171 = vadd.f32 0.0, %v1170
        %1172 = vmatprep.mubr.f32.mxu0 0.0
        %1173 = vmatmul.mubr.f32.gmra.mxu0 %v833
        %v1174 = vpop.f32.mrf.mxu0
        %v1175 = vadd.f32 0.0, %v1174
        %v1176 = vpop.f32.mrf.mxu0
        %v1177 = vadd.f32 0.0, %v1176
        %1178 = vmatprep.mubr.f32.mxu0 0.0
        %1179 = vmatmul.mubr.f32.gmra.mxu0 %v836
        %v1180 = vpop.f32.mrf.mxu0
        %v1181 = vadd.f32 0.0, %v1180
        %v1182 = vpop.f32.mrf.mxu0
        %v1183 = vadd.f32 0.0, %v1182
        %1184 = vmatprep.mubr.f32.mxu0 0.0
        %1185 = vmatmul.mubr.f32.gmra.mxu0 %v839
        %v1186 = vpop.f32.mrf.mxu0
        %v1187 = vadd.f32 0.0, %v1186
        %v1188 = vpop.f32.mrf.mxu0
        %v1189 = vadd.f32 0.0, %v1188
        %1190 = vmatprep.mubr.f32.mxu0 0.0
        %1191 = vmatmul.mubr.f32.gmra.mxu0 %v842
        %v1192 = vpop.f32.mrf.mxu0
        %v1193 = vadd.f32 0.0, %v1192
        %v1194 = vpop.f32.mrf.mxu0
        %v1195 = vadd.f32 0.0, %v1194
        %1196 = vmatprep.mubr.f32.mxu0 0.0
        %1197 = vmatmul.mubr.f32.gmra.mxu0 %v845
        %v1198 = vpop.f32.mrf.mxu0
        %v1199 = vadd.f32 0.0, %v1198
        %v1200 = vpop.f32.mrf.mxu0
        %v1201 = vadd.f32 0.0, %v1200
        %1202 = vmatprep.mubr.f32.mxu0 0.0
        %1203 = vmatmul.mubr.f32.gmra.mxu0 %v848
        %v1204 = vpop.f32.mrf.mxu0
        %v1205 = vadd.f32 0.0, %v1204
        %v1206 = vpop.f32.mrf.mxu0
        %v1207 = vadd.f32 0.0, %v1206
        %1208 = vmatprep.mubr.f32.mxu0 0.0
        %1209 = vmatmul.mubr.f32.gmra.mxu0 %v851
        %v1210 = vpop.f32.mrf.mxu0
        %v1211 = vadd.f32 0.0, %v1210
        %v1212 = vpop.f32.mrf.mxu0
        %v1213 = vadd.f32 0.0, %v1212
        %1214 = vmatprep.mubr.f32.mxu0 0.0
        %1215 = vmatmul.mubr.f32.gmra.mxu0 %v854
        %v1216 = vpop.f32.mrf.mxu0
        %v1217 = vadd.f32 0.0, %v1216
        %v1218 = vpop.f32.mrf.mxu0
        %v1219 = vadd.f32 0.0, %v1218
        %1220 = vmatprep.mubr.f32.mxu0 0.0
        %1221 = vmatmul.mubr.f32.gmra.mxu0 %v857
        %v1222 = vpop.f32.mrf.mxu0
        %v1223 = vadd.f32 0.0, %v1222
        %v1224 = vpop.f32.mrf.mxu0
        %v1225 = vadd.f32 0.0, %v1224
        %1226 = vmatprep.mubr.f32.mxu0 0.0
        %1227 = vmatmul.mubr.f32.gmra.mxu0 %v860
        %v1228 = vpop.f32.mrf.mxu0
        %v1229 = vadd.f32 0.0, %v1228
        %v1230 = vpop.f32.mrf.mxu0
        %v1231 = vadd.f32 0.0, %v1230
        %1232 = vmatprep.mubr.f32.mxu0 0.0
        %1233 = vmatmul.mubr.f32.gmra.mxu0 %v863
        %v1234 = vpop.f32.mrf.mxu0
        %v1235 = vadd.f32 0.0, %v1234
        %v1236 = vpop.f32.mrf.mxu0
        %v1237 = vadd.f32 0.0, %v1236
        %1238 = vmatprep.mubr.f32.mxu0 0.0
        %1239 = vmatmul.mubr.f32.gmra.mxu0 %v866
        %v1240 = vpop.f32.mrf.mxu0
        %v1241 = vadd.f32 0.0, %v1240
        %v1242 = vpop.f32.mrf.mxu0
        %v1243 = vadd.f32 0.0, %v1242
        %1244 = vmatprep.mubr.f32.mxu0 0.0
        %1245 = vmatmul.mubr.f32.gmra.mxu0 %v869
        %v1246 = vpop.f32.mrf.mxu0
        %v1247 = vadd.f32 0.0, %v1246
        %v1248 = vpop.f32.mrf.mxu0
        %v1249 = vadd.f32 0.0, %v1248
        %1250 = vmatprep.mubr.f32.mxu0 0.0
        %1251 = vmatmul.mubr.f32.gmra.mxu0 %v872
        %v1252 = vpop.f32.mrf.mxu0
        %v1253 = vadd.f32 0.0, %v1252
        %v1254 = vpop.f32.mrf.mxu0
        %v1255 = vadd.f32 0.0, %v1254
        %1256 = vmatprep.mubr.f32.mxu0 0.0
        %1257 = vmatmul.mubr.f32.gmra.mxu0 %v875
        %v1258 = vpop.f32.mrf.mxu0
        %v1259 = vadd.f32 0.0, %v1258
        %v1260 = vpop.f32.mrf.mxu0
        %v1261 = vadd.f32 0.0, %v1260
        %1262 = vmatprep.mubr.f32.mxu0 0.0
        %1263 = vmatmul.mubr.f32.gmra.mxu0 %v878
        %v1264 = vpop.f32.mrf.mxu0
        %v1265 = vadd.f32 0.0, %v1264
        %v1266 = vpop.f32.mrf.mxu0
        %v1267 = vadd.f32 0.0, %v1266
        %1268 = vmatprep.mubr.f32.mxu0 0.0
        %1269 = vmatmul.mubr.f32.gmra.mxu0 %v881
        %v1270 = vpop.f32.mrf.mxu0
        %v1271 = vadd.f32 0.0, %v1270
        %v1272 = vpop.f32.mrf.mxu0
        %v1273 = vadd.f32 0.0, %v1272
        %1274 = vmatprep.mubr.f32.mxu0 0.0
        %1275 = vmatmul.mubr.f32.gmra.mxu0 %v884
        %v1276 = vpop.f32.mrf.mxu0
        %v1277 = vadd.f32 0.0, %v1276
        %v1278 = vpop.f32.mrf.mxu0
        %v1279 = vadd.f32 0.0, %v1278
        %1280 = vmatprep.mubr.f32.mxu0 0.0
        %1281 = vmatmul.mubr.f32.gmra.mxu0 %v887
        %v1282 = vpop.f32.mrf.mxu0
        %v1283 = vadd.f32 0.0, %v1282
        %v1284 = vpop.f32.mrf.mxu0
        %v1285 = vadd.f32 0.0, %v1284
        %1286 = vmatprep.mubr.f32.mxu0 0.0
        %1287 = vmatmul.mubr.f32.gmra.mxu0 %v890
        %v1288 = vpop.f32.mrf.mxu0
        %v1289 = vadd.f32 0.0, %v1288
        %v1290 = vpop.f32.mrf.mxu0
        %v1291 = vadd.f32 0.0, %v1290
        %1292 = vmatprep.mubr.f32.mxu0 0.0
        %1293 = vmatmul.mubr.f32.gmra.mxu0 %v893
        %v1294 = vpop.f32.mrf.mxu0
        %v1295 = vadd.f32 0.0, %v1294
        %v1296 = vpop.f32.mrf.mxu0
        %v1297 = vadd.f32 0.0, %v1296
        %1298 = vmatprep.mubr.f32.mxu0 0.0
        %1299 = vmatmul.mubr.f32.gmra.mxu0 %v896
        %v1300 = vpop.f32.mrf.mxu0
        %v1301 = vadd.f32 0.0, %v1300
        %v1302 = vpop.f32.mrf.mxu0
        %v1303 = vadd.f32 0.0, %v1302
        %1304 = vmatprep.mubr.f32.mxu0 0.0
        %1305 = vmatmul.mubr.f32.gmra.mxu0 %v899
        %v1306 = vpop.f32.mrf.mxu0
        %v1307 = vadd.f32 0.0, %v1306
        %v1308 = vpop.f32.mrf.mxu0
        %v1309 = vadd.f32 0.0, %v1308
        %1310 = vmatprep.mubr.f32.mxu0 0.0
        %1311 = vmatmul.mubr.f32.gmra.mxu0 %v902
        %v1312 = vpop.f32.mrf.mxu0
        %v1313 = vadd.f32 0.0, %v1312
        %v1314 = vpop.f32.mrf.mxu0
        %v1315 = vadd.f32 0.0, %v1314
        %1316 = vmatprep.mubr.f32.mxu0 0.0
        %1317 = vmatmul.mubr.f32.gmra.mxu0 %v905
        %v1318 = vpop.f32.mrf.mxu0
        %v1319 = vadd.f32 0.0, %v1318
        %v1320 = vpop.f32.mrf.mxu0
        %v1321 = vadd.f32 0.0, %v1320
        %1322 = vmatprep.mubr.f32.mxu0 0.0
        %1323 = vmatmul.mubr.f32.gmra.mxu0 %v908
        %v1324 = vpop.f32.mrf.mxu0
        %v1325 = vadd.f32 0.0, %v1324
        %v1326 = vpop.f32.mrf.mxu0
        %v1327 = vadd.f32 0.0, %v1326
        %1328 = vmatprep.mubr.f32.mxu0 0.0
        %1329 = vmatmul.mubr.f32.gmra.mxu0 %v911
        %v1330 = vpop.f32.mrf.mxu0
        %v1331 = vadd.f32 0.0, %v1330
        %v1332 = vpop.f32.mrf.mxu0
        %v1333 = vadd.f32 0.0, %v1332
        %1334 = vmatprep.mubr.f32.mxu0 0.0
        %1335 = vmatmul.mubr.f32.gmra.mxu0 %v914
        %v1336 = vpop.f32.mrf.mxu0
        %v1337 = vadd.f32 0.0, %v1336
        %v1338 = vpop.f32.mrf.mxu0
        %v1339 = vadd.f32 0.0, %v1338
        %1340 = vmatprep.mubr.f32.mxu0 0.0
        %1341 = vmatmul.mubr.f32.gmra.mxu0 %v917
        %v1342 = vpop.f32.mrf.mxu0
        %v1343 = vadd.f32 0.0, %v1342
        %v1344 = vpop.f32.mrf.mxu0
        %v1345 = vadd.f32 0.0, %v1344
        %1346 = vmatprep.mubr.f32.mxu0 0.0
        %1347 = vmatmul.mubr.f32.gmra.mxu0 %v920
        %v1348 = vpop.f32.mrf.mxu0
        %v1349 = vadd.f32 0.0, %v1348
        %v1350 = vpop.f32.mrf.mxu0
        %v1351 = vadd.f32 0.0, %v1350
        %1352 = vmatprep.mubr.f32.mxu0 0.0
        %1353 = vmatmul.mubr.f32.gmra.mxu0 %v923
        %v1354 = vpop.f32.mrf.mxu0
        %v1355 = vadd.f32 0.0, %v1354
        %v1356 = vpop.f32.mrf.mxu0
        %v1357 = vadd.f32 0.0, %v1356
        %1358 = vmatprep.mubr.f32.mxu0 0.0
        %1359 = vmatmul.mubr.f32.gmra.mxu0 %v926
        %v1360 = vpop.f32.mrf.mxu0
        %v1361 = vadd.f32 0.0, %v1360
        %v1362 = vpop.f32.mrf.mxu0
        %v1363 = vadd.f32 0.0, %v1362
        %1364 = vmatprep.mubr.f32.mxu0 0.0
        %1365 = vmatmul.mubr.f32.gmra.mxu0 %v929
        %v1366 = vpop.f32.mrf.mxu0
        %v1367 = vadd.f32 0.0, %v1366
        %v1368 = vpop.f32.mrf.mxu0
        %v1369 = vadd.f32 0.0, %v1368
        %1370 = vmatprep.mubr.f32.mxu0 0.0
        %1371 = vmatmul.mubr.f32.gmra.mxu0 %v932
        %v1372 = vpop.f32.mrf.mxu0
        %v1373 = vadd.f32 0.0, %v1372
        %v1374 = vpop.f32.mrf.mxu0
        %v1375 = vadd.f32 0.0, %v1374
        %1376 = vmatprep.mubr.f32.mxu0 0.0
        %1377 = vmatmul.mubr.f32.gmra.mxu0 %v935
        %v1378 = vpop.f32.mrf.mxu0
        %v1379 = vadd.f32 0.0, %v1378
        %v1380 = vpop.f32.mrf.mxu0
        %v1381 = vadd.f32 0.0, %v1380
        %1382 = vmatprep.mubr.f32.mxu0 0.0
        %1383 = vmatmul.mubr.f32.gmra.mxu0 %v938
        %v1384 = vpop.f32.mrf.mxu0
        %v1385 = vadd.f32 0.0, %v1384
        %v1386 = vpop.f32.mrf.mxu0
        %v1387 = vadd.f32 0.0, %v1386
        %1388 = vdwg.mxu0
        %1389 = vmatprep.subr.mxu0 0.0
        %1390 = vmatpush1.msra.mxu0 0.0
        %1391 = vmatprep.subr.mxu0 0.0
        %1392 = vmatpush1.msra.mxu0 0.0
        %1393 = vmatprep.subr.mxu0 0.0
        %1394 = vmatpush1.msra.mxu0 0.0
        %1395 = vmatprep.subr.mxu0 0.0
        %1396 = vmatpush1.msra.mxu0 0.0
        %1397 = vmatprep.subr.mxu0 0.0
        %1398 = vmatpush1.msra.mxu0 0.0
        %1399 = vmatprep.subr.mxu0 0.0
        %1400 = vmatpush1.msra.mxu0 0.0
        %1401 = vmatprep.subr.mxu0 0.0
        %1402 = vmatpush1.msra.mxu0 0.0
        %1403 = vmatprep.subr.mxu0 0.0
        %1404 = vmatpush1.msra.mxu0 0.0
        %1405 = vmatprep.subr.mxu0 0.0
        %1406 = vmatpush1.msra.mxu0 0.0
        %1407 = vmatprep.subr.mxu0 0.0
        %1408 = vmatpush1.msra.mxu0 0.0
        %1409 = vmatprep.subr.mxu0 0.0
        %1410 = vmatpush1.msra.mxu0 0.0
        %1411 = vmatprep.subr.mxu0 0.0
        %1412 = vmatpush1.msra.mxu0 0.0
        %1413 = vmatprep.subr.mxu0 0.0
        %1414 = vmatpush1.msra.mxu0 0.0
        %1415 = vmatprep.subr.mxu0 0.0
        %1416 = vmatpush1.msra.mxu0 0.0
        %1417 = vmatprep.subr.mxu0 0.0
        %1418 = vmatpush1.msra.mxu0 0.0
        %1419 = vmatprep.subr.mxu0 %v459
        %1420 = vmatpush1.msra.mxu0 %v457
        %1421 = vmatprep.subr.mxu0 0.0
        %1422 = vmatpush2.msra.mxu0 0.0
        %1423 = vmatprep.subr.mxu0 0.0
        %1424 = vmatpush2.msra.mxu0 0.0
        %1425 = vmatprep.subr.mxu0 0.0
        %1426 = vmatpush2.msra.mxu0 0.0
        %1427 = vmatprep.subr.mxu0 0.0
        %1428 = vmatpush2.msra.mxu0 0.0
        %1429 = vmatprep.subr.mxu0 0.0
        %1430 = vmatpush2.msra.mxu0 0.0
        %1431 = vmatprep.subr.mxu0 0.0
        %1432 = vmatpush2.msra.mxu0 0.0
        %1433 = vmatprep.subr.mxu0 0.0
        %1434 = vmatpush2.msra.mxu0 0.0
        %1435 = vmatprep.subr.mxu0 0.0
        %1436 = vmatpush2.msra.mxu0 0.0
        %1437 = vmatprep.subr.mxu0 0.0
        %1438 = vmatpush2.msra.mxu0 0.0
        %1439 = vmatprep.subr.mxu0 0.0
        %1440 = vmatpush2.msra.mxu0 0.0
        %1441 = vmatprep.subr.mxu0 0.0
        %1442 = vmatpush2.msra.mxu0 0.0
        %1443 = vmatprep.subr.mxu0 0.0
        %1444 = vmatpush2.msra.mxu0 0.0
        %1445 = vmatprep.subr.mxu0 0.0
        %1446 = vmatpush2.msra.mxu0 0.0
        %1447 = vmatprep.subr.mxu0 0.0
        %1448 = vmatpush2.msra.mxu0 0.0
        %1449 = vmatprep.subr.mxu0 0.0
        %1450 = vmatpush2.msra.mxu0 0.0
        %1451 = vmatprep.subr.mxu0 0.0
        %1452 = vmatpush2.msra.mxu0 0.0
        %1453 = vmatprep.mubr.f32.mxu0 0.0
        %1454 = vmatmul.mubr.f32.gmra.mxu0 %v749
        %v1455 = vpop.f32.mrf.mxu0
        %v1456 = vadd.f32 0.0, %v1455
        %v1457 = vpop.f32.mrf.mxu0
        %v1458 = vadd.f32 0.0, %v1457
        %1459 = vmatprep.mubr.f32.mxu0 0.0
        %1460 = vmatmul.mubr.f32.gmra.mxu0 %v752
        %v1461 = vpop.f32.mrf.mxu0
        %v1462 = vadd.f32 0.0, %v1461
        %v1463 = vpop.f32.mrf.mxu0
        %v1464 = vadd.f32 0.0, %v1463
        %1465 = vmatprep.mubr.f32.mxu0 0.0
        %1466 = vmatmul.mubr.f32.gmra.mxu0 %v755
        %v1467 = vpop.f32.mrf.mxu0
        %v1468 = vadd.f32 0.0, %v1467
        %v1469 = vpop.f32.mrf.mxu0
        %v1470 = vadd.f32 0.0, %v1469
        %1471 = vmatprep.mubr.f32.mxu0 0.0
        %1472 = vmatmul.mubr.f32.gmra.mxu0 %v758
        %v1473 = vpop.f32.mrf.mxu0
        %v1474 = vadd.f32 0.0, %v1473
        %v1475 = vpop.f32.mrf.mxu0
        %v1476 = vadd.f32 0.0, %v1475
        %1477 = vmatprep.mubr.f32.mxu0 0.0
        %1478 = vmatmul.mubr.f32.gmra.mxu0 %v761
        %v1479 = vpop.f32.mrf.mxu0
        %v1480 = vadd.f32 0.0, %v1479
        %v1481 = vpop.f32.mrf.mxu0
        %v1482 = vadd.f32 0.0, %v1481
        %1483 = vmatprep.mubr.f32.mxu0 0.0
        %1484 = vmatmul.mubr.f32.gmra.mxu0 %v764
        %v1485 = vpop.f32.mrf.mxu0
        %v1486 = vadd.f32 0.0, %v1485
        %v1487 = vpop.f32.mrf.mxu0
        %v1488 = vadd.f32 0.0, %v1487
        %1489 = vmatprep.mubr.f32.mxu0 0.0
        %1490 = vmatmul.mubr.f32.gmra.mxu0 %v767
        %v1491 = vpop.f32.mrf.mxu0
        %v1492 = vadd.f32 0.0, %v1491
        %v1493 = vpop.f32.mrf.mxu0
        %v1494 = vadd.f32 0.0, %v1493
        %1495 = vmatprep.mubr.f32.mxu0 0.0
        %1496 = vmatmul.mubr.f32.gmra.mxu0 %v770
        %v1497 = vpop.f32.mrf.mxu0
        %v1498 = vadd.f32 0.0, %v1497
        %v1499 = vpop.f32.mrf.mxu0
        %v1500 = vadd.f32 0.0, %v1499
        %1501 = vmatprep.mubr.f32.mxu0 0.0
        %1502 = vmatmul.mubr.f32.gmra.mxu0 %v773
        %v1503 = vpop.f32.mrf.mxu0
        %v1504 = vadd.f32 0.0, %v1503
        %v1505 = vpop.f32.mrf.mxu0
        %v1506 = vadd.f32 0.0, %v1505
        %1507 = vmatprep.mubr.f32.mxu0 0.0
        %1508 = vmatmul.mubr.f32.gmra.mxu0 %v776
        %v1509 = vpop.f32.mrf.mxu0
        %v1510 = vadd.f32 0.0, %v1509
        %v1511 = vpop.f32.mrf.mxu0
        %v1512 = vadd.f32 0.0, %v1511
        %1513 = vmatprep.mubr.f32.mxu0 0.0
        %1514 = vmatmul.mubr.f32.gmra.mxu0 %v779
        %v1515 = vpop.f32.mrf.mxu0
        %v1516 = vadd.f32 0.0, %v1515
        %v1517 = vpop.f32.mrf.mxu0
        %v1518 = vadd.f32 0.0, %v1517
        %1519 = vmatprep.mubr.f32.mxu0 0.0
        %1520 = vmatmul.mubr.f32.gmra.mxu0 %v782
        %v1521 = vpop.f32.mrf.mxu0
        %v1522 = vadd.f32 0.0, %v1521
        %v1523 = vpop.f32.mrf.mxu0
        %v1524 = vadd.f32 0.0, %v1523
        %1525 = vmatprep.mubr.f32.mxu0 0.0
        %1526 = vmatmul.mubr.f32.gmra.mxu0 %v785
        %v1527 = vpop.f32.mrf.mxu0
        %v1528 = vadd.f32 0.0, %v1527
        %v1529 = vpop.f32.mrf.mxu0
        %v1530 = vadd.f32 0.0, %v1529
        %1531 = vmatprep.mubr.f32.mxu0 0.0
        %1532 = vmatmul.mubr.f32.gmra.mxu0 %v788
        %v1533 = vpop.f32.mrf.mxu0
        %v1534 = vadd.f32 0.0, %v1533
        %v1535 = vpop.f32.mrf.mxu0
        %v1536 = vadd.f32 0.0, %v1535
        %1537 = vmatprep.mubr.f32.mxu0 0.0
        %1538 = vmatmul.mubr.f32.gmra.mxu0 %v791
        %v1539 = vpop.f32.mrf.mxu0
        %v1540 = vadd.f32 0.0, %v1539
        %v1541 = vpop.f32.mrf.mxu0
        %v1542 = vadd.f32 0.0, %v1541
        %1543 = vmatprep.mubr.f32.mxu0 0.0
        %1544 = vmatmul.mubr.f32.gmra.mxu0 %v794
        %v1545 = vpop.f32.mrf.mxu0
        %v1546 = vadd.f32 0.0, %v1545
        %v1547 = vpop.f32.mrf.mxu0
        %v1548 = vadd.f32 0.0, %v1547
        %1549 = vmatprep.mubr.f32.mxu0 0.0
        %1550 = vmatmul.mubr.f32.gmra.mxu0 %v797
        %v1551 = vpop.f32.mrf.mxu0
        %v1552 = vadd.f32 0.0, %v1551
        %v1553 = vpop.f32.mrf.mxu0
        %v1554 = vadd.f32 0.0, %v1553
        %1555 = vmatprep.mubr.f32.mxu0 0.0
        %1556 = vmatmul.mubr.f32.gmra.mxu0 %v800
        %v1557 = vpop.f32.mrf.mxu0
        %v1558 = vadd.f32 0.0, %v1557
        %v1559 = vpop.f32.mrf.mxu0
        %v1560 = vadd.f32 0.0, %v1559
        %1561 = vmatprep.mubr.f32.mxu0 0.0
        %1562 = vmatmul.mubr.f32.gmra.mxu0 %v803
        %v1563 = vpop.f32.mrf.mxu0
        %v1564 = vadd.f32 0.0, %v1563
        %v1565 = vpop.f32.mrf.mxu0
        %v1566 = vadd.f32 0.0, %v1565
        %1567 = vmatprep.mubr.f32.mxu0 0.0
        %1568 = vmatmul.mubr.f32.gmra.mxu0 %v806
        %v1569 = vpop.f32.mrf.mxu0
        %v1570 = vadd.f32 0.0, %v1569
        %v1571 = vpop.f32.mrf.mxu0
        %v1572 = vadd.f32 0.0, %v1571
        %1573 = vmatprep.mubr.f32.mxu0 0.0
        %1574 = vmatmul.mubr.f32.gmra.mxu0 %v809
        %v1575 = vpop.f32.mrf.mxu0
        %v1576 = vadd.f32 0.0, %v1575
        %v1577 = vpop.f32.mrf.mxu0
        %v1578 = vadd.f32 0.0, %v1577
        %1579 = vmatprep.mubr.f32.mxu0 0.0
        %1580 = vmatmul.mubr.f32.gmra.mxu0 %v812
        %v1581 = vpop.f32.mrf.mxu0
        %v1582 = vadd.f32 0.0, %v1581
        %v1583 = vpop.f32.mrf.mxu0
        %v1584 = vadd.f32 0.0, %v1583
        %1585 = vmatprep.mubr.f32.mxu0 0.0
        %1586 = vmatmul.mubr.f32.gmra.mxu0 %v815
        %v1587 = vpop.f32.mrf.mxu0
        %v1588 = vadd.f32 0.0, %v1587
        %v1589 = vpop.f32.mrf.mxu0
        %v1590 = vadd.f32 0.0, %v1589
        %1591 = vmatprep.mubr.f32.mxu0 0.0
        %1592 = vmatmul.mubr.f32.gmra.mxu0 %v818
        %v1593 = vpop.f32.mrf.mxu0
        %v1594 = vadd.f32 0.0, %v1593
        %v1595 = vpop.f32.mrf.mxu0
        %v1596 = vadd.f32 0.0, %v1595
        %1597 = vmatprep.mubr.f32.mxu0 0.0
        %1598 = vmatmul.mubr.f32.gmra.mxu0 %v821
        %v1599 = vpop.f32.mrf.mxu0
        %v1600 = vadd.f32 0.0, %v1599
        %v1601 = vpop.f32.mrf.mxu0
        %v1602 = vadd.f32 0.0, %v1601
        %1603 = vmatprep.mubr.f32.mxu0 0.0
        %1604 = vmatmul.mubr.f32.gmra.mxu0 %v824
        %v1605 = vpop.f32.mrf.mxu0
        %v1606 = vadd.f32 0.0, %v1605
        %v1607 = vpop.f32.mrf.mxu0
        %v1608 = vadd.f32 0.0, %v1607
        %1609 = vmatprep.mubr.f32.mxu0 0.0
        %1610 = vmatmul.mubr.f32.gmra.mxu0 %v827
        %v1611 = vpop.f32.mrf.mxu0
        %v1612 = vadd.f32 0.0, %v1611
        %v1613 = vpop.f32.mrf.mxu0
        %v1614 = vadd.f32 0.0, %v1613
        %1615 = vmatprep.mubr.f32.mxu0 0.0
        %1616 = vmatmul.mubr.f32.gmra.mxu0 %v830
        %v1617 = vpop.f32.mrf.mxu0
        %v1618 = vadd.f32 0.0, %v1617
        %v1619 = vpop.f32.mrf.mxu0
        %v1620 = vadd.f32 0.0, %v1619
        %1621 = vmatprep.mubr.f32.mxu0 0.0
        %1622 = vmatmul.mubr.f32.gmra.mxu0 %v833
        %v1623 = vpop.f32.mrf.mxu0
        %v1624 = vadd.f32 0.0, %v1623
        %v1625 = vpop.f32.mrf.mxu0
        %v1626 = vadd.f32 0.0, %v1625
        %1627 = vmatprep.mubr.f32.mxu0 0.0
        %1628 = vmatmul.mubr.f32.gmra.mxu0 %v836
        %v1629 = vpop.f32.mrf.mxu0
        %v1630 = vadd.f32 0.0, %v1629
        %v1631 = vpop.f32.mrf.mxu0
        %v1632 = vadd.f32 0.0, %v1631
        %1633 = vmatprep.mubr.f32.mxu0 0.0
        %1634 = vmatmul.mubr.f32.gmra.mxu0 %v839
        %v1635 = vpop.f32.mrf.mxu0
        %v1636 = vadd.f32 0.0, %v1635
        %v1637 = vpop.f32.mrf.mxu0
        %v1638 = vadd.f32 0.0, %v1637
        %1639 = vmatprep.mubr.f32.mxu0 0.0
        %1640 = vmatmul.mubr.f32.gmra.mxu0 %v842
        %v1641 = vpop.f32.mrf.mxu0
        %v1642 = vadd.f32 0.0, %v1641
        %v1643 = vpop.f32.mrf.mxu0
        %v1644 = vadd.f32 0.0, %v1643
        %1645 = vmatprep.mubr.f32.mxu0 0.0
        %1646 = vmatmul.mubr.f32.gmra.mxu0 %v845
        %v1647 = vpop.f32.mrf.mxu0
        %v1648 = vadd.f32 0.0, %v1647
        %v1649 = vpop.f32.mrf.mxu0
        %v1650 = vadd.f32 0.0, %v1649
        %1651 = vmatprep.mubr.f32.mxu0 0.0
        %1652 = vmatmul.mubr.f32.gmra.mxu0 %v848
        %v1653 = vpop.f32.mrf.mxu0
        %v1654 = vadd.f32 0.0, %v1653
        %v1655 = vpop.f32.mrf.mxu0
        %v1656 = vadd.f32 0.0, %v1655
        %1657 = vmatprep.mubr.f32.mxu0 0.0
        %1658 = vmatmul.mubr.f32.gmra.mxu0 %v851
        %v1659 = vpop.f32.mrf.mxu0
        %v1660 = vadd.f32 0.0, %v1659
        %v1661 = vpop.f32.mrf.mxu0
        %v1662 = vadd.f32 0.0, %v1661
        %1663 = vmatprep.mubr.f32.mxu0 0.0
        %1664 = vmatmul.mubr.f32.gmra.mxu0 %v854
        %v1665 = vpop.f32.mrf.mxu0
        %v1666 = vadd.f32 0.0, %v1665
        %v1667 = vpop.f32.mrf.mxu0
        %v1668 = vadd.f32 0.0, %v1667
        %1669 = vmatprep.mubr.f32.mxu0 0.0
        %1670 = vmatmul.mubr.f32.gmra.mxu0 %v857
        %v1671 = vpop.f32.mrf.mxu0
        %v1672 = vadd.f32 0.0, %v1671
        %v1673 = vpop.f32.mrf.mxu0
        %v1674 = vadd.f32 0.0, %v1673
        %1675 = vmatprep.mubr.f32.mxu0 0.0
        %1676 = vmatmul.mubr.f32.gmra.mxu0 %v860
        %v1677 = vpop.f32.mrf.mxu0
        %v1678 = vadd.f32 0.0, %v1677
        %v1679 = vpop.f32.mrf.mxu0
        %v1680 = vadd.f32 0.0, %v1679
        %1681 = vmatprep.mubr.f32.mxu0 0.0
        %1682 = vmatmul.mubr.f32.gmra.mxu0 %v863
        %v1683 = vpop.f32.mrf.mxu0
        %v1684 = vadd.f32 0.0, %v1683
        %v1685 = vpop.f32.mrf.mxu0
        %v1686 = vadd.f32 0.0, %v1685
        %1687 = vmatprep.mubr.f32.mxu0 0.0
        %1688 = vmatmul.mubr.f32.gmra.mxu0 %v866
        %v1689 = vpop.f32.mrf.mxu0
        %v1690 = vadd.f32 0.0, %v1689
        %v1691 = vpop.f32.mrf.mxu0
        %v1692 = vadd.f32 0.0, %v1691
        %1693 = vmatprep.mubr.f32.mxu0 0.0
        %1694 = vmatmul.mubr.f32.gmra.mxu0 %v869
        %v1695 = vpop.f32.mrf.mxu0
        %v1696 = vadd.f32 0.0, %v1695
        %v1697 = vpop.f32.mrf.mxu0
        %v1698 = vadd.f32 0.0, %v1697
        %1699 = vmatprep.mubr.f32.mxu0 0.0
        %1700 = vmatmul.mubr.f32.gmra.mxu0 %v872
        %v1701 = vpop.f32.mrf.mxu0
        %v1702 = vadd.f32 0.0, %v1701
        %v1703 = vpop.f32.mrf.mxu0
        %v1704 = vadd.f32 0.0, %v1703
        %1705 = vmatprep.mubr.f32.mxu0 0.0
        %1706 = vmatmul.mubr.f32.gmra.mxu0 %v875
        %v1707 = vpop.f32.mrf.mxu0
        %v1708 = vadd.f32 0.0, %v1707
        %v1709 = vpop.f32.mrf.mxu0
        %v1710 = vadd.f32 0.0, %v1709
        %1711 = vmatprep.mubr.f32.mxu0 0.0
        %1712 = vmatmul.mubr.f32.gmra.mxu0 %v878
        %v1713 = vpop.f32.mrf.mxu0
        %v1714 = vadd.f32 0.0, %v1713
        %v1715 = vpop.f32.mrf.mxu0
        %v1716 = vadd.f32 0.0, %v1715
        %1717 = vmatprep.mubr.f32.mxu0 0.0
        %1718 = vmatmul.mubr.f32.gmra.mxu0 %v881
        %v1719 = vpop.f32.mrf.mxu0
        %v1720 = vadd.f32 0.0, %v1719
        %v1721 = vpop.f32.mrf.mxu0
        %v1722 = vadd.f32 0.0, %v1721
        %1723 = vmatprep.mubr.f32.mxu0 0.0
        %1724 = vmatmul.mubr.f32.gmra.mxu0 %v884
        %v1725 = vpop.f32.mrf.mxu0
        %v1726 = vadd.f32 0.0, %v1725
        %v1727 = vpop.f32.mrf.mxu0
        %v1728 = vadd.f32 0.0, %v1727
        %1729 = vmatprep.mubr.f32.mxu0 0.0
        %1730 = vmatmul.mubr.f32.gmra.mxu0 %v887
        %v1731 = vpop.f32.mrf.mxu0
        %v1732 = vadd.f32 0.0, %v1731
        %v1733 = vpop.f32.mrf.mxu0
        %v1734 = vadd.f32 0.0, %v1733
        %1735 = vmatprep.mubr.f32.mxu0 0.0
        %1736 = vmatmul.mubr.f32.gmra.mxu0 %v890
        %v1737 = vpop.f32.mrf.mxu0
        %v1738 = vadd.f32 0.0, %v1737
        %v1739 = vpop.f32.mrf.mxu0
        %v1740 = vadd.f32 0.0, %v1739
        %1741 = vmatprep.mubr.f32.mxu0 0.0
        %1742 = vmatmul.mubr.f32.gmra.mxu0 %v893
        %v1743 = vpop.f32.mrf.mxu0
        %v1744 = vadd.f32 0.0, %v1743
        %v1745 = vpop.f32.mrf.mxu0
        %v1746 = vadd.f32 0.0, %v1745
        %1747 = vmatprep.mubr.f32.mxu0 0.0
        %1748 = vmatmul.mubr.f32.gmra.mxu0 %v896
        %v1749 = vpop.f32.mrf.mxu0
        %v1750 = vadd.f32 0.0, %v1749
        %v1751 = vpop.f32.mrf.mxu0
        %v1752 = vadd.f32 0.0, %v1751
        %1753 = vmatprep.mubr.f32.mxu0 0.0
        %1754 = vmatmul.mubr.f32.gmra.mxu0 %v899
        %v1755 = vpop.f32.mrf.mxu0
        %v1756 = vadd.f32 0.0, %v1755
        %v1757 = vpop.f32.mrf.mxu0
        %v1758 = vadd.f32 0.0, %v1757
        %1759 = vmatprep.mubr.f32.mxu0 0.0
        %1760 = vmatmul.mubr.f32.gmra.mxu0 %v902
        %v1761 = vpop.f32.mrf.mxu0
        %v1762 = vadd.f32 0.0, %v1761
        %v1763 = vpop.f32.mrf.mxu0
        %v1764 = vadd.f32 0.0, %v1763
        %1765 = vmatprep.mubr.f32.mxu0 0.0
        %1766 = vmatmul.mubr.f32.gmra.mxu0 %v905
        %v1767 = vpop.f32.mrf.mxu0
        %v1768 = vadd.f32 0.0, %v1767
        %v1769 = vpop.f32.mrf.mxu0
        %v1770 = vadd.f32 0.0, %v1769
        %1771 = vmatprep.mubr.f32.mxu0 0.0
        %1772 = vmatmul.mubr.f32.gmra.mxu0 %v908
        %v1773 = vpop.f32.mrf.mxu0
        %v1774 = vadd.f32 0.0, %v1773
        %v1775 = vpop.f32.mrf.mxu0
        %v1776 = vadd.f32 0.0, %v1775
        %1777 = vmatprep.mubr.f32.mxu0 0.0
        %1778 = vmatmul.mubr.f32.gmra.mxu0 %v911
        %v1779 = vpop.f32.mrf.mxu0
        %v1780 = vadd.f32 0.0, %v1779
        %v1781 = vpop.f32.mrf.mxu0
        %v1782 = vadd.f32 0.0, %v1781
        %1783 = vmatprep.mubr.f32.mxu0 0.0
        %1784 = vmatmul.mubr.f32.gmra.mxu0 %v914
        %v1785 = vpop.f32.mrf.mxu0
        %v1786 = vadd.f32 0.0, %v1785
        %v1787 = vpop.f32.mrf.mxu0
        %v1788 = vadd.f32 0.0, %v1787
        %1789 = vmatprep.mubr.f32.mxu0 0.0
        %1790 = vmatmul.mubr.f32.gmra.mxu0 %v917
        %v1791 = vpop.f32.mrf.mxu0
        %v1792 = vadd.f32 0.0, %v1791
        %v1793 = vpop.f32.mrf.mxu0
        %v1794 = vadd.f32 0.0, %v1793
        %1795 = vmatprep.mubr.f32.mxu0 0.0
        %1796 = vmatmul.mubr.f32.gmra.mxu0 %v920
        %v1797 = vpop.f32.mrf.mxu0
        %v1798 = vadd.f32 0.0, %v1797
        %v1799 = vpop.f32.mrf.mxu0
        %v1800 = vadd.f32 0.0, %v1799
        %1801 = vmatprep.mubr.f32.mxu0 0.0
        %1802 = vmatmul.mubr.f32.gmra.mxu0 %v923
        %v1803 = vpop.f32.mrf.mxu0
        %v1804 = vadd.f32 0.0, %v1803
        %v1805 = vpop.f32.mrf.mxu0
        %v1806 = vadd.f32 0.0, %v1805
        %1807 = vmatprep.mubr.f32.mxu0 0.0
        %1808 = vmatmul.mubr.f32.gmra.mxu0 %v926
        %v1809 = vpop.f32.mrf.mxu0
        %v1810 = vadd.f32 0.0, %v1809
        %v1811 = vpop.f32.mrf.mxu0
        %v1812 = vadd.f32 0.0, %v1811
        %1813 = vmatprep.mubr.f32.mxu0 0.0
        %1814 = vmatmul.mubr.f32.gmra.mxu0 %v929
        %v1815 = vpop.f32.mrf.mxu0
        %v1816 = vadd.f32 0.0, %v1815
        %v1817 = vpop.f32.mrf.mxu0
        %v1818 = vadd.f32 0.0, %v1817
        %1819 = vmatprep.mubr.f32.mxu0 0.0
        %1820 = vmatmul.mubr.f32.gmra.mxu0 %v932
        %v1821 = vpop.f32.mrf.mxu0
        %v1822 = vadd.f32 0.0, %v1821
        %v1823 = vpop.f32.mrf.mxu0
        %v1824 = vadd.f32 0.0, %v1823
        %1825 = vmatprep.mubr.f32.mxu0 0.0
        %1826 = vmatmul.mubr.f32.gmra.mxu0 %v935
        %v1827 = vpop.f32.mrf.mxu0
        %v1828 = vadd.f32 0.0, %v1827
        %v1829 = vpop.f32.mrf.mxu0
        %v1830 = vadd.f32 0.0, %v1829
        %1831 = vmatprep.mubr.f32.mxu0 0.0
        %1832 = vmatmul.mubr.f32.gmra.mxu0 %v938
        %v1833 = vpop.f32.mrf.mxu0
        %v1834 = vadd.f32 0.0, %v1833
        %v1835 = vpop.f32.mrf.mxu0
        %v1836 = vadd.f32 0.0, %v1835
        %1837 = vdwg.mxu0
        %v1838 = vmax.f32 %v1007, %v1009
        %v1839 = vmax.f32 %v1838, %v1456
        %v1840 = vmax.f32 %v1839, %v1458
        %1841 = vmax.xlane.f32.xlu0 %v1840
        %v1842 = vpop.xlane.xlu0 %1841
        %v1843 = vmax.f32 %v1013, %v1015
        %v1844 = vmax.f32 %v1843, %v1462
        %v1845 = vmax.f32 %v1844, %v1464
        %1846 = vmax.xlane.f32.xlu0 %v1845
        %v1847 = vpop.xlane.xlu0 %1846
        %v1848 = vmax.f32 %v1019, %v1021
        %v1849 = vmax.f32 %v1848, %v1468
        %v1850 = vmax.f32 %v1849, %v1470
        %1851 = vmax.xlane.f32.xlu0 %v1850
        %v1852 = vpop.xlane.xlu0 %1851
        %v1853 = vmax.f32 %v1025, %v1027
        %v1854 = vmax.f32 %v1853, %v1474
        %v1855 = vmax.f32 %v1854, %v1476
        %1856 = vmax.xlane.f32.xlu0 %v1855
        %v1857 = vpop.xlane.xlu0 %1856
        %v1858 = vmax.f32 %v1031, %v1033
        %v1859 = vmax.f32 %v1858, %v1480
        %v1860 = vmax.f32 %v1859, %v1482
        %1861 = vmax.xlane.f32.xlu0 %v1860
        %v1862 = vpop.xlane.xlu0 %1861
        %v1863 = vmax.f32 %v1037, %v1039
        %v1864 = vmax.f32 %v1863, %v1486
        %v1865 = vmax.f32 %v1864, %v1488
        %1866 = vmax.xlane.f32.xlu0 %v1865
        %v1867 = vpop.xlane.xlu0 %1866
        %v1868 = vmax.f32 %v1043, %v1045
        %v1869 = vmax.f32 %v1868, %v1492
        %v1870 = vmax.f32 %v1869, %v1494
        %1871 = vmax.xlane.f32.xlu0 %v1870
        %v1872 = vpop.xlane.xlu0 %1871
        %v1873 = vmax.f32 %v1049, %v1051
        %v1874 = vmax.f32 %v1873, %v1498
        %v1875 = vmax.f32 %v1874, %v1500
        %1876 = vmax.xlane.f32.xlu0 %v1875
        %v1877 = vpop.xlane.xlu0 %1876
        %v1878 = vmax.f32 %v1055, %v1057
        %v1879 = vmax.f32 %v1878, %v1504
        %v1880 = vmax.f32 %v1879, %v1506
        %1881 = vmax.xlane.f32.xlu0 %v1880
        %v1882 = vpop.xlane.xlu0 %1881
        %v1883 = vmax.f32 %v1061, %v1063
        %v1884 = vmax.f32 %v1883, %v1510
        %v1885 = vmax.f32 %v1884, %v1512
        %1886 = vmax.xlane.f32.xlu0 %v1885
        %v1887 = vpop.xlane.xlu0 %1886
        %v1888 = vmax.f32 %v1067, %v1069
        %v1889 = vmax.f32 %v1888, %v1516
        %v1890 = vmax.f32 %v1889, %v1518
        %1891 = vmax.xlane.f32.xlu0 %v1890
        %v1892 = vpop.xlane.xlu0 %1891
        %v1893 = vmax.f32 %v1073, %v1075
        %v1894 = vmax.f32 %v1893, %v1522
        %v1895 = vmax.f32 %v1894, %v1524
        %1896 = vmax.xlane.f32.xlu0 %v1895
        %v1897 = vpop.xlane.xlu0 %1896
        %v1898 = vmax.f32 %v1079, %v1081
        %v1899 = vmax.f32 %v1898, %v1528
        %v1900 = vmax.f32 %v1899, %v1530
        %1901 = vmax.xlane.f32.xlu0 %v1900
        %v1902 = vpop.xlane.xlu0 %1901
        %v1903 = vmax.f32 %v1085, %v1087
        %v1904 = vmax.f32 %v1903, %v1534
        %v1905 = vmax.f32 %v1904, %v1536
        %1906 = vmax.xlane.f32.xlu0 %v1905
        %v1907 = vpop.xlane.xlu0 %1906
        %v1908 = vmax.f32 %v1091, %v1093
        %v1909 = vmax.f32 %v1908, %v1540
        %v1910 = vmax.f32 %v1909, %v1542
        %1911 = vmax.xlane.f32.xlu0 %v1910
        %v1912 = vpop.xlane.xlu0 %1911
        %v1913 = vmax.f32 %v1097, %v1099
        %v1914 = vmax.f32 %v1913, %v1546
        %v1915 = vmax.f32 %v1914, %v1548
        %1916 = vmax.xlane.f32.xlu0 %v1915
        %v1917 = vpop.xlane.xlu0 %1916
        %v1918 = vmax.f32 %v1103, %v1105
        %v1919 = vmax.f32 %v1918, %v1552
        %v1920 = vmax.f32 %v1919, %v1554
        %1921 = vmax.xlane.f32.xlu0 %v1920
        %v1922 = vpop.xlane.xlu0 %1921
        %v1923 = vmax.f32 %v1109, %v1111
        %v1924 = vmax.f32 %v1923, %v1558
        %v1925 = vmax.f32 %v1924, %v1560
        %1926 = vmax.xlane.f32.xlu0 %v1925
        %v1927 = vpop.xlane.xlu0 %1926
        %v1928 = vmax.f32 %v1115, %v1117
        %v1929 = vmax.f32 %v1928, %v1564
        %v1930 = vmax.f32 %v1929, %v1566
        %1931 = vmax.xlane.f32.xlu0 %v1930
        %v1932 = vpop.xlane.xlu0 %1931
        %v1933 = vmax.f32 %v1121, %v1123
        %v1934 = vmax.f32 %v1933, %v1570
        %v1935 = vmax.f32 %v1934, %v1572
        %1936 = vmax.xlane.f32.xlu0 %v1935
        %v1937 = vpop.xlane.xlu0 %1936
        %v1938 = vmax.f32 %v1127, %v1129
        %v1939 = vmax.f32 %v1938, %v1576
        %v1940 = vmax.f32 %v1939, %v1578
        %1941 = vmax.xlane.f32.xlu0 %v1940
        %v1942 = vpop.xlane.xlu0 %1941
        %v1943 = vmax.f32 %v1133, %v1135
        %v1944 = vmax.f32 %v1943, %v1582
        %v1945 = vmax.f32 %v1944, %v1584
        %1946 = vmax.xlane.f32.xlu0 %v1945
        %v1947 = vpop.xlane.xlu0 %1946
        %v1948 = vmax.f32 %v1139, %v1141
        %v1949 = vmax.f32 %v1948, %v1588
        %v1950 = vmax.f32 %v1949, %v1590
        %1951 = vmax.xlane.f32.xlu0 %v1950
        %v1952 = vpop.xlane.xlu0 %1951
        %v1953 = vmax.f32 %v1145, %v1147
        %v1954 = vmax.f32 %v1953, %v1594
        %v1955 = vmax.f32 %v1954, %v1596
        %1956 = vmax.xlane.f32.xlu0 %v1955
        %v1957 = vpop.xlane.xlu0 %1956
        %v1958 = vmax.f32 %v1151, %v1153
        %v1959 = vmax.f32 %v1958, %v1600
        %v1960 = vmax.f32 %v1959, %v1602
        %1961 = vmax.xlane.f32.xlu0 %v1960
        %v1962 = vpop.xlane.xlu0 %1961
        %v1963 = vmax.f32 %v1157, %v1159
        %v1964 = vmax.f32 %v1963, %v1606
        %v1965 = vmax.f32 %v1964, %v1608
        %1966 = vmax.xlane.f32.xlu0 %v1965
        %v1967 = vpop.xlane.xlu0 %1966
        %v1968 = vmax.f32 %v1163, %v1165
        %v1969 = vmax.f32 %v1968, %v1612
        %v1970 = vmax.f32 %v1969, %v1614
        %1971 = vmax.xlane.f32.xlu0 %v1970
        %v1972 = vpop.xlane.xlu0 %1971
        %v1973 = vmax.f32 %v1169, %v1171
        %v1974 = vmax.f32 %v1973, %v1618
        %v1975 = vmax.f32 %v1974, %v1620
        %1976 = vmax.xlane.f32.xlu0 %v1975
        %v1977 = vpop.xlane.xlu0 %1976
        %v1978 = vmax.f32 %v1175, %v1177
        %v1979 = vmax.f32 %v1978, %v1624
        %v1980 = vmax.f32 %v1979, %v1626
        %1981 = vmax.xlane.f32.xlu0 %v1980
        %v1982 = vpop.xlane.xlu0 %1981
        %v1983 = vmax.f32 %v1181, %v1183
        %v1984 = vmax.f32 %v1983, %v1630
        %v1985 = vmax.f32 %v1984, %v1632
        %1986 = vmax.xlane.f32.xlu0 %v1985
        %v1987 = vpop.xlane.xlu0 %1986
        %v1988 = vmax.f32 %v1187, %v1189
        %v1989 = vmax.f32 %v1988, %v1636
        %v1990 = vmax.f32 %v1989, %v1638
        %1991 = vmax.xlane.f32.xlu0 %v1990
        %v1992 = vpop.xlane.xlu0 %1991
        %v1993 = vmax.f32 %v1193, %v1195
        %v1994 = vmax.f32 %v1993, %v1642
        %v1995 = vmax.f32 %v1994, %v1644
        %1996 = vmax.xlane.f32.xlu0 %v1995
        %v1997 = vpop.xlane.xlu0 %1996
        %v1998 = vmax.f32 %v1199, %v1201
        %v1999 = vmax.f32 %v1998, %v1648
        %v2000 = vmax.f32 %v1999, %v1650
        %2001 = vmax.xlane.f32.xlu0 %v2000
        %v2002 = vpop.xlane.xlu0 %2001
        %v2003 = vmax.f32 %v1205, %v1207
        %v2004 = vmax.f32 %v2003, %v1654
        %v2005 = vmax.f32 %v2004, %v1656
        %2006 = vmax.xlane.f32.xlu0 %v2005
        %v2007 = vpop.xlane.xlu0 %2006
        %v2008 = vmax.f32 %v1211, %v1213
        %v2009 = vmax.f32 %v2008, %v1660
        %v2010 = vmax.f32 %v2009, %v1662
        %2011 = vmax.xlane.f32.xlu0 %v2010
        %v2012 = vpop.xlane.xlu0 %2011
        %v2013 = vmax.f32 %v1217, %v1219
        %v2014 = vmax.f32 %v2013, %v1666
        %v2015 = vmax.f32 %v2014, %v1668
        %2016 = vmax.xlane.f32.xlu0 %v2015
        %v2017 = vpop.xlane.xlu0 %2016
        %v2018 = vmax.f32 %v1223, %v1225
        %v2019 = vmax.f32 %v2018, %v1672
        %v2020 = vmax.f32 %v2019, %v1674
        %2021 = vmax.xlane.f32.xlu0 %v2020
        %v2022 = vpop.xlane.xlu0 %2021
        %v2023 = vmax.f32 %v1229, %v1231
        %v2024 = vmax.f32 %v2023, %v1678
        %v2025 = vmax.f32 %v2024, %v1680
        %2026 = vmax.xlane.f32.xlu0 %v2025
        %v2027 = vpop.xlane.xlu0 %2026
        %v2028 = vmax.f32 %v1235, %v1237
        %v2029 = vmax.f32 %v2028, %v1684
        %v2030 = vmax.f32 %v2029, %v1686
        %2031 = vmax.xlane.f32.xlu0 %v2030
        %v2032 = vpop.xlane.xlu0 %2031
        %v2033 = vmax.f32 %v1241, %v1243
        %v2034 = vmax.f32 %v2033, %v1690
        %v2035 = vmax.f32 %v2034, %v1692
        %2036 = vmax.xlane.f32.xlu0 %v2035
        %v2037 = vpop.xlane.xlu0 %2036
        %v2038 = vmax.f32 %v1247, %v1249
        %v2039 = vmax.f32 %v2038, %v1696
        %v2040 = vmax.f32 %v2039, %v1698
        %2041 = vmax.xlane.f32.xlu0 %v2040
        %v2042 = vpop.xlane.xlu0 %2041
        %v2043 = vmax.f32 %v1253, %v1255
        %v2044 = vmax.f32 %v2043, %v1702
        %v2045 = vmax.f32 %v2044, %v1704
        %2046 = vmax.xlane.f32.xlu0 %v2045
        %v2047 = vpop.xlane.xlu0 %2046
        %v2048 = vmax.f32 %v1259, %v1261
        %v2049 = vmax.f32 %v2048, %v1708
        %v2050 = vmax.f32 %v2049, %v1710
        %2051 = vmax.xlane.f32.xlu0 %v2050
        %v2052 = vpop.xlane.xlu0 %2051
        %v2053 = vmax.f32 %v1265, %v1267
        %v2054 = vmax.f32 %v2053, %v1714
        %v2055 = vmax.f32 %v2054, %v1716
        %2056 = vmax.xlane.f32.xlu0 %v2055
        %v2057 = vpop.xlane.xlu0 %2056
        %v2058 = vmax.f32 %v1271, %v1273
        %v2059 = vmax.f32 %v2058, %v1720
        %v2060 = vmax.f32 %v2059, %v1722
        %2061 = vmax.xlane.f32.xlu0 %v2060
        %v2062 = vpop.xlane.xlu0 %2061
        %v2063 = vmax.f32 %v1277, %v1279
        %v2064 = vmax.f32 %v2063, %v1726
        %v2065 = vmax.f32 %v2064, %v1728
        %2066 = vmax.xlane.f32.xlu0 %v2065
        %v2067 = vpop.xlane.xlu0 %2066
        %v2068 = vmax.f32 %v1283, %v1285
        %v2069 = vmax.f32 %v2068, %v1732
        %v2070 = vmax.f32 %v2069, %v1734
        %2071 = vmax.xlane.f32.xlu0 %v2070
        %v2072 = vpop.xlane.xlu0 %2071
        %v2073 = vmax.f32 %v1289, %v1291
        %v2074 = vmax.f32 %v2073, %v1738
        %v2075 = vmax.f32 %v2074, %v1740
        %2076 = vmax.xlane.f32.xlu0 %v2075
        %v2077 = vpop.xlane.xlu0 %2076
        %v2078 = vmax.f32 %v1295, %v1297
        %v2079 = vmax.f32 %v2078, %v1744
        %v2080 = vmax.f32 %v2079, %v1746
        %2081 = vmax.xlane.f32.xlu0 %v2080
        %v2082 = vpop.xlane.xlu0 %2081
        %v2083 = vmax.f32 %v1301, %v1303
        %v2084 = vmax.f32 %v2083, %v1750
        %v2085 = vmax.f32 %v2084, %v1752
        %2086 = vmax.xlane.f32.xlu0 %v2085
        %v2087 = vpop.xlane.xlu0 %2086
        %v2088 = vmax.f32 %v1307, %v1309
        %v2089 = vmax.f32 %v2088, %v1756
        %v2090 = vmax.f32 %v2089, %v1758
        %2091 = vmax.xlane.f32.xlu0 %v2090
        %v2092 = vpop.xlane.xlu0 %2091
        %v2093 = vmax.f32 %v1313, %v1315
        %v2094 = vmax.f32 %v2093, %v1762
        %v2095 = vmax.f32 %v2094, %v1764
        %2096 = vmax.xlane.f32.xlu0 %v2095
        %v2097 = vpop.xlane.xlu0 %2096
        %v2098 = vmax.f32 %v1319, %v1321
        %v2099 = vmax.f32 %v2098, %v1768
        %v2100 = vmax.f32 %v2099, %v1770
        %2101 = vmax.xlane.f32.xlu0 %v2100
        %v2102 = vpop.xlane.xlu0 %2101
        %v2103 = vmax.f32 %v1325, %v1327
        %v2104 = vmax.f32 %v2103, %v1774
        %v2105 = vmax.f32 %v2104, %v1776
        %2106 = vmax.xlane.f32.xlu0 %v2105
        %v2107 = vpop.xlane.xlu0 %2106
        %v2108 = vmax.f32 %v1331, %v1333
        %v2109 = vmax.f32 %v2108, %v1780
        %v2110 = vmax.f32 %v2109, %v1782
        %2111 = vmax.xlane.f32.xlu0 %v2110
        %v2112 = vpop.xlane.xlu0 %2111
        %v2113 = vmax.f32 %v1337, %v1339
        %v2114 = vmax.f32 %v2113, %v1786
        %v2115 = vmax.f32 %v2114, %v1788
        %2116 = vmax.xlane.f32.xlu0 %v2115
        %v2117 = vpop.xlane.xlu0 %2116
        %v2118 = vmax.f32 %v1343, %v1345
        %v2119 = vmax.f32 %v2118, %v1792
        %v2120 = vmax.f32 %v2119, %v1794
        %2121 = vmax.xlane.f32.xlu0 %v2120
        %v2122 = vpop.xlane.xlu0 %2121
        %v2123 = vmax.f32 %v1349, %v1351
        %v2124 = vmax.f32 %v2123, %v1798
        %v2125 = vmax.f32 %v2124, %v1800
        %2126 = vmax.xlane.f32.xlu0 %v2125
        %v2127 = vpop.xlane.xlu0 %2126
        %v2128 = vmax.f32 %v1355, %v1357
        %v2129 = vmax.f32 %v2128, %v1804
        %v2130 = vmax.f32 %v2129, %v1806
        %2131 = vmax.xlane.f32.xlu0 %v2130
        %v2132 = vpop.xlane.xlu0 %2131
        %v2133 = vmax.f32 %v1361, %v1363
        %v2134 = vmax.f32 %v2133, %v1810
        %v2135 = vmax.f32 %v2134, %v1812
        %2136 = vmax.xlane.f32.xlu0 %v2135
        %v2137 = vpop.xlane.xlu0 %2136
        %v2138 = vmax.f32 %v1367, %v1369
        %v2139 = vmax.f32 %v2138, %v1816
        %v2140 = vmax.f32 %v2139, %v1818
        %2141 = vmax.xlane.f32.xlu0 %v2140
        %v2142 = vpop.xlane.xlu0 %2141
        %v2143 = vmax.f32 %v1373, %v1375
        %v2144 = vmax.f32 %v2143, %v1822
        %v2145 = vmax.f32 %v2144, %v1824
        %2146 = vmax.xlane.f32.xlu0 %v2145
        %v2147 = vpop.xlane.xlu0 %2146
        %v2148 = vmax.f32 %v1379, %v1381
        %v2149 = vmax.f32 %v2148, %v1828
        %v2150 = vmax.f32 %v2149, %v1830
        %2151 = vmax.xlane.f32.xlu0 %v2150
        %v2152 = vpop.xlane.xlu0 %2151
        %v2153 = vmax.f32 %v1385, %v1387
        %v2154 = vmax.f32 %v2153, %v1834
        %v2155 = vmax.f32 %v2154, %v1836
        %2156 = vmax.xlane.f32.xlu0 %v2155
        %v2157 = vpop.xlane.xlu0 %2156
        %v2158 = vsub.f32 %v1007, %v1842
        %v2159 = vsub.f32 %v1009, %v1842
        %v2160 = vsub.f32 %v1456, %v1842
        %v2161 = vsub.f32 %v1458, %v1842
        %v2162 = vsub.f32 %v1013, %v1847
        %v2163 = vsub.f32 %v1015, %v1847
        %v2164 = vsub.f32 %v1462, %v1847
        %v2165 = vsub.f32 %v1464, %v1847
        %v2166 = vsub.f32 %v1019, %v1852
        %v2167 = vsub.f32 %v1021, %v1852
        %v2168 = vsub.f32 %v1468, %v1852
        %v2169 = vsub.f32 %v1470, %v1852
        %v2170 = vsub.f32 %v1025, %v1857
        %v2171 = vsub.f32 %v1027, %v1857
        %v2172 = vsub.f32 %v1474, %v1857
        %v2173 = vsub.f32 %v1476, %v1857
        %v2174 = vsub.f32 %v1031, %v1862
        %v2175 = vsub.f32 %v1033, %v1862
        %v2176 = vsub.f32 %v1480, %v1862
        %v2177 = vsub.f32 %v1482, %v1862
        %v2178 = vsub.f32 %v1037, %v1867
        %v2179 = vsub.f32 %v1039, %v1867
        %v2180 = vsub.f32 %v1486, %v1867
        %v2181 = vsub.f32 %v1488, %v1867
        %v2182 = vsub.f32 %v1043, %v1872
        %v2183 = vsub.f32 %v1045, %v1872
        %v2184 = vsub.f32 %v1492, %v1872
        %v2185 = vsub.f32 %v1494, %v1872
        %v2186 = vsub.f32 %v1049, %v1877
        %v2187 = vsub.f32 %v1051, %v1877
        %v2188 = vsub.f32 %v1498, %v1877
        %v2189 = vsub.f32 %v1500, %v1877
        %v2190 = vsub.f32 %v1055, %v1882
        %v2191 = vsub.f32 %v1057, %v1882
        %v2192 = vsub.f32 %v1504, %v1882
        %v2193 = vsub.f32 %v1506, %v1882
        %v2194 = vsub.f32 %v1061, %v1887
        %v2195 = vsub.f32 %v1063, %v1887
        %v2196 = vsub.f32 %v1510, %v1887
        %v2197 = vsub.f32 %v1512, %v1887
        %v2198 = vsub.f32 %v1067, %v1892
        %v2199 = vsub.f32 %v1069, %v1892
        %v2200 = vsub.f32 %v1516, %v1892
        %v2201 = vsub.f32 %v1518, %v1892
        %v2202 = vsub.f32 %v1073, %v1897
        %v2203 = vsub.f32 %v1075, %v1897
        %v2204 = vsub.f32 %v1522, %v1897
        %v2205 = vsub.f32 %v1524, %v1897
        %v2206 = vsub.f32 %v1079, %v1902
        %v2207 = vsub.f32 %v1081, %v1902
        %v2208 = vsub.f32 %v1528, %v1902
        %v2209 = vsub.f32 %v1530, %v1902
        %v2210 = vsub.f32 %v1085, %v1907
        %v2211 = vsub.f32 %v1087, %v1907
        %v2212 = vsub.f32 %v1534, %v1907
        %v2213 = vsub.f32 %v1536, %v1907
        %v2214 = vsub.f32 %v1091, %v1912
        %v2215 = vsub.f32 %v1093, %v1912
        %v2216 = vsub.f32 %v1540, %v1912
        %v2217 = vsub.f32 %v1542, %v1912
        %v2218 = vsub.f32 %v1097, %v1917
        %v2219 = vsub.f32 %v1099, %v1917
        %v2220 = vsub.f32 %v1546, %v1917
        %v2221 = vsub.f32 %v1548, %v1917
        %v2222 = vsub.f32 %v1103, %v1922
        %v2223 = vsub.f32 %v1105, %v1922
        %v2224 = vsub.f32 %v1552, %v1922
        %v2225 = vsub.f32 %v1554, %v1922
        %v2226 = vsub.f32 %v1109, %v1927
        %v2227 = vsub.f32 %v1111, %v1927
        %v2228 = vsub.f32 %v1558, %v1927
        %v2229 = vsub.f32 %v1560, %v1927
        %v2230 = vsub.f32 %v1115, %v1932
        %v2231 = vsub.f32 %v1117, %v1932
        %v2232 = vsub.f32 %v1564, %v1932
        %v2233 = vsub.f32 %v1566, %v1932
        %v2234 = vsub.f32 %v1121, %v1937
        %v2235 = vsub.f32 %v1123, %v1937
        %v2236 = vsub.f32 %v1570, %v1937
        %v2237 = vsub.f32 %v1572, %v1937
        %v2238 = vsub.f32 %v1127, %v1942
        %v2239 = vsub.f32 %v1129, %v1942
        %v2240 = vsub.f32 %v1576, %v1942
        %v2241 = vsub.f32 %v1578, %v1942
        %v2242 = vsub.f32 %v1133, %v1947
        %v2243 = vsub.f32 %v1135, %v1947
        %v2244 = vsub.f32 %v1582, %v1947
        %v2245 = vsub.f32 %v1584, %v1947
        %v2246 = vsub.f32 %v1139, %v1952
        %v2247 = vsub.f32 %v1141, %v1952
        %v2248 = vsub.f32 %v1588, %v1952
        %v2249 = vsub.f32 %v1590, %v1952
        %v2250 = vsub.f32 %v1145, %v1957
        %v2251 = vsub.f32 %v1147, %v1957
        %v2252 = vsub.f32 %v1594, %v1957
        %v2253 = vsub.f32 %v1596, %v1957
        %v2254 = vsub.f32 %v1151, %v1962
        %v2255 = vsub.f32 %v1153, %v1962
        %v2256 = vsub.f32 %v1600, %v1962
        %v2257 = vsub.f32 %v1602, %v1962
        %v2258 = vsub.f32 %v1157, %v1967
        %v2259 = vsub.f32 %v1159, %v1967
        %v2260 = vsub.f32 %v1606, %v1967
        %v2261 = vsub.f32 %v1608, %v1967
        %v2262 = vsub.f32 %v1163, %v1972
        %v2263 = vsub.f32 %v1165, %v1972
        %v2264 = vsub.f32 %v1612, %v1972
        %v2265 = vsub.f32 %v1614, %v1972
        %v2266 = vsub.f32 %v1169, %v1977
        %v2267 = vsub.f32 %v1171, %v1977
        %v2268 = vsub.f32 %v1618, %v1977
        %v2269 = vsub.f32 %v1620, %v1977
        %v2270 = vsub.f32 %v1175, %v1982
        %v2271 = vsub.f32 %v1177, %v1982
        %v2272 = vsub.f32 %v1624, %v1982
        %v2273 = vsub.f32 %v1626, %v1982
        %v2274 = vsub.f32 %v1181, %v1987
        %v2275 = vsub.f32 %v1183, %v1987
        %v2276 = vsub.f32 %v1630, %v1987
        %v2277 = vsub.f32 %v1632, %v1987
        %v2278 = vsub.f32 %v1187, %v1992
        %v2279 = vsub.f32 %v1189, %v1992
        %v2280 = vsub.f32 %v1636, %v1992
        %v2281 = vsub.f32 %v1638, %v1992
        %v2282 = vsub.f32 %v1193, %v1997
        %v2283 = vsub.f32 %v1195, %v1997
        %v2284 = vsub.f32 %v1642, %v1997
        %v2285 = vsub.f32 %v1644, %v1997
        %v2286 = vsub.f32 %v1199, %v2002
        %v2287 = vsub.f32 %v1201, %v2002
        %v2288 = vsub.f32 %v1648, %v2002
        %v2289 = vsub.f32 %v1650, %v2002
        %v2290 = vsub.f32 %v1205, %v2007
        %v2291 = vsub.f32 %v1207, %v2007
        %v2292 = vsub.f32 %v1654, %v2007
        %v2293 = vsub.f32 %v1656, %v2007
        %v2294 = vsub.f32 %v1211, %v2012
        %v2295 = vsub.f32 %v1213, %v2012
        %v2296 = vsub.f32 %v1660, %v2012
        %v2297 = vsub.f32 %v1662, %v2012
        %v2298 = vsub.f32 %v1217, %v2017
        %v2299 = vsub.f32 %v1219, %v2017
        %v2300 = vsub.f32 %v1666, %v2017
        %v2301 = vsub.f32 %v1668, %v2017
        %v2302 = vsub.f32 %v1223, %v2022
        %v2303 = vsub.f32 %v1225, %v2022
        %v2304 = vsub.f32 %v1672, %v2022
        %v2305 = vsub.f32 %v1674, %v2022
        %v2306 = vsub.f32 %v1229, %v2027
        %v2307 = vsub.f32 %v1231, %v2027
        %v2308 = vsub.f32 %v1678, %v2027
        %v2309 = vsub.f32 %v1680, %v2027
        %v2310 = vsub.f32 %v1235, %v2032
        %v2311 = vsub.f32 %v1237, %v2032
        %v2312 = vsub.f32 %v1684, %v2032
        %v2313 = vsub.f32 %v1686, %v2032
        %v2314 = vsub.f32 %v1241, %v2037
        %v2315 = vsub.f32 %v1243, %v2037
        %v2316 = vsub.f32 %v1690, %v2037
        %v2317 = vsub.f32 %v1692, %v2037
        %v2318 = vsub.f32 %v1247, %v2042
        %v2319 = vsub.f32 %v1249, %v2042
        %v2320 = vsub.f32 %v1696, %v2042
        %v2321 = vsub.f32 %v1698, %v2042
        %v2322 = vsub.f32 %v1253, %v2047
        %v2323 = vsub.f32 %v1255, %v2047
        %v2324 = vsub.f32 %v1702, %v2047
        %v2325 = vsub.f32 %v1704, %v2047
        %v2326 = vsub.f32 %v1259, %v2052
        %v2327 = vsub.f32 %v1261, %v2052
        %v2328 = vsub.f32 %v1708, %v2052
        %v2329 = vsub.f32 %v1710, %v2052
        %v2330 = vsub.f32 %v1265, %v2057
        %v2331 = vsub.f32 %v1267, %v2057
        %v2332 = vsub.f32 %v1714, %v2057
        %v2333 = vsub.f32 %v1716, %v2057
        %v2334 = vsub.f32 %v1271, %v2062
        %v2335 = vsub.f32 %v1273, %v2062
        %v2336 = vsub.f32 %v1720, %v2062
        %v2337 = vsub.f32 %v1722, %v2062
        %v2338 = vsub.f32 %v1277, %v2067
        %v2339 = vsub.f32 %v1279, %v2067
        %v2340 = vsub.f32 %v1726, %v2067
        %v2341 = vsub.f32 %v1728, %v2067
        %v2342 = vsub.f32 %v1283, %v2072
        %v2343 = vsub.f32 %v1285, %v2072
        %v2344 = vsub.f32 %v1732, %v2072
        %v2345 = vsub.f32 %v1734, %v2072
        %v2346 = vsub.f32 %v1289, %v2077
        %v2347 = vsub.f32 %v1291, %v2077
        %v2348 = vsub.f32 %v1738, %v2077
        %v2349 = vsub.f32 %v1740, %v2077
        %v2350 = vsub.f32 %v1295, %v2082
        %v2351 = vsub.f32 %v1297, %v2082
        %v2352 = vsub.f32 %v1744, %v2082
        %v2353 = vsub.f32 %v1746, %v2082
        %v2354 = vsub.f32 %v1301, %v2087
        %v2355 = vsub.f32 %v1303, %v2087
        %v2356 = vsub.f32 %v1750, %v2087
        %v2357 = vsub.f32 %v1752, %v2087
        %v2358 = vsub.f32 %v1307, %v2092
        %v2359 = vsub.f32 %v1309, %v2092
        %v2360 = vsub.f32 %v1756, %v2092
        %v2361 = vsub.f32 %v1758, %v2092
        %v2362 = vsub.f32 %v1313, %v2097
        %v2363 = vsub.f32 %v1315, %v2097
        %v2364 = vsub.f32 %v1762, %v2097
        %v2365 = vsub.f32 %v1764, %v2097
        %v2366 = vsub.f32 %v1319, %v2102
        %v2367 = vsub.f32 %v1321, %v2102
        %v2368 = vsub.f32 %v1768, %v2102
        %v2369 = vsub.f32 %v1770, %v2102
        %v2370 = vsub.f32 %v1325, %v2107
        %v2371 = vsub.f32 %v1327, %v2107
        %v2372 = vsub.f32 %v1774, %v2107
        %v2373 = vsub.f32 %v1776, %v2107
        %v2374 = vsub.f32 %v1331, %v2112
        %v2375 = vsub.f32 %v1333, %v2112
        %v2376 = vsub.f32 %v1780, %v2112
        %v2377 = vsub.f32 %v1782, %v2112
        %v2378 = vsub.f32 %v1337, %v2117
        %v2379 = vsub.f32 %v1339, %v2117
        %v2380 = vsub.f32 %v1786, %v2117
        %v2381 = vsub.f32 %v1788, %v2117
        %v2382 = vsub.f32 %v1343, %v2122
        %v2383 = vsub.f32 %v1345, %v2122
        %v2384 = vsub.f32 %v1792, %v2122
        %v2385 = vsub.f32 %v1794, %v2122
        %v2386 = vsub.f32 %v1349, %v2127
        %v2387 = vsub.f32 %v1351, %v2127
        %v2388 = vsub.f32 %v1798, %v2127
        %v2389 = vsub.f32 %v1800, %v2127
        %v2390 = vsub.f32 %v1355, %v2132
        %v2391 = vsub.f32 %v1357, %v2132
        %v2392 = vsub.f32 %v1804, %v2132
        %v2393 = vsub.f32 %v1806, %v2132
        %v2394 = vsub.f32 %v1361, %v2137
        %v2395 = vsub.f32 %v1363, %v2137
        %v2396 = vsub.f32 %v1810, %v2137
        %v2397 = vsub.f32 %v1812, %v2137
        %v2398 = vsub.f32 %v1367, %v2142
        %v2399 = vsub.f32 %v1369, %v2142
        %v2400 = vsub.f32 %v1816, %v2142
        %v2401 = vsub.f32 %v1818, %v2142
        %v2402 = vsub.f32 %v1373, %v2147
        %v2403 = vsub.f32 %v1375, %v2147
        %v2404 = vsub.f32 %v1822, %v2147
        %v2405 = vsub.f32 %v1824, %v2147
        %v2406 = vsub.f32 %v1379, %v2152
        %v2407 = vsub.f32 %v1381, %v2152
        %v2408 = vsub.f32 %v1828, %v2152
        %v2409 = vsub.f32 %v1830, %v2152
        %v2410 = vsub.f32 %v1385, %v2157
        %v2411 = vsub.f32 %v1387, %v2157
        %v2412 = vsub.f32 %v1834, %v2157
        %v2413 = vsub.f32 %v1836, %v2157
        %v2414 = vmul.f32 %v2158, 1.442695
        %v2415 = vpow.pop %v2414
        %v2416 = vmul.f32 %v2159, 1.442695
        %v2417 = vpow.pop %v2416
        %v2418 = vmul.f32 %v2160, 1.442695
        %v2419 = vpow.pop %v2418
        %v2420 = vmul.f32 %v2161, 1.442695
        %v2421 = vpow.pop %v2420
        %v2422 = vmul.f32 %v2162, 1.442695
        %v2423 = vpow.pop %v2422
        %v2424 = vmul.f32 %v2163, 1.442695
        %v2425 = vpow.pop %v2424
        %v2426 = vmul.f32 %v2164, 1.442695
        %v2427 = vpow.pop %v2426
        %v2428 = vmul.f32 %v2165, 1.442695
        %v2429 = vpow.pop %v2428
        %v2430 = vmul.f32 %v2166, 1.442695
        %v2431 = vpow.pop %v2430
        %v2432 = vmul.f32 %v2167, 1.442695
        %v2433 = vpow.pop %v2432
        %v2434 = vmul.f32 %v2168, 1.442695
        %v2435 = vpow.pop %v2434
        %v2436 = vmul.f32 %v2169, 1.442695
        %v2437 = vpow.pop %v2436
        %v2438 = vmul.f32 %v2170, 1.442695
        %v2439 = vpow.pop %v2438
        %v2440 = vmul.f32 %v2171, 1.442695
        %v2441 = vpow.pop %v2440
        %v2442 = vmul.f32 %v2172, 1.442695
        %v2443 = vpow.pop %v2442
        %v2444 = vmul.f32 %v2173, 1.442695
        %v2445 = vpow.pop %v2444
        %v2446 = vmul.f32 %v2174, 1.442695
        %v2447 = vpow.pop %v2446
        %v2448 = vmul.f32 %v2175, 1.442695
        %v2449 = vpow.pop %v2448
        %v2450 = vmul.f32 %v2176, 1.442695
        %v2451 = vpow.pop %v2450
        %v2452 = vmul.f32 %v2177, 1.442695
        %v2453 = vpow.pop %v2452
        %v2454 = vmul.f32 %v2178, 1.442695
        %v2455 = vpow.pop %v2454
        %v2456 = vmul.f32 %v2179, 1.442695
        %v2457 = vpow.pop %v2456
        %v2458 = vmul.f32 %v2180, 1.442695
        %v2459 = vpow.pop %v2458
        %v2460 = vmul.f32 %v2181, 1.442695
        %v2461 = vpow.pop %v2460
        %v2462 = vmul.f32 %v2182, 1.442695
        %v2463 = vpow.pop %v2462
        %v2464 = vmul.f32 %v2183, 1.442695
        %v2465 = vpow.pop %v2464
        %v2466 = vmul.f32 %v2184, 1.442695
        %v2467 = vpow.pop %v2466
        %v2468 = vmul.f32 %v2185, 1.442695
        %v2469 = vpow.pop %v2468
        %v2470 = vmul.f32 %v2186, 1.442695
        %v2471 = vpow.pop %v2470
        %v2472 = vmul.f32 %v2187, 1.442695
        %v2473 = vpow.pop %v2472
        %v2474 = vmul.f32 %v2188, 1.442695
        %v2475 = vpow.pop %v2474
        %v2476 = vmul.f32 %v2189, 1.442695
        %v2477 = vpow.pop %v2476
        %v2478 = vmul.f32 %v2190, 1.442695
        %v2479 = vpow.pop %v2478
        %v2480 = vmul.f32 %v2191, 1.442695
        %v2481 = vpow.pop %v2480
        %v2482 = vmul.f32 %v2192, 1.442695
        %v2483 = vpow.pop %v2482
        %v2484 = vmul.f32 %v2193, 1.442695
        %v2485 = vpow.pop %v2484
        %v2486 = vmul.f32 %v2194, 1.442695
        %v2487 = vpow.pop %v2486
        %v2488 = vmul.f32 %v2195, 1.442695
        %v2489 = vpow.pop %v2488
        %v2490 = vmul.f32 %v2196, 1.442695
        %v2491 = vpow.pop %v2490
        %v2492 = vmul.f32 %v2197, 1.442695
        %v2493 = vpow.pop %v2492
        %v2494 = vmul.f32 %v2198, 1.442695
        %v2495 = vpow.pop %v2494
        %v2496 = vmul.f32 %v2199, 1.442695
        %v2497 = vpow.pop %v2496
        %v2498 = vmul.f32 %v2200, 1.442695
        %v2499 = vpow.pop %v2498
        %v2500 = vmul.f32 %v2201, 1.442695
        %v2501 = vpow.pop %v2500
        %v2502 = vmul.f32 %v2202, 1.442695
        %v2503 = vpow.pop %v2502
        %v2504 = vmul.f32 %v2203, 1.442695
        %v2505 = vpow.pop %v2504
        %v2506 = vmul.f32 %v2204, 1.442695
        %v2507 = vpow.pop %v2506
        %v2508 = vmul.f32 %v2205, 1.442695
        %v2509 = vpow.pop %v2508
        %v2510 = vmul.f32 %v2206, 1.442695
        %v2511 = vpow.pop %v2510
        %v2512 = vmul.f32 %v2207, 1.442695
        %v2513 = vpow.pop %v2512
        %v2514 = vmul.f32 %v2208, 1.442695
        %v2515 = vpow.pop %v2514
        %v2516 = vmul.f32 %v2209, 1.442695
        %v2517 = vpow.pop %v2516
        %v2518 = vmul.f32 %v2210, 1.442695
        %v2519 = vpow.pop %v2518
        %v2520 = vmul.f32 %v2211, 1.442695
        %v2521 = vpow.pop %v2520
        %v2522 = vmul.f32 %v2212, 1.442695
        %v2523 = vpow.pop %v2522
        %v2524 = vmul.f32 %v2213, 1.442695
        %v2525 = vpow.pop %v2524
        %v2526 = vmul.f32 %v2214, 1.442695
        %v2527 = vpow.pop %v2526
        %v2528 = vmul.f32 %v2215, 1.442695
        %v2529 = vpow.pop %v2528
        %v2530 = vmul.f32 %v2216, 1.442695
        %v2531 = vpow.pop %v2530
        %v2532 = vmul.f32 %v2217, 1.442695
        %v2533 = vpow.pop %v2532
        %v2534 = vmul.f32 %v2218, 1.442695
        %v2535 = vpow.pop %v2534
        %v2536 = vmul.f32 %v2219, 1.442695
        %v2537 = vpow.pop %v2536
        %v2538 = vmul.f32 %v2220, 1.442695
        %v2539 = vpow.pop %v2538
        %v2540 = vmul.f32 %v2221, 1.442695
        %v2541 = vpow.pop %v2540
        %v2542 = vmul.f32 %v2222, 1.442695
        %v2543 = vpow.pop %v2542
        %v2544 = vmul.f32 %v2223, 1.442695
        %v2545 = vpow.pop %v2544
        %v2546 = vmul.f32 %v2224, 1.442695
        %v2547 = vpow.pop %v2546
        %v2548 = vmul.f32 %v2225, 1.442695
        %v2549 = vpow.pop %v2548
        %v2550 = vmul.f32 %v2226, 1.442695
        %v2551 = vpow.pop %v2550
        %v2552 = vmul.f32 %v2227, 1.442695
        %v2553 = vpow.pop %v2552
        %v2554 = vmul.f32 %v2228, 1.442695
        %v2555 = vpow.pop %v2554
        %v2556 = vmul.f32 %v2229, 1.442695
        %v2557 = vpow.pop %v2556
        %v2558 = vmul.f32 %v2230, 1.442695
        %v2559 = vpow.pop %v2558
        %v2560 = vmul.f32 %v2231, 1.442695
        %v2561 = vpow.pop %v2560
        %v2562 = vmul.f32 %v2232, 1.442695
        %v2563 = vpow.pop %v2562
        %v2564 = vmul.f32 %v2233, 1.442695
        %v2565 = vpow.pop %v2564
        %v2566 = vmul.f32 %v2234, 1.442695
        %v2567 = vpow.pop %v2566
        %v2568 = vmul.f32 %v2235, 1.442695
        %v2569 = vpow.pop %v2568
        %v2570 = vmul.f32 %v2236, 1.442695
        %v2571 = vpow.pop %v2570
        %v2572 = vmul.f32 %v2237, 1.442695
        %v2573 = vpow.pop %v2572
        %v2574 = vmul.f32 %v2238, 1.442695
        %v2575 = vpow.pop %v2574
        %v2576 = vmul.f32 %v2239, 1.442695
        %v2577 = vpow.pop %v2576
        %v2578 = vmul.f32 %v2240, 1.442695
        %v2579 = vpow.pop %v2578
        %v2580 = vmul.f32 %v2241, 1.442695
        %v2581 = vpow.pop %v2580
        %v2582 = vmul.f32 %v2242, 1.442695
        %v2583 = vpow.pop %v2582
        %v2584 = vmul.f32 %v2243, 1.442695
        %v2585 = vpow.pop %v2584
        %v2586 = vmul.f32 %v2244, 1.442695
        %v2587 = vpow.pop %v2586
        %v2588 = vmul.f32 %v2245, 1.442695
        %v2589 = vpow.pop %v2588
        %v2590 = vmul.f32 %v2246, 1.442695
        %v2591 = vpow.pop %v2590
        %v2592 = vmul.f32 %v2247, 1.442695
        %v2593 = vpow.pop %v2592
        %v2594 = vmul.f32 %v2248, 1.442695
        %v2595 = vpow.pop %v2594
        %v2596 = vmul.f32 %v2249, 1.442695
        %v2597 = vpow.pop %v2596
        %v2598 = vmul.f32 %v2250, 1.442695
        %v2599 = vpow.pop %v2598
        %v2600 = vmul.f32 %v2251, 1.442695
        %v2601 = vpow.pop %v2600
        %v2602 = vmul.f32 %v2252, 1.442695
        %v2603 = vpow.pop %v2602
        %v2604 = vmul.f32 %v2253, 1.442695
        %v2605 = vpow.pop %v2604
        %v2606 = vmul.f32 %v2254, 1.442695
        %v2607 = vpow.pop %v2606
        %v2608 = vmul.f32 %v2255, 1.442695
        %v2609 = vpow.pop %v2608
        %v2610 = vmul.f32 %v2256, 1.442695
        %v2611 = vpow.pop %v2610
        %v2612 = vmul.f32 %v2257, 1.442695
        %v2613 = vpow.pop %v2612
        %v2614 = vmul.f32 %v2258, 1.442695
        %v2615 = vpow.pop %v2614
        %v2616 = vmul.f32 %v2259, 1.442695
        %v2617 = vpow.pop %v2616
        %v2618 = vmul.f32 %v2260, 1.442695
        %v2619 = vpow.pop %v2618
        %v2620 = vmul.f32 %v2261, 1.442695
        %v2621 = vpow.pop %v2620
        %v2622 = vmul.f32 %v2262, 1.442695
        %v2623 = vpow.pop %v2622
        %v2624 = vmul.f32 %v2263, 1.442695
        %v2625 = vpow.pop %v2624
        %v2626 = vmul.f32 %v2264, 1.442695
        %v2627 = vpow.pop %v2626
        %v2628 = vmul.f32 %v2265, 1.442695
        %v2629 = vpow.pop %v2628
        %v2630 = vmul.f32 %v2266, 1.442695
        %v2631 = vpow.pop %v2630
        %v2632 = vmul.f32 %v2267, 1.442695
        %v2633 = vpow.pop %v2632
        %v2634 = vmul.f32 %v2268, 1.442695
        %v2635 = vpow.pop %v2634
        %v2636 = vmul.f32 %v2269, 1.442695
        %v2637 = vpow.pop %v2636
        %v2638 = vmul.f32 %v2270, 1.442695
        %v2639 = vpow.pop %v2638
        %v2640 = vmul.f32 %v2271, 1.442695
        %v2641 = vpow.pop %v2640
        %v2642 = vmul.f32 %v2272, 1.442695
        %v2643 = vpow.pop %v2642
        %v2644 = vmul.f32 %v2273, 1.442695
        %v2645 = vpow.pop %v2644
        %v2646 = vmul.f32 %v2274, 1.442695
        %v2647 = vpow.pop %v2646
        %v2648 = vmul.f32 %v2275, 1.442695
        %v2649 = vpow.pop %v2648
        %v2650 = vmul.f32 %v2276, 1.442695
        %v2651 = vpow.pop %v2650
        %v2652 = vmul.f32 %v2277, 1.442695
        %v2653 = vpow.pop %v2652
        %v2654 = vmul.f32 %v2278, 1.442695
        %v2655 = vpow.pop %v2654
        %v2656 = vmul.f32 %v2279, 1.442695
        %v2657 = vpow.pop %v2656
        %v2658 = vmul.f32 %v2280, 1.442695
        %v2659 = vpow.pop %v2658
        %v2660 = vmul.f32 %v2281, 1.442695
        %v2661 = vpow.pop %v2660
        %v2662 = vmul.f32 %v2282, 1.442695
        %v2663 = vpow.pop %v2662
        %v2664 = vmul.f32 %v2283, 1.442695
        %v2665 = vpow.pop %v2664
        %v2666 = vmul.f32 %v2284, 1.442695
        %v2667 = vpow.pop %v2666
        %v2668 = vmul.f32 %v2285, 1.442695
        %v2669 = vpow.pop %v2668
        %v2670 = vmul.f32 %v2286, 1.442695
        %v2671 = vpow.pop %v2670
        %v2672 = vmul.f32 %v2287, 1.442695
        %v2673 = vpow.pop %v2672
        %v2674 = vmul.f32 %v2288, 1.442695
        %v2675 = vpow.pop %v2674
        %v2676 = vmul.f32 %v2289, 1.442695
        %v2677 = vpow.pop %v2676
        %v2678 = vmul.f32 %v2290, 1.442695
        %v2679 = vpow.pop %v2678
        %v2680 = vmul.f32 %v2291, 1.442695
        %v2681 = vpow.pop %v2680
        %v2682 = vmul.f32 %v2292, 1.442695
        %v2683 = vpow.pop %v2682
        %v2684 = vmul.f32 %v2293, 1.442695
        %v2685 = vpow.pop %v2684
        %v2686 = vmul.f32 %v2294, 1.442695
        %v2687 = vpow.pop %v2686
        %v2688 = vmul.f32 %v2295, 1.442695
        %v2689 = vpow.pop %v2688
        %v2690 = vmul.f32 %v2296, 1.442695
        %v2691 = vpow.pop %v2690
        %v2692 = vmul.f32 %v2297, 1.442695
        %v2693 = vpow.pop %v2692
        %v2694 = vmul.f32 %v2298, 1.442695
        %v2695 = vpow.pop %v2694
        %v2696 = vmul.f32 %v2299, 1.442695
        %v2697 = vpow.pop %v2696
        %v2698 = vmul.f32 %v2300, 1.442695
        %v2699 = vpow.pop %v2698
        %v2700 = vmul.f32 %v2301, 1.442695
        %v2701 = vpow.pop %v2700
        %v2702 = vmul.f32 %v2302, 1.442695
        %v2703 = vpow.pop %v2702
        %v2704 = vmul.f32 %v2303, 1.442695
        %v2705 = vpow.pop %v2704
        %v2706 = vmul.f32 %v2304, 1.442695
        %v2707 = vpow.pop %v2706
        %v2708 = vmul.f32 %v2305, 1.442695
        %v2709 = vpow.pop %v2708
        %v2710 = vmul.f32 %v2306, 1.442695
        %v2711 = vpow.pop %v2710
        %v2712 = vmul.f32 %v2307, 1.442695
        %v2713 = vpow.pop %v2712
        %v2714 = vmul.f32 %v2308, 1.442695
        %v2715 = vpow.pop %v2714
        %v2716 = vmul.f32 %v2309, 1.442695
        %v2717 = vpow.pop %v2716
        %v2718 = vmul.f32 %v2310, 1.442695
        %v2719 = vpow.pop %v2718
        %v2720 = vmul.f32 %v2311, 1.442695
        %v2721 = vpow.pop %v2720
        %v2722 = vmul.f32 %v2312, 1.442695
        %v2723 = vpow.pop %v2722
        %v2724 = vmul.f32 %v2313, 1.442695
        %v2725 = vpow.pop %v2724
        %v2726 = vmul.f32 %v2314, 1.442695
        %v2727 = vpow.pop %v2726
        %v2728 = vmul.f32 %v2315, 1.442695
        %v2729 = vpow.pop %v2728
        %v2730 = vmul.f32 %v2316, 1.442695
        %v2731 = vpow.pop %v2730
        %v2732 = vmul.f32 %v2317, 1.442695
        %v2733 = vpow.pop %v2732
        %v2734 = vmul.f32 %v2318, 1.442695
        %v2735 = vpow.pop %v2734
        %v2736 = vmul.f32 %v2319, 1.442695
        %v2737 = vpow.pop %v2736
        %v2738 = vmul.f32 %v2320, 1.442695
        %v2739 = vpow.pop %v2738
        %v2740 = vmul.f32 %v2321, 1.442695
        %v2741 = vpow.pop %v2740
        %v2742 = vmul.f32 %v2322, 1.442695
        %v2743 = vpow.pop %v2742
        %v2744 = vmul.f32 %v2323, 1.442695
        %v2745 = vpow.pop %v2744
        %v2746 = vmul.f32 %v2324, 1.442695
        %v2747 = vpow.pop %v2746
        %v2748 = vmul.f32 %v2325, 1.442695
        %v2749 = vpow.pop %v2748
        %v2750 = vmul.f32 %v2326, 1.442695
        %v2751 = vpow.pop %v2750
        %v2752 = vmul.f32 %v2327, 1.442695
        %v2753 = vpow.pop %v2752
        %v2754 = vmul.f32 %v2328, 1.442695
        %v2755 = vpow.pop %v2754
        %v2756 = vmul.f32 %v2329, 1.442695
        %v2757 = vpow.pop %v2756
        %v2758 = vmul.f32 %v2330, 1.442695
        %v2759 = vpow.pop %v2758
        %v2760 = vmul.f32 %v2331, 1.442695
        %v2761 = vpow.pop %v2760
        %v2762 = vmul.f32 %v2332, 1.442695
        %v2763 = vpow.pop %v2762
        %v2764 = vmul.f32 %v2333, 1.442695
        %v2765 = vpow.pop %v2764
        %v2766 = vmul.f32 %v2334, 1.442695
        %v2767 = vpow.pop %v2766
        %v2768 = vmul.f32 %v2335, 1.442695
        %v2769 = vpow.pop %v2768
        %v2770 = vmul.f32 %v2336, 1.442695
        %v2771 = vpow.pop %v2770
        %v2772 = vmul.f32 %v2337, 1.442695
        %v2773 = vpow.pop %v2772
        %v2774 = vmul.f32 %v2338, 1.442695
        %v2775 = vpow.pop %v2774
        %v2776 = vmul.f32 %v2339, 1.442695
        %v2777 = vpow.pop %v2776
        %v2778 = vmul.f32 %v2340, 1.442695
        %v2779 = vpow.pop %v2778
        %v2780 = vmul.f32 %v2341, 1.442695
        %v2781 = vpow.pop %v2780
        %v2782 = vmul.f32 %v2342, 1.442695
        %v2783 = vpow.pop %v2782
        %v2784 = vmul.f32 %v2343, 1.442695
        %v2785 = vpow.pop %v2784
        %v2786 = vmul.f32 %v2344, 1.442695
        %v2787 = vpow.pop %v2786
        %v2788 = vmul.f32 %v2345, 1.442695
        %v2789 = vpow.pop %v2788
        %v2790 = vmul.f32 %v2346, 1.442695
        %v2791 = vpow.pop %v2790
        %v2792 = vmul.f32 %v2347, 1.442695
        %v2793 = vpow.pop %v2792
        %v2794 = vmul.f32 %v2348, 1.442695
        %v2795 = vpow.pop %v2794
        %v2796 = vmul.f32 %v2349, 1.442695
        %v2797 = vpow.pop %v2796
        %v2798 = vmul.f32 %v2350, 1.442695
        %v2799 = vpow.pop %v2798
        %v2800 = vmul.f32 %v2351, 1.442695
        %v2801 = vpow.pop %v2800
        %v2802 = vmul.f32 %v2352, 1.442695
        %v2803 = vpow.pop %v2802
        %v2804 = vmul.f32 %v2353, 1.442695
        %v2805 = vpow.pop %v2804
        %v2806 = vmul.f32 %v2354, 1.442695
        %v2807 = vpow.pop %v2806
        %v2808 = vmul.f32 %v2355, 1.442695
        %v2809 = vpow.pop %v2808
        %v2810 = vmul.f32 %v2356, 1.442695
        %v2811 = vpow.pop %v2810
        %v2812 = vmul.f32 %v2357, 1.442695
        %v2813 = vpow.pop %v2812
        %v2814 = vmul.f32 %v2358, 1.442695
        %v2815 = vpow.pop %v2814
        %v2816 = vmul.f32 %v2359, 1.442695
        %v2817 = vpow.pop %v2816
        %v2818 = vmul.f32 %v2360, 1.442695
        %v2819 = vpow.pop %v2818
        %v2820 = vmul.f32 %v2361, 1.442695
        %v2821 = vpow.pop %v2820
        %v2822 = vmul.f32 %v2362, 1.442695
        %v2823 = vpow.pop %v2822
        %v2824 = vmul.f32 %v2363, 1.442695
        %v2825 = vpow.pop %v2824
        %v2826 = vmul.f32 %v2364, 1.442695
        %v2827 = vpow.pop %v2826
        %v2828 = vmul.f32 %v2365, 1.442695
        %v2829 = vpow.pop %v2828
        %v2830 = vmul.f32 %v2366, 1.442695
        %v2831 = vpow.pop %v2830
        %v2832 = vmul.f32 %v2367, 1.442695
        %v2833 = vpow.pop %v2832
        %v2834 = vmul.f32 %v2368, 1.442695
        %v2835 = vpow.pop %v2834
        %v2836 = vmul.f32 %v2369, 1.442695
        %v2837 = vpow.pop %v2836
        %v2838 = vmul.f32 %v2370, 1.442695
        %v2839 = vpow.pop %v2838
        %v2840 = vmul.f32 %v2371, 1.442695
        %v2841 = vpow.pop %v2840
        %v2842 = vmul.f32 %v2372, 1.442695
        %v2843 = vpow.pop %v2842
        %v2844 = vmul.f32 %v2373, 1.442695
        %v2845 = vpow.pop %v2844
        %v2846 = vmul.f32 %v2374, 1.442695
        %v2847 = vpow.pop %v2846
        %v2848 = vmul.f32 %v2375, 1.442695
        %v2849 = vpow.pop %v2848
        %v2850 = vmul.f32 %v2376, 1.442695
        %v2851 = vpow.pop %v2850
        %v2852 = vmul.f32 %v2377, 1.442695
        %v2853 = vpow.pop %v2852
        %v2854 = vmul.f32 %v2378, 1.442695
        %v2855 = vpow.pop %v2854
        %v2856 = vmul.f32 %v2379, 1.442695
        %v2857 = vpow.pop %v2856
        %v2858 = vmul.f32 %v2380, 1.442695
        %v2859 = vpow.pop %v2858
        %v2860 = vmul.f32 %v2381, 1.442695
        %v2861 = vpow.pop %v2860
        %v2862 = vmul.f32 %v2382, 1.442695
        %v2863 = vpow.pop %v2862
        %v2864 = vmul.f32 %v2383, 1.442695
        %v2865 = vpow.pop %v2864
        %v2866 = vmul.f32 %v2384, 1.442695
        %v2867 = vpow.pop %v2866
        %v2868 = vmul.f32 %v2385, 1.442695
        %v2869 = vpow.pop %v2868
        %v2870 = vmul.f32 %v2386, 1.442695
        %v2871 = vpow.pop %v2870
        %v2872 = vmul.f32 %v2387, 1.442695
        %v2873 = vpow.pop %v2872
        %v2874 = vmul.f32 %v2388, 1.442695
        %v2875 = vpow.pop %v2874
        %v2876 = vmul.f32 %v2389, 1.442695
        %v2877 = vpow.pop %v2876
        %v2878 = vmul.f32 %v2390, 1.442695
        %v2879 = vpow.pop %v2878
        %v2880 = vmul.f32 %v2391, 1.442695
        %v2881 = vpow.pop %v2880
        %v2882 = vmul.f32 %v2392, 1.442695
        %v2883 = vpow.pop %v2882
        %v2884 = vmul.f32 %v2393, 1.442695
        %v2885 = vpow.pop %v2884
        %v2886 = vmul.f32 %v2394, 1.442695
        %v2887 = vpow.pop %v2886
        %v2888 = vmul.f32 %v2395, 1.442695
        %v2889 = vpow.pop %v2888
        %v2890 = vmul.f32 %v2396, 1.442695
        %v2891 = vpow.pop %v2890
        %v2892 = vmul.f32 %v2397, 1.442695
        %v2893 = vpow.pop %v2892
        %v2894 = vmul.f32 %v2398, 1.442695
        %v2895 = vpow.pop %v2894
        %v2896 = vmul.f32 %v2399, 1.442695
        %v2897 = vpow.pop %v2896
        %v2898 = vmul.f32 %v2400, 1.442695
        %v2899 = vpow.pop %v2898
        %v2900 = vmul.f32 %v2401, 1.442695
        %v2901 = vpow.pop %v2900
        %v2902 = vmul.f32 %v2402, 1.442695
        %v2903 = vpow.pop %v2902
        %v2904 = vmul.f32 %v2403, 1.442695
        %v2905 = vpow.pop %v2904
        %v2906 = vmul.f32 %v2404, 1.442695
        %v2907 = vpow.pop %v2906
        %v2908 = vmul.f32 %v2405, 1.442695
        %v2909 = vpow.pop %v2908
        %v2910 = vmul.f32 %v2406, 1.442695
        %v2911 = vpow.pop %v2910
        %v2912 = vmul.f32 %v2407, 1.442695
        %v2913 = vpow.pop %v2912
        %v2914 = vmul.f32 %v2408, 1.442695
        %v2915 = vpow.pop %v2914
        %v2916 = vmul.f32 %v2409, 1.442695
        %v2917 = vpow.pop %v2916
        %v2918 = vmul.f32 %v2410, 1.442695
        %v2919 = vpow.pop %v2918
        %v2920 = vmul.f32 %v2411, 1.442695
        %v2921 = vpow.pop %v2920
        %v2922 = vmul.f32 %v2412, 1.442695
        %v2923 = vpow.pop %v2922
        %v2924 = vmul.f32 %v2413, 1.442695
        %v2925 = vpow.pop %v2924
        %2926 = vmatprep.subr.mxu0 %v2537
        %2927 = vmatpush1.xpose.msra.mxu0 %v2535
        %2928 = vmatprep.subr.mxu0 %v2529
        %2929 = vmatpush1.xpose.msra.mxu0 %v2527
        %2930 = vmatprep.subr.mxu0 %v2521
        %2931 = vmatpush1.xpose.msra.mxu0 %v2519
        %2932 = vmatprep.subr.mxu0 %v2513
        %2933 = vmatpush1.xpose.msra.mxu0 %v2511
        %2934 = vmatprep.subr.mxu0 %v2505
        %2935 = vmatpush1.xpose.msra.mxu0 %v2503
        %2936 = vmatprep.subr.mxu0 %v2497
        %2937 = vmatpush1.xpose.msra.mxu0 %v2495
        %2938 = vmatprep.subr.mxu0 %v2489
        %2939 = vmatpush1.xpose.msra.mxu0 %v2487
        %2940 = vmatprep.subr.mxu0 %v2481
        %2941 = vmatpush1.xpose.msra.mxu0 %v2479
        %2942 = vmatprep.subr.mxu0 %v2473
        %2943 = vmatpush1.xpose.msra.mxu0 %v2471
        %2944 = vmatprep.subr.mxu0 %v2465
        %2945 = vmatpush1.xpose.msra.mxu0 %v2463
        %2946 = vmatprep.subr.mxu0 %v2457
        %2947 = vmatpush1.xpose.msra.mxu0 %v2455
        %2948 = vmatprep.subr.mxu0 %v2449
        %2949 = vmatpush1.xpose.msra.mxu0 %v2447
        %2950 = vmatprep.subr.mxu0 %v2441
        %2951 = vmatpush1.xpose.msra.mxu0 %v2439
        %2952 = vmatprep.subr.mxu0 %v2433
        %2953 = vmatpush1.xpose.msra.mxu0 %v2431
        %2954 = vmatprep.subr.mxu0 %v2425
        %2955 = vmatpush1.xpose.msra.mxu0 %v2423
        %2956 = vmatprep.subr.mxu0 %v2417
        %2957 = vmatpush1.xpose.msra.mxu0 %v2415
        %2958 = vmatprep.subr.mxu0 %v2665
        %2959 = vmatpush2.xpose.msra.mxu0 %v2663
        %2960 = vmatprep.subr.mxu0 %v2657
        %2961 = vmatpush2.xpose.msra.mxu0 %v2655
        %2962 = vmatprep.subr.mxu0 %v2649
        %2963 = vmatpush2.xpose.msra.mxu0 %v2647
        %2964 = vmatprep.subr.mxu0 %v2641
        %2965 = vmatpush2.xpose.msra.mxu0 %v2639
        %2966 = vmatprep.subr.mxu0 %v2633
        %2967 = vmatpush2.xpose.msra.mxu0 %v2631
        %2968 = vmatprep.subr.mxu0 %v2625
        %2969 = vmatpush2.xpose.msra.mxu0 %v2623
        %2970 = vmatprep.subr.mxu0 %v2617
        %2971 = vmatpush2.xpose.msra.mxu0 %v2615
        %2972 = vmatprep.subr.mxu0 %v2609
        %2973 = vmatpush2.xpose.msra.mxu0 %v2607
        %2974 = vmatprep.subr.mxu0 %v2601
        %2975 = vmatpush2.xpose.msra.mxu0 %v2599
        %2976 = vmatprep.subr.mxu0 %v2593
        %2977 = vmatpush2.xpose.msra.mxu0 %v2591
        %2978 = vmatprep.subr.mxu0 %v2585
        %2979 = vmatpush2.xpose.msra.mxu0 %v2583
        %2980 = vmatprep.subr.mxu0 %v2577
        %2981 = vmatpush2.xpose.msra.mxu0 %v2575
        %2982 = vmatprep.subr.mxu0 %v2569
        %2983 = vmatpush2.xpose.msra.mxu0 %v2567
        %2984 = vmatprep.subr.mxu0 %v2561
        %2985 = vmatpush2.xpose.msra.mxu0 %v2559
        %2986 = vmatprep.subr.mxu0 %v2553
        %2987 = vmatpush2.xpose.msra.mxu0 %v2551
        %2988 = vmatprep.subr.mxu0 %v2545
        %2989 = vmatpush2.xpose.msra.mxu0 %v2543
        %2990 = vmatprep.mubr.f32.mxu0 1.0
        %2991 = vmatmul.mubr.f32.gmra.mxu0 1.0
        %v2992 = vpop.f32.mrf.mxu0
        %v2993 = vadd.f32 0.0, %v2992
        %v2994 = vpop.f32.mrf.mxu0
        %v2995 = vadd.f32 0.0, %v2994
        %2996 = vdwg.mxu0
        %2997 = vmatprep.subr.mxu0 %v2541
        %2998 = vmatpush1.xpose.msra.mxu0 %v2539
        %2999 = vmatprep.subr.mxu0 %v2533
        %3000 = vmatpush1.xpose.msra.mxu0 %v2531
        %3001 = vmatprep.subr.mxu0 %v2525
        %3002 = vmatpush1.xpose.msra.mxu0 %v2523
        %3003 = vmatprep.subr.mxu0 %v2517
        %3004 = vmatpush1.xpose.msra.mxu0 %v2515
        %3005 = vmatprep.subr.mxu0 %v2509
        %3006 = vmatpush1.xpose.msra.mxu0 %v2507
        %3007 = vmatprep.subr.mxu0 %v2501
        %3008 = vmatpush1.xpose.msra.mxu0 %v2499
        %3009 = vmatprep.subr.mxu0 %v2493
        %3010 = vmatpush1.xpose.msra.mxu0 %v2491
        %3011 = vmatprep.subr.mxu0 %v2485
        %3012 = vmatpush1.xpose.msra.mxu0 %v2483
        %3013 = vmatprep.subr.mxu0 %v2477
        %3014 = vmatpush1.xpose.msra.mxu0 %v2475
        %3015 = vmatprep.subr.mxu0 %v2469
        %3016 = vmatpush1.xpose.msra.mxu0 %v2467
        %3017 = vmatprep.subr.mxu0 %v2461
        %3018 = vmatpush1.xpose.msra.mxu0 %v2459
        %3019 = vmatprep.subr.mxu0 %v2453
        %3020 = vmatpush1.xpose.msra.mxu0 %v2451
        %3021 = vmatprep.subr.mxu0 %v2445
        %3022 = vmatpush1.xpose.msra.mxu0 %v2443
        %3023 = vmatprep.subr.mxu0 %v2437
        %3024 = vmatpush1.xpose.msra.mxu0 %v2435
        %3025 = vmatprep.subr.mxu0 %v2429
        %3026 = vmatpush1.xpose.msra.mxu0 %v2427
        %3027 = vmatprep.subr.mxu0 %v2421
        %3028 = vmatpush1.xpose.msra.mxu0 %v2419
        %3029 = vmatprep.subr.mxu0 %v2669
        %3030 = vmatpush2.xpose.msra.mxu0 %v2667
        %3031 = vmatprep.subr.mxu0 %v2661
        %3032 = vmatpush2.xpose.msra.mxu0 %v2659
        %3033 = vmatprep.subr.mxu0 %v2653
        %3034 = vmatpush2.xpose.msra.mxu0 %v2651
        %3035 = vmatprep.subr.mxu0 %v2645
        %3036 = vmatpush2.xpose.msra.mxu0 %v2643
        %3037 = vmatprep.subr.mxu0 %v2637
        %3038 = vmatpush2.xpose.msra.mxu0 %v2635
        %3039 = vmatprep.subr.mxu0 %v2629
        %3040 = vmatpush2.xpose.msra.mxu0 %v2627
        %3041 = vmatprep.subr.mxu0 %v2621
        %3042 = vmatpush2.xpose.msra.mxu0 %v2619
        %3043 = vmatprep.subr.mxu0 %v2613
        %3044 = vmatpush2.xpose.msra.mxu0 %v2611
        %3045 = vmatprep.subr.mxu0 %v2605
        %3046 = vmatpush2.xpose.msra.mxu0 %v2603
        %3047 = vmatprep.subr.mxu0 %v2597
        %3048 = vmatpush2.xpose.msra.mxu0 %v2595
        %3049 = vmatprep.subr.mxu0 %v2589
        %3050 = vmatpush2.xpose.msra.mxu0 %v2587
        %3051 = vmatprep.subr.mxu0 %v2581
        %3052 = vmatpush2.xpose.msra.mxu0 %v2579
        %3053 = vmatprep.subr.mxu0 %v2573
        %3054 = vmatpush2.xpose.msra.mxu0 %v2571
        %3055 = vmatprep.subr.mxu0 %v2565
        %3056 = vmatpush2.xpose.msra.mxu0 %v2563
        %3057 = vmatprep.subr.mxu0 %v2557
        %3058 = vmatpush2.xpose.msra.mxu0 %v2555
        %3059 = vmatprep.subr.mxu0 %v2549
        %3060 = vmatpush2.xpose.msra.mxu0 %v2547
        %3061 = vmatprep.mubr.f32.mxu0 1.0
        %3062 = vmatmul.mubr.f32.gmra.mxu0 1.0
        %v3063 = vpop.f32.mrf.mxu0
        %v3064 = vadd.f32 %v2993, %v3063
        %v3065 = vpop.f32.mrf.mxu0
        %v3066 = vadd.f32 %v2995, %v3065
        %3067 = vdwg.mxu0
        %3068 = vmatprep.subr.mxu0 %v2793
        %3069 = vmatpush1.xpose.msra.mxu0 %v2791
        %3070 = vmatprep.subr.mxu0 %v2785
        %3071 = vmatpush1.xpose.msra.mxu0 %v2783
        %3072 = vmatprep.subr.mxu0 %v2777
        %3073 = vmatpush1.xpose.msra.mxu0 %v2775
        %3074 = vmatprep.subr.mxu0 %v2769
        %3075 = vmatpush1.xpose.msra.mxu0 %v2767
        %3076 = vmatprep.subr.mxu0 %v2761
        %3077 = vmatpush1.xpose.msra.mxu0 %v2759
        %3078 = vmatprep.subr.mxu0 %v2753
        %3079 = vmatpush1.xpose.msra.mxu0 %v2751
        %3080 = vmatprep.subr.mxu0 %v2745
        %3081 = vmatpush1.xpose.msra.mxu0 %v2743
        %3082 = vmatprep.subr.mxu0 %v2737
        %3083 = vmatpush1.xpose.msra.mxu0 %v2735
        %3084 = vmatprep.subr.mxu0 %v2729
        %3085 = vmatpush1.xpose.msra.mxu0 %v2727
        %3086 = vmatprep.subr.mxu0 %v2721
        %3087 = vmatpush1.xpose.msra.mxu0 %v2719
        %3088 = vmatprep.subr.mxu0 %v2713
        %3089 = vmatpush1.xpose.msra.mxu0 %v2711
        %3090 = vmatprep.subr.mxu0 %v2705
        %3091 = vmatpush1.xpose.msra.mxu0 %v2703
        %3092 = vmatprep.subr.mxu0 %v2697
        %3093 = vmatpush1.xpose.msra.mxu0 %v2695
        %3094 = vmatprep.subr.mxu0 %v2689
        %3095 = vmatpush1.xpose.msra.mxu0 %v2687
        %3096 = vmatprep.subr.mxu0 %v2681
        %3097 = vmatpush1.xpose.msra.mxu0 %v2679
        %3098 = vmatprep.subr.mxu0 %v2673
        %3099 = vmatpush1.xpose.msra.mxu0 %v2671
        %3100 = vmatprep.subr.mxu0 %v2921
        %3101 = vmatpush2.xpose.msra.mxu0 %v2919
        %3102 = vmatprep.subr.mxu0 %v2913
        %3103 = vmatpush2.xpose.msra.mxu0 %v2911
        %3104 = vmatprep.subr.mxu0 %v2905
        %3105 = vmatpush2.xpose.msra.mxu0 %v2903
        %3106 = vmatprep.subr.mxu0 %v2897
        %3107 = vmatpush2.xpose.msra.mxu0 %v2895
        %3108 = vmatprep.subr.mxu0 %v2889
        %3109 = vmatpush2.xpose.msra.mxu0 %v2887
        %3110 = vmatprep.subr.mxu0 %v2881
        %3111 = vmatpush2.xpose.msra.mxu0 %v2879
        %3112 = vmatprep.subr.mxu0 %v2873
        %3113 = vmatpush2.xpose.msra.mxu0 %v2871
        %3114 = vmatprep.subr.mxu0 %v2865
        %3115 = vmatpush2.xpose.msra.mxu0 %v2863
        %3116 = vmatprep.subr.mxu0 %v2857
        %3117 = vmatpush2.xpose.msra.mxu0 %v2855
        %3118 = vmatprep.subr.mxu0 %v2849
        %3119 = vmatpush2.xpose.msra.mxu0 %v2847
        %3120 = vmatprep.subr.mxu0 %v2841
        %3121 = vmatpush2.xpose.msra.mxu0 %v2839
        %3122 = vmatprep.subr.mxu0 %v2833
        %3123 = vmatpush2.xpose.msra.mxu0 %v2831
        %3124 = vmatprep.subr.mxu0 %v2825
        %3125 = vmatpush2.xpose.msra.mxu0 %v2823
        %3126 = vmatprep.subr.mxu0 %v2817
        %3127 = vmatpush2.xpose.msra.mxu0 %v2815
        %3128 = vmatprep.subr.mxu0 %v2809
        %3129 = vmatpush2.xpose.msra.mxu0 %v2807
        %3130 = vmatprep.subr.mxu0 %v2801
        %3131 = vmatpush2.xpose.msra.mxu0 %v2799
        %3132 = vmatprep.mubr.f32.mxu0 1.0
        %3133 = vmatmul.mubr.f32.gmra.mxu0 1.0
        %v3134 = vpop.f32.mrf.mxu0
        %v3135 = vadd.f32 0.0, %v3134
        %v3136 = vpop.f32.mrf.mxu0
        %v3137 = vadd.f32 0.0, %v3136
        %3138 = vdwg.mxu0
        %3139 = vmatprep.subr.mxu0 %v2797
        %3140 = vmatpush1.xpose.msra.mxu0 %v2795
        %3141 = vmatprep.subr.mxu0 %v2789
        %3142 = vmatpush1.xpose.msra.mxu0 %v2787
        %3143 = vmatprep.subr.mxu0 %v2781
        %3144 = vmatpush1.xpose.msra.mxu0 %v2779
        %3145 = vmatprep.subr.mxu0 %v2773
        %3146 = vmatpush1.xpose.msra.mxu0 %v2771
        %3147 = vmatprep.subr.mxu0 %v2765
        %3148 = vmatpush1.xpose.msra.mxu0 %v2763
        %3149 = vmatprep.subr.mxu0 %v2757
        %3150 = vmatpush1.xpose.msra.mxu0 %v2755
        %3151 = vmatprep.subr.mxu0 %v2749
        %3152 = vmatpush1.xpose.msra.mxu0 %v2747
        %3153 = vmatprep.subr.mxu0 %v2741
        %3154 = vmatpush1.xpose.msra.mxu0 %v2739
        %3155 = vmatprep.subr.mxu0 %v2733
        %3156 = vmatpush1.xpose.msra.mxu0 %v2731
        %3157 = vmatprep.subr.mxu0 %v2725
        %3158 = vmatpush1.xpose.msra.mxu0 %v2723
        %3159 = vmatprep.subr.mxu0 %v2717
        %3160 = vmatpush1.xpose.msra.mxu0 %v2715
        %3161 = vmatprep.subr.mxu0 %v2709
        %3162 = vmatpush1.xpose.msra.mxu0 %v2707
        %3163 = vmatprep.subr.mxu0 %v2701
        %3164 = vmatpush1.xpose.msra.mxu0 %v2699
        %3165 = vmatprep.subr.mxu0 %v2693
        %3166 = vmatpush1.xpose.msra.mxu0 %v2691
        %3167 = vmatprep.subr.mxu0 %v2685
        %3168 = vmatpush1.xpose.msra.mxu0 %v2683
        %3169 = vmatprep.subr.mxu0 %v2677
        %3170 = vmatpush1.xpose.msra.mxu0 %v2675
        %3171 = vmatprep.subr.mxu0 %v2925
        %3172 = vmatpush2.xpose.msra.mxu0 %v2923
        %3173 = vmatprep.subr.mxu0 %v2917
        %3174 = vmatpush2.xpose.msra.mxu0 %v2915
        %3175 = vmatprep.subr.mxu0 %v2909
        %3176 = vmatpush2.xpose.msra.mxu0 %v2907
        %3177 = vmatprep.subr.mxu0 %v2901
        %3178 = vmatpush2.xpose.msra.mxu0 %v2899
        %3179 = vmatprep.subr.mxu0 %v2893
        %3180 = vmatpush2.xpose.msra.mxu0 %v2891
        %3181 = vmatprep.subr.mxu0 %v2885
        %3182 = vmatpush2.xpose.msra.mxu0 %v2883
        %3183 = vmatprep.subr.mxu0 %v2877
        %3184 = vmatpush2.xpose.msra.mxu0 %v2875
        %3185 = vmatprep.subr.mxu0 %v2869
        %3186 = vmatpush2.xpose.msra.mxu0 %v2867
        %3187 = vmatprep.subr.mxu0 %v2861
        %3188 = vmatpush2.xpose.msra.mxu0 %v2859
        %3189 = vmatprep.subr.mxu0 %v2853
        %3190 = vmatpush2.xpose.msra.mxu0 %v2851
        %3191 = vmatprep.subr.mxu0 %v2845
        %3192 = vmatpush2.xpose.msra.mxu0 %v2843
        %3193 = vmatprep.subr.mxu0 %v2837
        %3194 = vmatpush2.xpose.msra.mxu0 %v2835
        %3195 = vmatprep.subr.mxu0 %v2829
        %3196 = vmatpush2.xpose.msra.mxu0 %v2827
        %3197 = vmatprep.subr.mxu0 %v2821
        %3198 = vmatpush2.xpose.msra.mxu0 %v2819
        %3199 = vmatprep.subr.mxu0 %v2813
        %3200 = vmatpush2.xpose.msra.mxu0 %v2811
        %3201 = vmatprep.subr.mxu0 %v2805
        %3202 = vmatpush2.xpose.msra.mxu0 %v2803
        %3203 = vmatprep.mubr.f32.mxu0 1.0
        %3204 = vmatmul.mubr.f32.gmra.mxu0 1.0
        %v3205 = vpop.f32.mrf.mxu0
        %v3206 = vadd.f32 %v3135, %v3205
        %v3207 = vpop.f32.mrf.mxu0
        %v3208 = vadd.f32 %v3137, %v3207
        %3209 = vdwg.mxu0
        %3210 = vmatprep.subr.mxu0 %v2537
        %3211 = vmatpush1.xpose.msra.mxu0 %v2535
        %3212 = vmatprep.subr.mxu0 %v2529
        %3213 = vmatpush1.xpose.msra.mxu0 %v2527
        %3214 = vmatprep.subr.mxu0 %v2521
        %3215 = vmatpush1.xpose.msra.mxu0 %v2519
        %3216 = vmatprep.subr.mxu0 %v2513
        %3217 = vmatpush1.xpose.msra.mxu0 %v2511
        %3218 = vmatprep.subr.mxu0 %v2505
        %3219 = vmatpush1.xpose.msra.mxu0 %v2503
        %3220 = vmatprep.subr.mxu0 %v2497
        %3221 = vmatpush1.xpose.msra.mxu0 %v2495
        %3222 = vmatprep.subr.mxu0 %v2489
        %3223 = vmatpush1.xpose.msra.mxu0 %v2487
        %3224 = vmatprep.subr.mxu0 %v2481
        %3225 = vmatpush1.xpose.msra.mxu0 %v2479
        %3226 = vmatprep.subr.mxu0 %v2473
        %3227 = vmatpush1.xpose.msra.mxu0 %v2471
        %3228 = vmatprep.subr.mxu0 %v2465
        %3229 = vmatpush1.xpose.msra.mxu0 %v2463
        %3230 = vmatprep.subr.mxu0 %v2457
        %3231 = vmatpush1.xpose.msra.mxu0 %v2455
        %3232 = vmatprep.subr.mxu0 %v2449
        %3233 = vmatpush1.xpose.msra.mxu0 %v2447
        %3234 = vmatprep.subr.mxu0 %v2441
        %3235 = vmatpush1.xpose.msra.mxu0 %v2439
        %3236 = vmatprep.subr.mxu0 %v2433
        %3237 = vmatpush1.xpose.msra.mxu0 %v2431
        %3238 = vmatprep.subr.mxu0 %v2425
        %3239 = vmatpush1.xpose.msra.mxu0 %v2423
        %3240 = vmatprep.subr.mxu0 %v2417
        %3241 = vmatpush1.xpose.msra.mxu0 %v2415
        %3242 = vmatprep.subr.mxu0 %v2665
        %3243 = vmatpush2.xpose.msra.mxu0 %v2663
        %3244 = vmatprep.subr.mxu0 %v2657
        %3245 = vmatpush2.xpose.msra.mxu0 %v2655
        %3246 = vmatprep.subr.mxu0 %v2649
        %3247 = vmatpush2.xpose.msra.mxu0 %v2647
        %3248 = vmatprep.subr.mxu0 %v2641
        %3249 = vmatpush2.xpose.msra.mxu0 %v2639
        %3250 = vmatprep.subr.mxu0 %v2633
        %3251 = vmatpush2.xpose.msra.mxu0 %v2631
        %3252 = vmatprep.subr.mxu0 %v2625
        %3253 = vmatpush2.xpose.msra.mxu0 %v2623
        %3254 = vmatprep.subr.mxu0 %v2617
        %3255 = vmatpush2.xpose.msra.mxu0 %v2615
        %3256 = vmatprep.subr.mxu0 %v2609
        %3257 = vmatpush2.xpose.msra.mxu0 %v2607
        %3258 = vmatprep.subr.mxu0 %v2601
        %3259 = vmatpush2.xpose.msra.mxu0 %v2599
        %3260 = vmatprep.subr.mxu0 %v2593
        %3261 = vmatpush2.xpose.msra.mxu0 %v2591
        %3262 = vmatprep.subr.mxu0 %v2585
        %3263 = vmatpush2.xpose.msra.mxu0 %v2583
        %3264 = vmatprep.subr.mxu0 %v2577
        %3265 = vmatpush2.xpose.msra.mxu0 %v2575
        %3266 = vmatprep.subr.mxu0 %v2569
        %3267 = vmatpush2.xpose.msra.mxu0 %v2567
        %3268 = vmatprep.subr.mxu0 %v2561
        %3269 = vmatpush2.xpose.msra.mxu0 %v2559
        %3270 = vmatprep.subr.mxu0 %v2553
        %3271 = vmatpush2.xpose.msra.mxu0 %v2551
        %3272 = vmatprep.subr.mxu0 %v2545
        %3273 = vmatpush2.xpose.msra.mxu0 %v2543
        %3274 = vmatprep.mubr.f32.mxu0 %v388
        %3275 = vmatmul.mubr.f32.gmra.mxu0 %v386
        %v3276 = vpop.f32.mrf.mxu0
        %v3277 = vadd.f32 0.0, %v3276
        %v3278 = vpop.f32.mrf.mxu0
        %v3279 = vadd.f32 0.0, %v3278
        %3280 = vdwg.mxu0
        %3281 = vmatprep.subr.mxu0 %v2541
        %3282 = vmatpush1.xpose.msra.mxu0 %v2539
        %3283 = vmatprep.subr.mxu0 %v2533
        %3284 = vmatpush1.xpose.msra.mxu0 %v2531
        %3285 = vmatprep.subr.mxu0 %v2525
        %3286 = vmatpush1.xpose.msra.mxu0 %v2523
        %3287 = vmatprep.subr.mxu0 %v2517
        %3288 = vmatpush1.xpose.msra.mxu0 %v2515
        %3289 = vmatprep.subr.mxu0 %v2509
        %3290 = vmatpush1.xpose.msra.mxu0 %v2507
        %3291 = vmatprep.subr.mxu0 %v2501
        %3292 = vmatpush1.xpose.msra.mxu0 %v2499
        %3293 = vmatprep.subr.mxu0 %v2493
        %3294 = vmatpush1.xpose.msra.mxu0 %v2491
        %3295 = vmatprep.subr.mxu0 %v2485
        %3296 = vmatpush1.xpose.msra.mxu0 %v2483
        %3297 = vmatprep.subr.mxu0 %v2477
        %3298 = vmatpush1.xpose.msra.mxu0 %v2475
        %3299 = vmatprep.subr.mxu0 %v2469
        %3300 = vmatpush1.xpose.msra.mxu0 %v2467
        %3301 = vmatprep.subr.mxu0 %v2461
        %3302 = vmatpush1.xpose.msra.mxu0 %v2459
        %3303 = vmatprep.subr.mxu0 %v2453
        %3304 = vmatpush1.xpose.msra.mxu0 %v2451
        %3305 = vmatprep.subr.mxu0 %v2445
        %3306 = vmatpush1.xpose.msra.mxu0 %v2443
        %3307 = vmatprep.subr.mxu0 %v2437
        %3308 = vmatpush1.xpose.msra.mxu0 %v2435
        %3309 = vmatprep.subr.mxu0 %v2429
        %3310 = vmatpush1.xpose.msra.mxu0 %v2427
        %3311 = vmatprep.subr.mxu0 %v2421
        %3312 = vmatpush1.xpose.msra.mxu0 %v2419
        %3313 = vmatprep.subr.mxu0 %v2669
        %3314 = vmatpush2.xpose.msra.mxu0 %v2667
        %3315 = vmatprep.subr.mxu0 %v2661
        %3316 = vmatpush2.xpose.msra.mxu0 %v2659
        %3317 = vmatprep.subr.mxu0 %v2653
        %3318 = vmatpush2.xpose.msra.mxu0 %v2651
        %3319 = vmatprep.subr.mxu0 %v2645
        %3320 = vmatpush2.xpose.msra.mxu0 %v2643
        %3321 = vmatprep.subr.mxu0 %v2637
        %3322 = vmatpush2.xpose.msra.mxu0 %v2635
        %3323 = vmatprep.subr.mxu0 %v2629
        %3324 = vmatpush2.xpose.msra.mxu0 %v2627
        %3325 = vmatprep.subr.mxu0 %v2621
        %3326 = vmatpush2.xpose.msra.mxu0 %v2619
        %3327 = vmatprep.subr.mxu0 %v2613
        %3328 = vmatpush2.xpose.msra.mxu0 %v2611
        %3329 = vmatprep.subr.mxu0 %v2605
        %3330 = vmatpush2.xpose.msra.mxu0 %v2603
        %3331 = vmatprep.subr.mxu0 %v2597
        %3332 = vmatpush2.xpose.msra.mxu0 %v2595
        %3333 = vmatprep.subr.mxu0 %v2589
        %3334 = vmatpush2.xpose.msra.mxu0 %v2587
        %3335 = vmatprep.subr.mxu0 %v2581
        %3336 = vmatpush2.xpose.msra.mxu0 %v2579
        %3337 = vmatprep.subr.mxu0 %v2573
        %3338 = vmatpush2.xpose.msra.mxu0 %v2571
        %3339 = vmatprep.subr.mxu0 %v2565
        %3340 = vmatpush2.xpose.msra.mxu0 %v2563
        %3341 = vmatprep.subr.mxu0 %v2557
        %3342 = vmatpush2.xpose.msra.mxu0 %v2555
        %3343 = vmatprep.subr.mxu0 %v2549
        %3344 = vmatpush2.xpose.msra.mxu0 %v2547
        %3345 = vmatprep.mubr.f32.mxu0 %v465
        %3346 = vmatmul.mubr.f32.gmra.mxu0 %v463
        %v3347 = vpop.f32.mrf.mxu0
        %v3348 = vadd.f32 %v3277, %v3347
        %v3349 = vpop.f32.mrf.mxu0
        %v3350 = vadd.f32 %v3279, %v3349
        %3351 = vdwg.mxu0
        %3352 = vmatprep.subr.mxu0 %v2793
        %3353 = vmatpush1.xpose.msra.mxu0 %v2791
        %3354 = vmatprep.subr.mxu0 %v2785
        %3355 = vmatpush1.xpose.msra.mxu0 %v2783
        %3356 = vmatprep.subr.mxu0 %v2777
        %3357 = vmatpush1.xpose.msra.mxu0 %v2775
        %3358 = vmatprep.subr.mxu0 %v2769
        %3359 = vmatpush1.xpose.msra.mxu0 %v2767
        %3360 = vmatprep.subr.mxu0 %v2761
        %3361 = vmatpush1.xpose.msra.mxu0 %v2759
        %3362 = vmatprep.subr.mxu0 %v2753
        %3363 = vmatpush1.xpose.msra.mxu0 %v2751
        %3364 = vmatprep.subr.mxu0 %v2745
        %3365 = vmatpush1.xpose.msra.mxu0 %v2743
        %3366 = vmatprep.subr.mxu0 %v2737
        %3367 = vmatpush1.xpose.msra.mxu0 %v2735
        %3368 = vmatprep.subr.mxu0 %v2729
        %3369 = vmatpush1.xpose.msra.mxu0 %v2727
        %3370 = vmatprep.subr.mxu0 %v2721
        %3371 = vmatpush1.xpose.msra.mxu0 %v2719
        %3372 = vmatprep.subr.mxu0 %v2713
        %3373 = vmatpush1.xpose.msra.mxu0 %v2711
        %3374 = vmatprep.subr.mxu0 %v2705
        %3375 = vmatpush1.xpose.msra.mxu0 %v2703
        %3376 = vmatprep.subr.mxu0 %v2697
        %3377 = vmatpush1.xpose.msra.mxu0 %v2695
        %3378 = vmatprep.subr.mxu0 %v2689
        %3379 = vmatpush1.xpose.msra.mxu0 %v2687
        %3380 = vmatprep.subr.mxu0 %v2681
        %3381 = vmatpush1.xpose.msra.mxu0 %v2679
        %3382 = vmatprep.subr.mxu0 %v2673
        %3383 = vmatpush1.xpose.msra.mxu0 %v2671
        %3384 = vmatprep.subr.mxu0 %v2921
        %3385 = vmatpush2.xpose.msra.mxu0 %v2919
        %3386 = vmatprep.subr.mxu0 %v2913
        %3387 = vmatpush2.xpose.msra.mxu0 %v2911
        %3388 = vmatprep.subr.mxu0 %v2905
        %3389 = vmatpush2.xpose.msra.mxu0 %v2903
        %3390 = vmatprep.subr.mxu0 %v2897
        %3391 = vmatpush2.xpose.msra.mxu0 %v2895
        %3392 = vmatprep.subr.mxu0 %v2889
        %3393 = vmatpush2.xpose.msra.mxu0 %v2887
        %3394 = vmatprep.subr.mxu0 %v2881
        %3395 = vmatpush2.xpose.msra.mxu0 %v2879
        %3396 = vmatprep.subr.mxu0 %v2873
        %3397 = vmatpush2.xpose.msra.mxu0 %v2871
        %3398 = vmatprep.subr.mxu0 %v2865
        %3399 = vmatpush2.xpose.msra.mxu0 %v2863
        %3400 = vmatprep.subr.mxu0 %v2857
        %3401 = vmatpush2.xpose.msra.mxu0 %v2855
        %3402 = vmatprep.subr.mxu0 %v2849
        %3403 = vmatpush2.xpose.msra.mxu0 %v2847
        %3404 = vmatprep.subr.mxu0 %v2841
        %3405 = vmatpush2.xpose.msra.mxu0 %v2839
        %3406 = vmatprep.subr.mxu0 %v2833
        %3407 = vmatpush2.xpose.msra.mxu0 %v2831
        %3408 = vmatprep.subr.mxu0 %v2825
        %3409 = vmatpush2.xpose.msra.mxu0 %v2823
        %3410 = vmatprep.subr.mxu0 %v2817
        %3411 = vmatpush2.xpose.msra.mxu0 %v2815
        %3412 = vmatprep.subr.mxu0 %v2809
        %3413 = vmatpush2.xpose.msra.mxu0 %v2807
        %3414 = vmatprep.subr.mxu0 %v2801
        %3415 = vmatpush2.xpose.msra.mxu0 %v2799
        %3416 = vmatprep.mubr.f32.mxu0 %v388
        %3417 = vmatmul.mubr.f32.gmra.mxu0 %v386
        %v3418 = vpop.f32.mrf.mxu0
        %v3419 = vadd.f32 0.0, %v3418
        %v3420 = vpop.f32.mrf.mxu0
        %v3421 = vadd.f32 0.0, %v3420
        %3422 = vdwg.mxu0
        %3423 = vmatprep.subr.mxu0 %v2797
        %3424 = vmatpush1.xpose.msra.mxu0 %v2795
        %3425 = vmatprep.subr.mxu0 %v2789
        %3426 = vmatpush1.xpose.msra.mxu0 %v2787
        %3427 = vmatprep.subr.mxu0 %v2781
        %3428 = vmatpush1.xpose.msra.mxu0 %v2779
        %3429 = vmatprep.subr.mxu0 %v2773
        %3430 = vmatpush1.xpose.msra.mxu0 %v2771
        %3431 = vmatprep.subr.mxu0 %v2765
        %3432 = vmatpush1.xpose.msra.mxu0 %v2763
        %3433 = vmatprep.subr.mxu0 %v2757
        %3434 = vmatpush1.xpose.msra.mxu0 %v2755
        %3435 = vmatprep.subr.mxu0 %v2749
        %3436 = vmatpush1.xpose.msra.mxu0 %v2747
        %3437 = vmatprep.subr.mxu0 %v2741
        %3438 = vmatpush1.xpose.msra.mxu0 %v2739
        %3439 = vmatprep.subr.mxu0 %v2733
        %3440 = vmatpush1.xpose.msra.mxu0 %v2731
        %3441 = vmatprep.subr.mxu0 %v2725
        %3442 = vmatpush1.xpose.msra.mxu0 %v2723
        %3443 = vmatprep.subr.mxu0 %v2717
        %3444 = vmatpush1.xpose.msra.mxu0 %v2715
        %3445 = vmatprep.subr.mxu0 %v2709
        %3446 = vmatpush1.xpose.msra.mxu0 %v2707
        %3447 = vmatprep.subr.mxu0 %v2701
        %3448 = vmatpush1.xpose.msra.mxu0 %v2699
        %3449 = vmatprep.subr.mxu0 %v2693
        %3450 = vmatpush1.xpose.msra.mxu0 %v2691
        %3451 = vmatprep.subr.mxu0 %v2685
        %3452 = vmatpush1.xpose.msra.mxu0 %v2683
        %3453 = vmatprep.subr.mxu0 %v2677
        %3454 = vmatpush1.xpose.msra.mxu0 %v2675
        %3455 = vmatprep.subr.mxu0 %v2925
        %3456 = vmatpush2.xpose.msra.mxu0 %v2923
        %3457 = vmatprep.subr.mxu0 %v2917
        %3458 = vmatpush2.xpose.msra.mxu0 %v2915
        %3459 = vmatprep.subr.mxu0 %v2909
        %3460 = vmatpush2.xpose.msra.mxu0 %v2907
        %3461 = vmatprep.subr.mxu0 %v2901
        %3462 = vmatpush2.xpose.msra.mxu0 %v2899
        %3463 = vmatprep.subr.mxu0 %v2893
        %3464 = vmatpush2.xpose.msra.mxu0 %v2891
        %3465 = vmatprep.subr.mxu0 %v2885
        %3466 = vmatpush2.xpose.msra.mxu0 %v2883
        %3467 = vmatprep.subr.mxu0 %v2877
        %3468 = vmatpush2.xpose.msra.mxu0 %v2875
        %3469 = vmatprep.subr.mxu0 %v2869
        %3470 = vmatpush2.xpose.msra.mxu0 %v2867
        %3471 = vmatprep.subr.mxu0 %v2861
        %3472 = vmatpush2.xpose.msra.mxu0 %v2859
        %3473 = vmatprep.subr.mxu0 %v2853
        %3474 = vmatpush2.xpose.msra.mxu0 %v2851
        %3475 = vmatprep.subr.mxu0 %v2845
        %3476 = vmatpush2.xpose.msra.mxu0 %v2843
        %3477 = vmatprep.subr.mxu0 %v2837
        %3478 = vmatpush2.xpose.msra.mxu0 %v2835
        %3479 = vmatprep.subr.mxu0 %v2829
        %3480 = vmatpush2.xpose.msra.mxu0 %v2827
        %3481 = vmatprep.subr.mxu0 %v2821
        %3482 = vmatpush2.xpose.msra.mxu0 %v2819
        %3483 = vmatprep.subr.mxu0 %v2813
        %3484 = vmatpush2.xpose.msra.mxu0 %v2811
        %3485 = vmatprep.subr.mxu0 %v2805
        %3486 = vmatpush2.xpose.msra.mxu0 %v2803
        %3487 = vmatprep.mubr.f32.mxu0 %v465
        %3488 = vmatmul.mubr.f32.gmra.mxu0 %v463
        %v3489 = vpop.f32.mrf.mxu0
        %v3490 = vadd.f32 %v3419, %v3489
        %v3491 = vpop.f32.mrf.mxu0
        %v3492 = vadd.f32 %v3421, %v3491
        %3493 = vdwg.mxu0
        %v3494 = vrcp.pop %v3064
        %v3495 = vrcp.pop %v3066
        %v3496 = vrcp.pop %v3206
        %v3497 = vrcp.pop %v3208
        %v3498 = vlaneseq
        %v3499 = vshrl.u32 %v3498, 7
        %v3500 = vsub.s32 0, %v3499
        %v3501 = vrot.slane %v3494, %v3500
        %v3502 = vlaneseq
        %v3503 = vshrl.u32 %v3502, 7
        %v3504 = vsub.s32 0, %v3503
        %v3505 = vrot.slane %v3495, %v3504
        %v3506 = vlaneseq
        %v3507 = vshrl.u32 %v3506, 7
        %v3508 = vsub.s32 0, %v3507
        %v3509 = vrot.slane %v3496, %v3508
        %v3510 = vlaneseq
        %v3511 = vshrl.u32 %v3510, 7
        %v3512 = vsub.s32 0, %v3511
        %v3513 = vrot.slane %v3497, %v3512
        %v3514 = vmul.f32 %v3348, %v3501
        %v3515 = vmul.f32 %v3350, %v3505
        %v3516 = vmul.f32 %v3490, %v3509
        %v3517 = vmul.f32 %v3492, %v3513
        %v3519 = vrot.slane %v3515, 4
        %v3522 = vrot.slane %v3517, 4
        %v3524 = vsel %vm304, %v3514, %v3519
        %v3525 = vsel %vm304, %v3516, %v3522
        %v3526 = vld [vmem:[%s5] sm:$0xff]
        %v3527 = vld [vmem:[%s5 + $0x8] sm:$0xff]
        %v3528 = vld [vmem:[%s6] sm:$0xff]
        %v3529 = vld [vmem:[%s6 + $0x8] sm:$0xff]
        %3531 = vset.pattern.permute.xlu0 0
        %3532 = vperm.xlu0 %3531, %v3528
        %v3533 = vpop.permute.xlu0 %3532
        %3536 = vset.pattern.permute.xlu0 0
        %3537 = vperm.xlu0 %3536, %v3529
        %v3538 = vpop.permute.xlu0 %3537
        %vm3540 = vcmask 130048
        %v3542 = vsel %vm3540, %v3526, 0
        %v3545 = vsel %vm3540, %v3527, 0
        %3547 = vmatprep.subr.mxu0 0.0
        %3548 = vmatpush1.msra.mxu0 0.0
        %3549 = vmatprep.subr.mxu0 0.0
        %3550 = vmatpush1.msra.mxu0 0.0
        %3551 = vmatprep.subr.mxu0 0.0
        %3552 = vmatpush1.msra.mxu0 0.0
        %3553 = vmatprep.subr.mxu0 0.0
        %3554 = vmatpush1.msra.mxu0 0.0
        %3555 = vmatprep.subr.mxu0 0.0
        %3556 = vmatpush1.msra.mxu0 0.0
        %3557 = vmatprep.subr.mxu0 0.0
        %3558 = vmatpush1.msra.mxu0 0.0
        %3559 = vmatprep.subr.mxu0 0.0
        %3560 = vmatpush1.msra.mxu0 0.0
        %3561 = vmatprep.subr.mxu0 0.0
        %3562 = vmatpush1.msra.mxu0 0.0
        %3563 = vmatprep.subr.mxu0 0.0
        %3564 = vmatpush1.msra.mxu0 0.0
        %3565 = vmatprep.subr.mxu0 0.0
        %3566 = vmatpush1.msra.mxu0 0.0
        %3567 = vmatprep.subr.mxu0 0.0
        %3568 = vmatpush1.msra.mxu0 0.0
        %3569 = vmatprep.subr.mxu0 0.0
        %3570 = vmatpush1.msra.mxu0 0.0
        %3571 = vmatprep.subr.mxu0 0.0
        %3572 = vmatpush1.msra.mxu0 0.0
        %3573 = vmatprep.subr.mxu0 0.0
        %3574 = vmatpush1.msra.mxu0 0.0
        %3575 = vmatprep.subr.mxu0 0.0
        %3576 = vmatpush1.msra.mxu0 %v3525
        %3577 = vmatprep.subr.mxu0 0.0
        %3578 = vmatpush1.msra.mxu0 %v3524
        %3579 = vmatprep.subr.mxu0 0.0
        %3580 = vmatpush2.msra.mxu0 0.0
        %3581 = vmatprep.subr.mxu0 0.0
        %3582 = vmatpush2.msra.mxu0 0.0
        %3583 = vmatprep.subr.mxu0 0.0
        %3584 = vmatpush2.msra.mxu0 0.0
        %3585 = vmatprep.subr.mxu0 0.0
        %3586 = vmatpush2.msra.mxu0 0.0
        %3587 = vmatprep.subr.mxu0 0.0
        %3588 = vmatpush2.msra.mxu0 0.0
        %3589 = vmatprep.subr.mxu0 0.0
        %3590 = vmatpush2.msra.mxu0 0.0
        %3591 = vmatprep.subr.mxu0 0.0
        %3592 = vmatpush2.msra.mxu0 0.0
        %3593 = vmatprep.subr.mxu0 0.0
        %3594 = vmatpush2.msra.mxu0 0.0
        %3595 = vmatprep.subr.mxu0 0.0
        %3596 = vmatpush2.msra.mxu0 0.0
        %3597 = vmatprep.subr.mxu0 0.0
        %3598 = vmatpush2.msra.mxu0 0.0
        %3599 = vmatprep.subr.mxu0 0.0
        %3600 = vmatpush2.msra.mxu0 0.0
        %3601 = vmatprep.subr.mxu0 0.0
        %3602 = vmatpush2.msra.mxu0 0.0
        %3603 = vmatprep.subr.mxu0 0.0
        %3604 = vmatpush2.msra.mxu0 0.0
        %3605 = vmatprep.subr.mxu0 0.0
        %3606 = vmatpush2.msra.mxu0 0.0
        %3607 = vmatprep.subr.mxu0 0.0
        %3608 = vmatpush2.msra.mxu0 0.0
        %3609 = vmatprep.subr.mxu0 0.0
        %3610 = vmatpush2.msra.mxu0 0.0
        %3611 = vmatprep.mubr.f32.mxu0 0.0
        %3612 = vmatmul.mubr.f32.gmra.mxu0 %v3542
        %v3613 = vpop.f32.mrf.mxu0
        %v3614 = vadd.f32 %v3533, %v3613
        %v3615 = vpop.f32.mrf.mxu0
        %3616 = vmatprep.mubr.f32.mxu0 0.0
        %3617 = vmatmul.mubr.f32.gmra.mxu0 %v3545
        %v3618 = vpop.f32.mrf.mxu0
        %v3619 = vadd.f32 %v3538, %v3618
        %v3620 = vpop.f32.mrf.mxu0
        %3621 = vdwg.mxu0
        %3622 = vst [vmem:[%s271] sm:$0xff] %v3614
        %3623 = vst [vmem:[%s271 + $0x8] sm:$0xff] %v3619
        %s3624 = sand.u32 %s181, 1
        %s3625 = scalar_lea.sflag [#allocation3], %s3624
        %s3626 = sand.u32 %s181, 1
        %s3627 = smul.addr %s3626, 16
        %s3628 = scalar_lea.vmem [#allocation2], %s3627
        // Predicated region
        $region49: #{tpu_custom_call.1} parent=47 // pred_check
          %p3629 = pneg %p191
        $region50: #{tpu_custom_call.1} parent=47 // pred_check_branch
          %3631 = sbr.rel (%p3629) target = $region52
        $region51: #{tpu_custom_call.1} parent=47 // pred_region
          %s3633 = ssub.s32 256, 256
          %3634 = vsyncadd %s3625, %s3633
          %s3635 = smul.addr %s21, 2
          %s3636 = smul.addr %s3635, 128
          %s3637 = scalar_lea.hbm %s7, %s3636
          %s3638 = sshll.u32 %s3628, 4
          %s3639 = int_to_ptr.vmem [resolvable:$true] %s3638
          %3644 = dma.vmem_to_hbm [thread:$0]  %s3639, 256, %s3637, %s3625, 128, 128, 8
        $region52: #{tpu_custom_call.1} parent=47 // pred_fallthru
          _
      $region48: #{tpu_custom_call.1} parent=5 // pred_fallthru
        _
      %p3645 = scmp.le.s32.totalorder 2, %s16
      // Predicated region
      $region53: #{tpu_custom_call.1} parent=5 // pred_check
        %p3646 = pneg %p3645
      $region54: #{tpu_custom_call.1} parent=5 // pred_check_branch
        %3648 = sbr.rel (%p3646) target = $region56
      $region55: #{tpu_custom_call.1} parent=5 // pred_region
        %s3649 = ssub.s32 %s16, 2
        // Predicated region
        $region57: #{tpu_custom_call.1} parent=55 // pred_check
          %p3650 = pneg %p197
        $region58: #{tpu_custom_call.1} parent=55 // pred_check_branch
          %3652 = sbr.rel (%p3650) target = $region60
        $region59: #{tpu_custom_call.1} parent=55 // pred_region
          %s3653 = sand.u32 %s182, 1
          %s3654 = scalar_lea.sflag [#allocation3], %s3653
          %s3655 = sand.u32 %s182, 1
          %s3656 = smul.addr %s3655, 16
          %s3657 = scalar_lea.vmem [#allocation2], %s3656
          %3658 = dma.done %s3654, 256
        $region60: #{tpu_custom_call.1} parent=55 // pred_fallthru
          _
      $region56: #{tpu_custom_call.1} parent=5 // pred_fallthru
        _
    $region6: #{tpu_custom_call.1} parent=1 // loop_footer
      %s20 = sadd.s32 1, %s16
    $region7: #{tpu_custom_call.1} parent=1 // loop_footer_branch
      %15 = sbr.rel target = $region3
    $region8: #{tpu_custom_call.1} parent=1 // loop_exit
      _
    %3659 = vsyncpa [#allocation3], 1
    %s3660 = scalar_lea.sflag [#allocation3], 1
    %3661 = vsyncpa %s3660, 1

</llo_original>
